<compile_context>
chip_gen: v7x
topology: tpu7x:2x2x1
jax: 0.10.0
libtpu: 0.0.40
codegen_flags: <defaults>
</compile_context>

<pallas_src>
import jax
import jax.numpy as jnp
from jax import lax
from jax.experimental import pallas as pl
from jax.experimental.pallas import tpu as pltpu

LANES = 128   # every activation slab / weight output band is 128 lanes wide


# ----------------------------------------------------------------------------
# In-kernel building blocks (all pure-value ops; no scratch refs needed)
# ----------------------------------------------------------------------------
def _conv3x3(a, w_mat, b_row):
    """3x3 SAME conv + folded-BN bias + ReLU on a lane-dense (H, 128) slab.

    a     : (H, 128)  input rows; lane = w*Cin + ci, unused lanes are zero.
    w_mat : (384, 128) K-stacked banded weights (3 dy taps x 128-lane bands).
    b_row : (1, 128)   per-channel bias tiled over W.
    """
    H = a.shape[0]
    zero = jnp.zeros((1, LANES), jnp.float32)
    up = jnp.concatenate([zero, a[:H - 1, :]], axis=0)    # row h -> a[h-1]
    dn = jnp.concatenate([a[1:, :], zero], axis=0)        # row h -> a[h+1]
    slab = jnp.concatenate([up, a, dn], axis=1)           # (H, 3*128)
    y = jnp.dot(slab, w_mat, preferred_element_type=jnp.float32) + b_row
    return jnp.maximum(y, 0.0)


def _channel_stats(a, W, Cout):
    """Per-channel spatial mean and unbiased std of a (H, 128) block output.

    Lane layout: lane = w*Cout + c with W*Cout == 128 (Cout a power of two).
    Returns (mean, std), each (1, 128) with data in the first Cout lanes.
    """
    H = a.shape[0]
    n = H * W
    cmask = Cout - 1
    li = lax.broadcasted_iota(jnp.int32, (LANES, LANES), 0)     # source lane
    lj = lax.broadcasted_iota(jnp.int32, (LANES, LANES), 1)     # dest lane
    lane_to_chan = (lj == (li & cmask)).astype(jnp.float32)     # reduce lanes -> channel
    chan_to_lane = (li == (lj & cmask)).astype(jnp.float32)     # broadcast channel -> lanes

    colsum = jnp.sum(a, axis=0, keepdims=True)                                  # (1,128)
    mean_c = jnp.dot(colsum, lane_to_chan,
                     preferred_element_type=jnp.float32) * (1.0 / n)            # (1,128)
    mean_b = jnp.dot(mean_c, chan_to_lane,
                     preferred_element_type=jnp.float32)                        # (1,128)
    d = a - mean_b                                                               # centered
    colsq = jnp.sum(d * d, axis=0, keepdims=True)
    var_c = jnp.dot(colsq, lane_to_chan,
                    preferred_element_type=jnp.float32) * (1.0 / (n - 1))
    return mean_c, jnp.sqrt(var_c)


def _maxpool2x2(a, W, Cout):
    """2x2 max pool of a (H, 128) slab -> (H//2, 128).

    Output lanes 0 .. (W//2)*Cout-1 hold the pooled values (lane = wp*Cout+c);
    the remaining lanes are zero, i.e. already padded for the next conv.
    """
    H = a.shape[0]
    Hh = H // 2
    # --- H direction: one-hot row-selection matmuls + max ---
    ri = lax.broadcasted_iota(jnp.int32, (Hh, H), 0)
    ci = lax.broadcasted_iota(jnp.int32, (Hh, H), 1)
    e_even = (ci == ri * 2).astype(jnp.float32)
    e_odd = (ci == ri * 2 + 1).astype(jnp.float32)
    rows = jnp.maximum(
        jnp.dot(e_even, a, preferred_element_type=jnp.float32),
        jnp.dot(e_odd, a, preferred_element_type=jnp.float32))          # (Hh,128)
    # --- W direction: one-hot lane-compaction matmuls + max ---
    li = lax.broadcasted_iota(jnp.int32, (LANES, LANES), 0)              # source lane
    lj = lax.broadcasted_iota(jnp.int32, (LANES, LANES), 1)              # dest lane
    jc = lj & (Cout - 1)                                                 # channel of dest lane
    valid = lj < (W // 2) * Cout
    src_even = lj * 2 - jc                                               # = 2*wp*Cout + c
    c_even = ((li == src_even) & valid).astype(jnp.float32)
    c_odd = ((li == src_even + Cout) & valid).astype(jnp.float32)
    return jnp.maximum(
        jnp.dot(rows, c_even, preferred_element_type=jnp.float32),
        jnp.dot(rows, c_odd, preferred_element_type=jnp.float32))        # (Hh,128)


def _make_kernel(block_dims):
    """block_dims: tuple of (H, W, Cin, Cout) per ConvBlock (static)."""
    n_blocks = len(block_dims)

    def kernel(x_ref, w_ref, b_ref, out_ref):
        a = x_ref[0]                                    # (H0, 128), lane-padded input
        stats = []
        for bi, (H, W, Cin, Cout) in enumerate(block_dims):
            del H, Cin
            a = _conv3x3(a, w_ref[2 * bi], b_ref[2 * bi:2 * bi + 1, :])
            a = _conv3x3(a, w_ref[2 * bi + 1], b_ref[2 * bi + 1:2 * bi + 2, :])
            m, s = _channel_stats(a, W, Cout)
            stats.append(m)
            stats.append(s)
            if bi + 1 < n_blocks:                       # no (dead) pool after enc3
                a = _maxpool2x2(a, W, Cout)
        out_ref[0] = jnp.concatenate(stats, axis=0)     # (2*n_blocks, 128) lane-dense

    return kernel


# ----------------------------------------------------------------------------
# pallas_call wrapper: the whole StyleEncoder forward in one kernel launch
# ----------------------------------------------------------------------------
def style_encoder_forward(x_nchw, lowered):
    block_dims = lowered["block_dims"]
    w_all, b_all = lowered["w"], lowered["b"]
    N, Cin, H, W = x_nchw.shape
    H0, W0, Cin0, _ = block_dims[0]
    assert (H, W, Cin) == (H0, W0, Cin0), "input does not match lowered params"
    nstat = 2 * len(block_dims)

    # NCHW -> lane-dense (N, H, W*Cin), zero-padded to 128 lanes.
    x = jnp.transpose(x_nchw, (0, 2, 3, 1)).reshape(N, H, W * Cin)
    x = jnp.pad(x, ((0, 0), (0, 0), (0, LANES - W * Cin)))

    stats = pl.pallas_call(
        _make_kernel(block_dims),
        out_shape=jax.ShapeDtypeStruct((N, nstat, LANES), jnp.float32),
        grid=(N,),
        in_specs=[
            pl.BlockSpec((1, H, LANES), lambda n: (n, 0, 0)),
            pl.BlockSpec(w_all.shape, lambda n: (0, 0, 0)),
            pl.BlockSpec(b_all.shape, lambda n: (0, 0)),
        ],
        out_specs=pl.BlockSpec((1, nstat, LANES), lambda n: (n, 0, 0)),
        compiler_params=pltpu.CompilerParams(
            dimension_semantics=("parallel",)),
    )(x, w_all, b_all)

    outs = []
    for bi, (_, _, _, cout) in enumerate(block_dims):
        m = stats[:, 2 * bi, :cout].reshape(N, cout, 1, 1)
        s = stats[:, 2 * bi + 1, :cout].reshape(N, cout, 1, 1)
        outs.append((m, s))
    return tuple(outs)


# ----------------------------------------------------------------------------
# Host-side lowering: 3x3 conv -> K-stacked banded matrix; BN fold; packing
# ----------------------------------------------------------------------------
def _lower_conv(w, scale, bias, W):
    """w: (3,3,Cin,Cout) HWIO, scale/bias: (Cout,) folded BN.

    Returns (w_mat, b_lane):
      w_mat  : (3*128, W*Cout) K-stacked banded matrix, BN scale folded in.
               Row dy*128 + s*Cin + ci maps to w[dy, s-w+1, ci, :] for output
               column w*Cout + co (zero outside the 3-tap band / pad rows).
      b_lane : (W*Cout,) per-channel bias tiled over W.
    """
    Cin, Cout = w.shape[2], w.shape[3]
    ws = w * scale.reshape(1, 1, 1, Cout)
    s_idx = jnp.arange(W)[None, :, None]          # source column
    o_idx = jnp.arange(W)[None, None, :]          # output column
    d_idx = jnp.arange(3)[:, None, None]          # dx
    sel = (s_idx == o_idx + d_idx - 1).astype(jnp.float32)          # (3, W, W)
    m = jnp.einsum('xsw,yxio->ysiwo', sel, ws)                      # (3,W,Cin,W,Cout)
    m = m.reshape(3, W * Cin, W * Cout)
    m = jnp.pad(m, ((0, 0), (0, LANES - W * Cin), (0, 0)))          # pad each band to 128 rows
    return m.reshape(3 * LANES, W * Cout), jnp.tile(bias, W)


def lower_style_encoder_params(params, H, W):
    ws, bs, dims = [], [], []
    ch, cw = H, W
    for name in ("enc1", "enc2", "enc3"):
        (w1, s1, b1), (w2, s2, b2) = params[name]
        cin, cout = int(w1.shape[2]), int(w1.shape[3])
        # Layout constraints of the fused kernel.
        assert cw * cout == LANES, "W*Cout must equal 128 at every block"
        assert cw * cin <= LANES, "W*Cin must fit in 128 lanes"
        assert cout & (cout - 1) == 0 and cw & (cw - 1) == 0, "need power-of-two W, Cout"
        assert (name == "enc3") or (ch % 2 == 0 and cw % 2 == 0), "need even H, W for pooling"
        m1, bl1 = _lower_conv(w1, s1, b1, cw)
        m2, bl2 = _lower_conv(w2, s2, b2, cw)
        ws += [m1, m2]
        bs += [bl1, bl2]
        dims.append((ch, cw, cin, cout))
        ch, cw = ch // 2, cw // 2
    return {"w": jnp.stack(ws),          # (6, 384, 128)
            "b": jnp.stack(bs),          # (6, 128)
            "block_dims": tuple(dims)}


# ----------------------------------------------------------------------------
# Parameter construction (deterministic, PyTorch-default-style init)
# ----------------------------------------------------------------------------
def _fold_bn(b_conv, gamma, beta, running_mean, running_var, eps=1e-5):
    scale = gamma / jnp.sqrt(running_var + eps)
    bias = (b_conv - running_mean) * scale + beta
    return scale, bias


def _init_conv(key, cin, cout):
    kw, kb = jax.random.split(key)
    fan_in = cin * 9
    bound = 1.0 / jnp.sqrt(fan_in)
    w = jax.random.uniform(kw, (3, 3, cin, cout), jnp.float32, -bound, bound)
    b = jax.random.uniform(kb, (cout,), jnp.float32, -bound, bound)
    return w, b


def init_conv_block(key, cin, cout):
    k1, k2 = jax.random.split(key)
    convs = []
    for k, ci in ((k1, cin), (k2, cout)):
        w, b = _init_conv(k, ci, cout)
        gamma = jnp.ones((cout,), jnp.float32)
        beta = jnp.zeros((cout,), jnp.float32)
        rmean = jnp.zeros((cout,), jnp.float32)
        rvar = jnp.ones((cout,), jnp.float32)
        scale, bias = _fold_bn(b, gamma, beta, rmean, rvar)
        convs.append((w, scale, bias))
    return tuple(convs)


def init_style_encoder(key, in_channels=3, feature_dim=8):
    k1, k2, k3 = jax.random.split(key, 3)
    return {
        "enc1": init_conv_block(k1, in_channels, feature_dim),
        "enc2": init_conv_block(k2, feature_dim, feature_dim * 2),
        "enc3": init_conv_block(k3, feature_dim * 2, feature_dim * 4),
    }


# ----------------------------------------------------------------------------
# Pure-JAX reference (for the correctness check)
# ----------------------------------------------------------------------------
def _ref_conv_bn_relu(x, w, scale, bias):
    y = lax.conv_general_dilated(
        x, w, window_strides=(1, 1), padding="SAME",
        dimension_numbers=("NHWC", "HWIO", "NHWC"),
        precision=lax.Precision.HIGHEST)
    return jnp.maximum(y * scale.reshape(1, 1, 1, -1) +
                       bias.reshape(1, 1, 1, -1), 0.0)


def _ref_maxpool2x2(x):
    N, H, W, C = x.shape
    return x.reshape(N, H // 2, 2, W // 2, 2, C).max(axis=(2, 4))


def _ref_forward(x_nchw, params):
    x = jnp.transpose(x_nchw, (0, 2, 3, 1))
    outs = []
    for name in ("enc1", "enc2", "enc3"):
        (w1, s1, b1), (w2, s2, b2) = params[name]
        x = _ref_conv_bn_relu(_ref_conv_bn_relu(x, w1, s1, b1), w2, s2, b2)
        m = jnp.mean(x, axis=(1, 2))
        s = jnp.std(x, axis=(1, 2), ddof=1)
        outs.append((m.reshape(m.shape[0], -1, 1, 1),
                     s.reshape(s.shape[0], -1, 1, 1)))
        if name != "enc3":
            x = _ref_maxpool2x2(x)
    return tuple(outs)


if __name__ == "__main__":
    key = jax.random.PRNGKey(0)
    kx, kp = jax.random.split(key)

    batch, in_channels, spatial, feature_dim = 2, 3, 16, 8
    x = jax.random.normal(kx, (batch, in_channels, spatial, spatial),
                          jnp.float32)
    params = init_style_encoder(kp, in_channels, feature_dim)
    lowered = lower_style_encoder_params(params, spatial, spatial)  # one-time lowering

    out = jax.block_until_ready(style_encoder_forward(x, lowered))

    ref = jax.block_until_ready(_ref_forward(x, params))
    for (pm, ps), (rm, rs) in zip(out, ref):
        assert pm.shape == rm.shape and ps.shape == rs.shape
        assert jnp.allclose(pm, rm, atol=2e-3, rtol=2e-2), \
            float(jnp.max(jnp.abs(pm - rm)))
        assert jnp.allclose(ps, rs, atol=2e-3, rtol=2e-2), \
            float(jnp.max(jnp.abs(ps - rs)))

    print("KERNEL_OK")
</pallas_src>

<mosaic_0001>
module attributes {stable_mosaic.version = 11 : i64} {
  func.func @kernel(%arg0: i32, %arg1: memref<1x16x128xf32, #tpu.memory_space<vmem>>, %arg2: memref<6x384x128xf32, #tpu.memory_space<vmem>>, %arg3: memref<6x128xf32, #tpu.memory_space<vmem>>, %arg4: memref<1x6x128xf32, #tpu.memory_space<vmem>>) attributes {dimension_semantics = [#tpu.dimension_semantics<parallel>], iteration_bounds = array<i64: 2>, scalar_prefetch = 0 : i64, scratch_operands = 0 : i64, tpu.core_type = #tpu.core_type<tc>, window_params = [{transform_indices = @transform_0, window_bounds = array<i64: 1, 16, 128>}, {pipeline_mode = #tpu.pipeline_mode<synchronous>, transform_indices = @transform_1, window_bounds = array<i64: 6, 384, 128>}, {pipeline_mode = #tpu.pipeline_mode<synchronous>, transform_indices = @transform_2, window_bounds = array<i64: 6, 128>}, {transform_indices = @transform_3, window_bounds = array<i64: 1, 6, 128>}]} {
    %c0 = arith.constant 0 : index
    %c0_0 = arith.constant 0 : index
    %c0_1 = arith.constant 0 : index
    %0 = vector.load %arg1[%c0, %c0_0, %c0_1] : memref<1x16x128xf32, #tpu.memory_space<vmem>>, vector<1x16x128xf32>
    %1 = vector.shape_cast %0 : vector<1x16x128xf32> to vector<16x128xf32>
    %c0_2 = arith.constant 0 : index
    %c0_3 = arith.constant 0 : index
    %c0_4 = arith.constant 0 : index
    %2 = vector.load %arg2[%c0_2, %c0_3, %c0_4] : memref<6x384x128xf32, #tpu.memory_space<vmem>>, vector<1x384x128xf32>
    %3 = vector.shape_cast %2 : vector<1x384x128xf32> to vector<384x128xf32>
    %c0_5 = arith.constant 0 : index
    %c0_6 = arith.constant 0 : index
    %4 = vector.load %arg3[%c0_5, %c0_6] : memref<6x128xf32, #tpu.memory_space<vmem>>, vector<1x128xf32>
    %cst = arith.constant 0.000000e+00 : f32
    %5 = vector.broadcast %cst : f32 to vector<1x128xf32>
    %6 = vector.extract_strided_slice %1 {offsets = [0, 0], sizes = [15, 128], strides = [1, 1]} : vector<16x128xf32> to vector<15x128xf32>
    %7 = tpu.concatenate %5, %6 in 0 : vector<1x128xf32>, vector<15x128xf32> -> vector<16x128xf32>
    %8 = vector.extract_strided_slice %1 {offsets = [1, 0], sizes = [15, 128], strides = [1, 1]} : vector<16x128xf32> to vector<15x128xf32>
    %9 = tpu.concatenate %8, %5 in 0 : vector<15x128xf32>, vector<1x128xf32> -> vector<16x128xf32>
    %10 = tpu.concatenate %7, %1, %9 in 1 : vector<16x128xf32>, vector<16x128xf32>, vector<16x128xf32> -> vector<16x384xf32>
    %cst_7 = arith.constant dense<0.000000e+00> : vector<16x128xf32>
    %11 = tpu.matmul %10, %3, %cst_7 {dimension_numbers = #tpu.dot_dimension_numbers<[1], [0], [0], [1], [0, 0, 1, 1], [], []>} : vector<16x384xf32>, vector<384x128xf32>, vector<16x128xf32> -> vector<16x128xf32>
    %12 = vector.broadcast %4 : vector<1x128xf32> to vector<16x128xf32>
    %13 = arith.addf %11, %12 : vector<16x128xf32>
    %cst_8 = arith.constant 0.000000e+00 : f32
    %14 = vector.broadcast %cst_8 : f32 to vector<16x128xf32>
    %15 = arith.maximumf %13, %14 : vector<16x128xf32>
    %c1 = arith.constant 1 : index
    %c0_9 = arith.constant 0 : index
    %c0_10 = arith.constant 0 : index
    %16 = vector.load %arg2[%c1, %c0_9, %c0_10] : memref<6x384x128xf32, #tpu.memory_space<vmem>>, vector<1x384x128xf32>
    %17 = vector.shape_cast %16 : vector<1x384x128xf32> to vector<384x128xf32>
    %c1_11 = arith.constant 1 : index
    %c0_12 = arith.constant 0 : index
    %18 = vector.load %arg3[%c1_11, %c0_12] : memref<6x128xf32, #tpu.memory_space<vmem>>, vector<1x128xf32>
    %cst_13 = arith.constant 0.000000e+00 : f32
    %19 = vector.broadcast %cst_13 : f32 to vector<1x128xf32>
    %20 = vector.extract_strided_slice %15 {offsets = [0, 0], sizes = [15, 128], strides = [1, 1]} : vector<16x128xf32> to vector<15x128xf32>
    %21 = tpu.concatenate %19, %20 in 0 : vector<1x128xf32>, vector<15x128xf32> -> vector<16x128xf32>
    %22 = vector.extract_strided_slice %15 {offsets = [1, 0], sizes = [15, 128], strides = [1, 1]} : vector<16x128xf32> to vector<15x128xf32>
    %23 = tpu.concatenate %22, %19 in 0 : vector<15x128xf32>, vector<1x128xf32> -> vector<16x128xf32>
    %24 = tpu.concatenate %21, %15, %23 in 1 : vector<16x128xf32>, vector<16x128xf32>, vector<16x128xf32> -> vector<16x384xf32>
    %cst_14 = arith.constant dense<0.000000e+00> : vector<16x128xf32>
    %25 = tpu.matmul %24, %17, %cst_14 {dimension_numbers = #tpu.dot_dimension_numbers<[1], [0], [0], [1], [0, 0, 1, 1], [], []>} : vector<16x384xf32>, vector<384x128xf32>, vector<16x128xf32> -> vector<16x128xf32>
    %26 = vector.broadcast %18 : vector<1x128xf32> to vector<16x128xf32>
    %27 = arith.addf %25, %26 : vector<16x128xf32>
    %cst_15 = arith.constant 0.000000e+00 : f32
    %28 = vector.broadcast %cst_15 : f32 to vector<16x128xf32>
    %29 = arith.maximumf %27, %28 : vector<16x128xf32>
    %30 = tpu.iota {dimensions = array<i32: 0>} : vector<128x128xi32>
    %31 = tpu.iota {dimensions = array<i32: 1>} : vector<128x128xi32>
    %c7_i32 = arith.constant 7 : i32
    %32 = vector.broadcast %c7_i32 : i32 to vector<128x128xi32>
    %33 = arith.andi %30, %32 : vector<128x128xi32>
    %34 = arith.cmpi eq, %31, %33 : vector<128x128xi32>
    %35 = arith.extui %34 : vector<128x128xi1> to vector<128x128xi32>
    %36 = arith.sitofp %35 : vector<128x128xi32> to vector<128x128xf32>
    %c7_i32_16 = arith.constant 7 : i32
    %37 = vector.broadcast %c7_i32_16 : i32 to vector<128x128xi32>
    %38 = arith.andi %31, %37 : vector<128x128xi32>
    %39 = arith.cmpi eq, %30, %38 : vector<128x128xi32>
    %40 = arith.extui %39 : vector<128x128xi1> to vector<128x128xi32>
    %41 = arith.sitofp %40 : vector<128x128xi32> to vector<128x128xf32>
    %cst_17 = arith.constant dense<0.000000e+00> : vector<128xf32>
    %42 = vector.multi_reduction <add>, %29, %cst_17 [0] : vector<16x128xf32> to vector<128xf32>
    %43 = vector.shape_cast %42 : vector<128xf32> to vector<1x128xf32>
    %cst_18 = arith.constant dense<0.000000e+00> : vector<1x128xf32>
    %44 = tpu.matmul %43, %36, %cst_18 {dimension_numbers = #tpu.dot_dimension_numbers<[1], [0], [0], [1], [0, 0, 1, 1], [], []>} : vector<1x128xf32>, vector<128x128xf32>, vector<1x128xf32> -> vector<1x128xf32>
    %cst_19 = arith.constant 3.906250e-03 : f32
    %45 = vector.broadcast %cst_19 : f32 to vector<1x128xf32>
    %46 = arith.mulf %44, %45 : vector<1x128xf32>
    %cst_20 = arith.constant dense<0.000000e+00> : vector<1x128xf32>
    %47 = tpu.matmul %46, %41, %cst_20 {dimension_numbers = #tpu.dot_dimension_numbers<[1], [0], [0], [1], [0, 0, 1, 1], [], []>} : vector<1x128xf32>, vector<128x128xf32>, vector<1x128xf32> -> vector<1x128xf32>
    %48 = vector.broadcast %47 : vector<1x128xf32> to vector<16x128xf32>
    %49 = arith.subf %29, %48 : vector<16x128xf32>
    %50 = arith.mulf %49, %49 : vector<16x128xf32>
    %cst_21 = arith.constant dense<0.000000e+00> : vector<128xf32>
    %51 = vector.multi_reduction <add>, %50, %cst_21 [0] : vector<16x128xf32> to vector<128xf32>
    %52 = vector.shape_cast %51 : vector<128xf32> to vector<1x128xf32>
    %cst_22 = arith.constant dense<0.000000e+00> : vector<1x128xf32>
    %53 = tpu.matmul %52, %36, %cst_22 {dimension_numbers = #tpu.dot_dimension_numbers<[1], [0], [0], [1], [0, 0, 1, 1], [], []>} : vector<1x128xf32>, vector<128x128xf32>, vector<1x128xf32> -> vector<1x128xf32>
    %cst_23 = arith.constant 0.00392156886 : f32
    %54 = vector.broadcast %cst_23 : f32 to vector<1x128xf32>
    %55 = arith.mulf %53, %54 : vector<1x128xf32>
    %56 = math.sqrt %55 : vector<1x128xf32>
    %57 = tpu.iota {dimensions = array<i32: 0>} : vector<8x16xi32>
    %58 = tpu.iota {dimensions = array<i32: 1>} : vector<8x16xi32>
    %c2_i32 = arith.constant 2 : i32
    %59 = vector.broadcast %c2_i32 : i32 to vector<8x16xi32>
    %60 = arith.muli %57, %59 : vector<8x16xi32>
    %61 = arith.cmpi eq, %58, %60 : vector<8x16xi32>
    %62 = arith.extui %61 : vector<8x16xi1> to vector<8x16xi32>
    %63 = arith.sitofp %62 : vector<8x16xi32> to vector<8x16xf32>
    %c2_i32_24 = arith.constant 2 : i32
    %64 = vector.broadcast %c2_i32_24 : i32 to vector<8x16xi32>
    %65 = arith.muli %57, %64 : vector<8x16xi32>
    %c1_i32 = arith.constant 1 : i32
    %66 = vector.broadcast %c1_i32 : i32 to vector<8x16xi32>
    %67 = arith.addi %65, %66 : vector<8x16xi32>
    %68 = arith.cmpi eq, %58, %67 : vector<8x16xi32>
    %69 = arith.extui %68 : vector<8x16xi1> to vector<8x16xi32>
    %70 = arith.sitofp %69 : vector<8x16xi32> to vector<8x16xf32>
    %cst_25 = arith.constant dense<0.000000e+00> : vector<8x128xf32>
    %71 = tpu.matmul %63, %29, %cst_25 {dimension_numbers = #tpu.dot_dimension_numbers<[1], [0], [0], [1], [0, 0, 1, 1], [], []>} : vector<8x16xf32>, vector<16x128xf32>, vector<8x128xf32> -> vector<8x128xf32>
    %cst_26 = arith.constant dense<0.000000e+00> : vector<8x128xf32>
    %72 = tpu.matmul %70, %29, %cst_26 {dimension_numbers = #tpu.dot_dimension_numbers<[1], [0], [0], [1], [0, 0, 1, 1], [], []>} : vector<8x16xf32>, vector<16x128xf32>, vector<8x128xf32> -> vector<8x128xf32>
    %73 = arith.maximumf %71, %72 : vector<8x128xf32>
    %74 = tpu.iota {dimensions = array<i32: 0>} : vector<128x128xi32>
    %75 = tpu.iota {dimensions = array<i32: 1>} : vector<128x128xi32>
    %c7_i32_27 = arith.constant 7 : i32
    %76 = vector.broadcast %c7_i32_27 : i32 to vector<128x128xi32>
    %77 = arith.andi %75, %76 : vector<128x128xi32>
    %c64_i32 = arith.constant 64 : i32
    %78 = vector.broadcast %c64_i32 : i32 to vector<128x128xi32>
    %79 = arith.cmpi slt, %75, %78 : vector<128x128xi32>
    %c2_i32_28 = arith.constant 2 : i32
    %80 = vector.broadcast %c2_i32_28 : i32 to vector<128x128xi32>
    %81 = arith.muli %75, %80 : vector<128x128xi32>
    %82 = arith.subi %81, %77 : vector<128x128xi32>
    %83 = arith.cmpi eq, %74, %82 : vector<128x128xi32>
    %84 = arith.andi %83, %79 : vector<128x128xi1>
    %85 = arith.extui %84 : vector<128x128xi1> to vector<128x128xi32>
    %86 = arith.sitofp %85 : vector<128x128xi32> to vector<128x128xf32>
    %c8_i32 = arith.constant 8 : i32
    %87 = vector.broadcast %c8_i32 : i32 to vector<128x128xi32>
    %88 = arith.addi %82, %87 : vector<128x128xi32>
    %89 = arith.cmpi eq, %74, %88 : vector<128x128xi32>
    %90 = arith.andi %89, %79 : vector<128x128xi1>
    %91 = arith.extui %90 : vector<128x128xi1> to vector<128x128xi32>
    %92 = arith.sitofp %91 : vector<128x128xi32> to vector<128x128xf32>
    %cst_29 = arith.constant dense<0.000000e+00> : vector<8x128xf32>
    %93 = tpu.matmul %73, %86, %cst_29 {dimension_numbers = #tpu.dot_dimension_numbers<[1], [0], [0], [1], [0, 0, 1, 1], [], []>} : vector<8x128xf32>, vector<128x128xf32>, vector<8x128xf32> -> vector<8x128xf32>
    %cst_30 = arith.constant dense<0.000000e+00> : vector<8x128xf32>
    %94 = tpu.matmul %73, %92, %cst_30 {dimension_numbers = #tpu.dot_dimension_numbers<[1], [0], [0], [1], [0, 0, 1, 1], [], []>} : vector<8x128xf32>, vector<128x128xf32>, vector<8x128xf32> -> vector<8x128xf32>
    %95 = arith.maximumf %93, %94 : vector<8x128xf32>
    %c2 = arith.constant 2 : index
    %c0_31 = arith.constant 0 : index
    %c0_32 = arith.constant 0 : index
    %96 = vector.load %arg2[%c2, %c0_31, %c0_32] : memref<6x384x128xf32, #tpu.memory_space<vmem>>, vector<1x384x128xf32>
    %97 = vector.shape_cast %96 : vector<1x384x128xf32> to vector<384x128xf32>
    %c2_33 = arith.constant 2 : index
    %c0_34 = arith.constant 0 : index
    %98 = vector.load %arg3[%c2_33, %c0_34] : memref<6x128xf32, #tpu.memory_space<vmem>>, vector<1x128xf32>
    %cst_35 = arith.constant 0.000000e+00 : f32
    %99 = vector.broadcast %cst_35 : f32 to vector<1x128xf32>
    %100 = vector.extract_strided_slice %95 {offsets = [0, 0], sizes = [7, 128], strides = [1, 1]} : vector<8x128xf32> to vector<7x128xf32>
    %101 = tpu.concatenate %99, %100 in 0 : vector<1x128xf32>, vector<7x128xf32> -> vector<8x128xf32>
    %102 = vector.extract_strided_slice %95 {offsets = [1, 0], sizes = [7, 128], strides = [1, 1]} : vector<8x128xf32> to vector<7x128xf32>
    %103 = tpu.concatenate %102, %99 in 0 : vector<7x128xf32>, vector<1x128xf32> -> vector<8x128xf32>
    %104 = tpu.concatenate %101, %95, %103 in 1 : vector<8x128xf32>, vector<8x128xf32>, vector<8x128xf32> -> vector<8x384xf32>
    %cst_36 = arith.constant dense<0.000000e+00> : vector<8x128xf32>
    %105 = tpu.matmul %104, %97, %cst_36 {dimension_numbers = #tpu.dot_dimension_numbers<[1], [0], [0], [1], [0, 0, 1, 1], [], []>} : vector<8x384xf32>, vector<384x128xf32>, vector<8x128xf32> -> vector<8x128xf32>
    %106 = vector.broadcast %98 : vector<1x128xf32> to vector<8x128xf32>
    %107 = arith.addf %105, %106 : vector<8x128xf32>
    %cst_37 = arith.constant 0.000000e+00 : f32
    %108 = vector.broadcast %cst_37 : f32 to vector<8x128xf32>
    %109 = arith.maximumf %107, %108 : vector<8x128xf32>
    %c3 = arith.constant 3 : index
    %c0_38 = arith.constant 0 : index
    %c0_39 = arith.constant 0 : index
    %110 = vector.load %arg2[%c3, %c0_38, %c0_39] : memref<6x384x128xf32, #tpu.memory_space<vmem>>, vector<1x384x128xf32>
    %111 = vector.shape_cast %110 : vector<1x384x128xf32> to vector<384x128xf32>
    %c3_40 = arith.constant 3 : index
    %c0_41 = arith.constant 0 : index
    %112 = vector.load %arg3[%c3_40, %c0_41] : memref<6x128xf32, #tpu.memory_space<vmem>>, vector<1x128xf32>
    %cst_42 = arith.constant 0.000000e+00 : f32
    %113 = vector.broadcast %cst_42 : f32 to vector<1x128xf32>
    %114 = vector.extract_strided_slice %109 {offsets = [0, 0], sizes = [7, 128], strides = [1, 1]} : vector<8x128xf32> to vector<7x128xf32>
    %115 = tpu.concatenate %113, %114 in 0 : vector<1x128xf32>, vector<7x128xf32> -> vector<8x128xf32>
    %116 = vector.extract_strided_slice %109 {offsets = [1, 0], sizes = [7, 128], strides = [1, 1]} : vector<8x128xf32> to vector<7x128xf32>
    %117 = tpu.concatenate %116, %113 in 0 : vector<7x128xf32>, vector<1x128xf32> -> vector<8x128xf32>
    %118 = tpu.concatenate %115, %109, %117 in 1 : vector<8x128xf32>, vector<8x128xf32>, vector<8x128xf32> -> vector<8x384xf32>
    %cst_43 = arith.constant dense<0.000000e+00> : vector<8x128xf32>
    %119 = tpu.matmul %118, %111, %cst_43 {dimension_numbers = #tpu.dot_dimension_numbers<[1], [0], [0], [1], [0, 0, 1, 1], [], []>} : vector<8x384xf32>, vector<384x128xf32>, vector<8x128xf32> -> vector<8x128xf32>
    %120 = vector.broadcast %112 : vector<1x128xf32> to vector<8x128xf32>
    %121 = arith.addf %119, %120 : vector<8x128xf32>
    %cst_44 = arith.constant 0.000000e+00 : f32
    %122 = vector.broadcast %cst_44 : f32 to vector<8x128xf32>
    %123 = arith.maximumf %121, %122 : vector<8x128xf32>
    %124 = tpu.iota {dimensions = array<i32: 0>} : vector<128x128xi32>
    %125 = tpu.iota {dimensions = array<i32: 1>} : vector<128x128xi32>
    %c15_i32 = arith.constant 15 : i32
    %126 = vector.broadcast %c15_i32 : i32 to vector<128x128xi32>
    %127 = arith.andi %124, %126 : vector<128x128xi32>
    %128 = arith.cmpi eq, %125, %127 : vector<128x128xi32>
    %129 = arith.extui %128 : vector<128x128xi1> to vector<128x128xi32>
    %130 = arith.sitofp %129 : vector<128x128xi32> to vector<128x128xf32>
    %c15_i32_45 = arith.constant 15 : i32
    %131 = vector.broadcast %c15_i32_45 : i32 to vector<128x128xi32>
    %132 = arith.andi %125, %131 : vector<128x128xi32>
    %133 = arith.cmpi eq, %124, %132 : vector<128x128xi32>
    %134 = arith.extui %133 : vector<128x128xi1> to vector<128x128xi32>
    %135 = arith.sitofp %134 : vector<128x128xi32> to vector<128x128xf32>
    %cst_46 = arith.constant dense<0.000000e+00> : vector<128xf32>
    %136 = vector.multi_reduction <add>, %123, %cst_46 [0] : vector<8x128xf32> to vector<128xf32>
    %137 = vector.shape_cast %136 : vector<128xf32> to vector<1x128xf32>
    %cst_47 = arith.constant dense<0.000000e+00> : vector<1x128xf32>
    %138 = tpu.matmul %137, %130, %cst_47 {dimension_numbers = #tpu.dot_dimension_numbers<[1], [0], [0], [1], [0, 0, 1, 1], [], []>} : vector<1x128xf32>, vector<128x128xf32>, vector<1x128xf32> -> vector<1x128xf32>
    %cst_48 = arith.constant 1.562500e-02 : f32
    %139 = vector.broadcast %cst_48 : f32 to vector<1x128xf32>
    %140 = arith.mulf %138, %139 : vector<1x128xf32>
    %cst_49 = arith.constant dense<0.000000e+00> : vector<1x128xf32>
    %141 = tpu.matmul %140, %135, %cst_49 {dimension_numbers = #tpu.dot_dimension_numbers<[1], [0], [0], [1], [0, 0, 1, 1], [], []>} : vector<1x128xf32>, vector<128x128xf32>, vector<1x128xf32> -> vector<1x128xf32>
    %142 = vector.broadcast %141 : vector<1x128xf32> to vector<8x128xf32>
    %143 = arith.subf %123, %142 : vector<8x128xf32>
    %144 = arith.mulf %143, %143 : vector<8x128xf32>
    %cst_50 = arith.constant dense<0.000000e+00> : vector<128xf32>
    %145 = vector.multi_reduction <add>, %144, %cst_50 [0] : vector<8x128xf32> to vector<128xf32>
    %146 = vector.shape_cast %145 : vector<128xf32> to vector<1x128xf32>
    %cst_51 = arith.constant dense<0.000000e+00> : vector<1x128xf32>
    %147 = tpu.matmul %146, %130, %cst_51 {dimension_numbers = #tpu.dot_dimension_numbers<[1], [0], [0], [1], [0, 0, 1, 1], [], []>} : vector<1x128xf32>, vector<128x128xf32>, vector<1x128xf32> -> vector<1x128xf32>
    %cst_52 = arith.constant 0.0158730168 : f32
    %148 = vector.broadcast %cst_52 : f32 to vector<1x128xf32>
    %149 = arith.mulf %147, %148 : vector<1x128xf32>
    %150 = math.sqrt %149 : vector<1x128xf32>
    %151 = tpu.iota {dimensions = array<i32: 0>} : vector<4x8xi32>
    %152 = tpu.iota {dimensions = array<i32: 1>} : vector<4x8xi32>
    %c2_i32_53 = arith.constant 2 : i32
    %153 = vector.broadcast %c2_i32_53 : i32 to vector<4x8xi32>
    %154 = arith.muli %151, %153 : vector<4x8xi32>
    %155 = arith.cmpi eq, %152, %154 : vector<4x8xi32>
    %156 = arith.extui %155 : vector<4x8xi1> to vector<4x8xi32>
    %157 = arith.sitofp %156 : vector<4x8xi32> to vector<4x8xf32>
    %c2_i32_54 = arith.constant 2 : i32
    %158 = vector.broadcast %c2_i32_54 : i32 to vector<4x8xi32>
    %159 = arith.muli %151, %158 : vector<4x8xi32>
    %c1_i32_55 = arith.constant 1 : i32
    %160 = vector.broadcast %c1_i32_55 : i32 to vector<4x8xi32>
    %161 = arith.addi %159, %160 : vector<4x8xi32>
    %162 = arith.cmpi eq, %152, %161 : vector<4x8xi32>
    %163 = arith.extui %162 : vector<4x8xi1> to vector<4x8xi32>
    %164 = arith.sitofp %163 : vector<4x8xi32> to vector<4x8xf32>
    %cst_56 = arith.constant dense<0.000000e+00> : vector<4x128xf32>
    %165 = tpu.matmul %157, %123, %cst_56 {dimension_numbers = #tpu.dot_dimension_numbers<[1], [0], [0], [1], [0, 0, 1, 1], [], []>} : vector<4x8xf32>, vector<8x128xf32>, vector<4x128xf32> -> vector<4x128xf32>
    %cst_57 = arith.constant dense<0.000000e+00> : vector<4x128xf32>
    %166 = tpu.matmul %164, %123, %cst_57 {dimension_numbers = #tpu.dot_dimension_numbers<[1], [0], [0], [1], [0, 0, 1, 1], [], []>} : vector<4x8xf32>, vector<8x128xf32>, vector<4x128xf32> -> vector<4x128xf32>
    %167 = arith.maximumf %165, %166 : vector<4x128xf32>
    %168 = tpu.iota {dimensions = array<i32: 0>} : vector<128x128xi32>
    %169 = tpu.iota {dimensions = array<i32: 1>} : vector<128x128xi32>
    %c15_i32_58 = arith.constant 15 : i32
    %170 = vector.broadcast %c15_i32_58 : i32 to vector<128x128xi32>
    %171 = arith.andi %169, %170 : vector<128x128xi32>
    %c64_i32_59 = arith.constant 64 : i32
    %172 = vector.broadcast %c64_i32_59 : i32 to vector<128x128xi32>
    %173 = arith.cmpi slt, %169, %172 : vector<128x128xi32>
    %c2_i32_60 = arith.constant 2 : i32
    %174 = vector.broadcast %c2_i32_60 : i32 to vector<128x128xi32>
    %175 = arith.muli %169, %174 : vector<128x128xi32>
    %176 = arith.subi %175, %171 : vector<128x128xi32>
    %177 = arith.cmpi eq, %168, %176 : vector<128x128xi32>
    %178 = arith.andi %177, %173 : vector<128x128xi1>
    %179 = arith.extui %178 : vector<128x128xi1> to vector<128x128xi32>
    %180 = arith.sitofp %179 : vector<128x128xi32> to vector<128x128xf32>
    %c16_i32 = arith.constant 16 : i32
    %181 = vector.broadcast %c16_i32 : i32 to vector<128x128xi32>
    %182 = arith.addi %176, %181 : vector<128x128xi32>
    %183 = arith.cmpi eq, %168, %182 : vector<128x128xi32>
    %184 = arith.andi %183, %173 : vector<128x128xi1>
    %185 = arith.extui %184 : vector<128x128xi1> to vector<128x128xi32>
    %186 = arith.sitofp %185 : vector<128x128xi32> to vector<128x128xf32>
    %cst_61 = arith.constant dense<0.000000e+00> : vector<4x128xf32>
    %187 = tpu.matmul %167, %180, %cst_61 {dimension_numbers = #tpu.dot_dimension_numbers<[1], [0], [0], [1], [0, 0, 1, 1], [], []>} : vector<4x128xf32>, vector<128x128xf32>, vector<4x128xf32> -> vector<4x128xf32>
    %cst_62 = arith.constant dense<0.000000e+00> : vector<4x128xf32>
    %188 = tpu.matmul %167, %186, %cst_62 {dimension_numbers = #tpu.dot_dimension_numbers<[1], [0], [0], [1], [0, 0, 1, 1], [], []>} : vector<4x128xf32>, vector<128x128xf32>, vector<4x128xf32> -> vector<4x128xf32>
    %189 = arith.maximumf %187, %188 : vector<4x128xf32>
    %c4 = arith.constant 4 : index
    %c0_63 = arith.constant 0 : index
    %c0_64 = arith.constant 0 : index
    %190 = vector.load %arg2[%c4, %c0_63, %c0_64] : memref<6x384x128xf32, #tpu.memory_space<vmem>>, vector<1x384x128xf32>
    %191 = vector.shape_cast %190 : vector<1x384x128xf32> to vector<384x128xf32>
    %c4_65 = arith.constant 4 : index
    %c0_66 = arith.constant 0 : index
    %192 = vector.load %arg3[%c4_65, %c0_66] : memref<6x128xf32, #tpu.memory_space<vmem>>, vector<1x128xf32>
    %cst_67 = arith.constant 0.000000e+00 : f32
    %193 = vector.broadcast %cst_67 : f32 to vector<1x128xf32>
    %194 = vector.extract_strided_slice %189 {offsets = [0, 0], sizes = [3, 128], strides = [1, 1]} : vector<4x128xf32> to vector<3x128xf32>
    %195 = tpu.concatenate %193, %194 in 0 : vector<1x128xf32>, vector<3x128xf32> -> vector<4x128xf32>
    %196 = vector.extract_strided_slice %189 {offsets = [1, 0], sizes = [3, 128], strides = [1, 1]} : vector<4x128xf32> to vector<3x128xf32>
    %197 = tpu.concatenate %196, %193 in 0 : vector<3x128xf32>, vector<1x128xf32> -> vector<4x128xf32>
    %198 = tpu.concatenate %195, %189, %197 in 1 : vector<4x128xf32>, vector<4x128xf32>, vector<4x128xf32> -> vector<4x384xf32>
    %cst_68 = arith.constant dense<0.000000e+00> : vector<4x128xf32>
    %199 = tpu.matmul %198, %191, %cst_68 {dimension_numbers = #tpu.dot_dimension_numbers<[1], [0], [0], [1], [0, 0, 1, 1], [], []>} : vector<4x384xf32>, vector<384x128xf32>, vector<4x128xf32> -> vector<4x128xf32>
    %200 = vector.broadcast %192 : vector<1x128xf32> to vector<4x128xf32>
    %201 = arith.addf %199, %200 : vector<4x128xf32>
    %cst_69 = arith.constant 0.000000e+00 : f32
    %202 = vector.broadcast %cst_69 : f32 to vector<4x128xf32>
    %203 = arith.maximumf %201, %202 : vector<4x128xf32>
    %c5 = arith.constant 5 : index
    %c0_70 = arith.constant 0 : index
    %c0_71 = arith.constant 0 : index
    %204 = vector.load %arg2[%c5, %c0_70, %c0_71] : memref<6x384x128xf32, #tpu.memory_space<vmem>>, vector<1x384x128xf32>
    %205 = vector.shape_cast %204 : vector<1x384x128xf32> to vector<384x128xf32>
    %c5_72 = arith.constant 5 : index
    %c0_73 = arith.constant 0 : index
    %206 = vector.load %arg3[%c5_72, %c0_73] : memref<6x128xf32, #tpu.memory_space<vmem>>, vector<1x128xf32>
    %cst_74 = arith.constant 0.000000e+00 : f32
    %207 = vector.broadcast %cst_74 : f32 to vector<1x128xf32>
    %208 = vector.extract_strided_slice %203 {offsets = [0, 0], sizes = [3, 128], strides = [1, 1]} : vector<4x128xf32> to vector<3x128xf32>
    %209 = tpu.concatenate %207, %208 in 0 : vector<1x128xf32>, vector<3x128xf32> -> vector<4x128xf32>
    %210 = vector.extract_strided_slice %203 {offsets = [1, 0], sizes = [3, 128], strides = [1, 1]} : vector<4x128xf32> to vector<3x128xf32>
    %211 = tpu.concatenate %210, %207 in 0 : vector<3x128xf32>, vector<1x128xf32> -> vector<4x128xf32>
    %212 = tpu.concatenate %209, %203, %211 in 1 : vector<4x128xf32>, vector<4x128xf32>, vector<4x128xf32> -> vector<4x384xf32>
    %cst_75 = arith.constant dense<0.000000e+00> : vector<4x128xf32>
    %213 = tpu.matmul %212, %205, %cst_75 {dimension_numbers = #tpu.dot_dimension_numbers<[1], [0], [0], [1], [0, 0, 1, 1], [], []>} : vector<4x384xf32>, vector<384x128xf32>, vector<4x128xf32> -> vector<4x128xf32>
    %214 = vector.broadcast %206 : vector<1x128xf32> to vector<4x128xf32>
    %215 = arith.addf %213, %214 : vector<4x128xf32>
    %cst_76 = arith.constant 0.000000e+00 : f32
    %216 = vector.broadcast %cst_76 : f32 to vector<4x128xf32>
    %217 = arith.maximumf %215, %216 : vector<4x128xf32>
    %218 = tpu.iota {dimensions = array<i32: 0>} : vector<128x128xi32>
    %219 = tpu.iota {dimensions = array<i32: 1>} : vector<128x128xi32>
    %c31_i32 = arith.constant 31 : i32
    %220 = vector.broadcast %c31_i32 : i32 to vector<128x128xi32>
    %221 = arith.andi %218, %220 : vector<128x128xi32>
    %222 = arith.cmpi eq, %219, %221 : vector<128x128xi32>
    %223 = arith.extui %222 : vector<128x128xi1> to vector<128x128xi32>
    %224 = arith.sitofp %223 : vector<128x128xi32> to vector<128x128xf32>
    %c31_i32_77 = arith.constant 31 : i32
    %225 = vector.broadcast %c31_i32_77 : i32 to vector<128x128xi32>
    %226 = arith.andi %219, %225 : vector<128x128xi32>
    %227 = arith.cmpi eq, %218, %226 : vector<128x128xi32>
    %228 = arith.extui %227 : vector<128x128xi1> to vector<128x128xi32>
    %229 = arith.sitofp %228 : vector<128x128xi32> to vector<128x128xf32>
    %cst_78 = arith.constant dense<0.000000e+00> : vector<128xf32>
    %230 = vector.multi_reduction <add>, %217, %cst_78 [0] : vector<4x128xf32> to vector<128xf32>
    %231 = vector.shape_cast %230 : vector<128xf32> to vector<1x128xf32>
    %cst_79 = arith.constant dense<0.000000e+00> : vector<1x128xf32>
    %232 = tpu.matmul %231, %224, %cst_79 {dimension_numbers = #tpu.dot_dimension_numbers<[1], [0], [0], [1], [0, 0, 1, 1], [], []>} : vector<1x128xf32>, vector<128x128xf32>, vector<1x128xf32> -> vector<1x128xf32>
    %cst_80 = arith.constant 6.250000e-02 : f32
    %233 = vector.broadcast %cst_80 : f32 to vector<1x128xf32>
    %234 = arith.mulf %232, %233 : vector<1x128xf32>
    %cst_81 = arith.constant dense<0.000000e+00> : vector<1x128xf32>
    %235 = tpu.matmul %234, %229, %cst_81 {dimension_numbers = #tpu.dot_dimension_numbers<[1], [0], [0], [1], [0, 0, 1, 1], [], []>} : vector<1x128xf32>, vector<128x128xf32>, vector<1x128xf32> -> vector<1x128xf32>
    %236 = vector.broadcast %235 : vector<1x128xf32> to vector<4x128xf32>
    %237 = arith.subf %217, %236 : vector<4x128xf32>
    %238 = arith.mulf %237, %237 : vector<4x128xf32>
    %cst_82 = arith.constant dense<0.000000e+00> : vector<128xf32>
    %239 = vector.multi_reduction <add>, %238, %cst_82 [0] : vector<4x128xf32> to vector<128xf32>
    %240 = vector.shape_cast %239 : vector<128xf32> to vector<1x128xf32>
    %cst_83 = arith.constant dense<0.000000e+00> : vector<1x128xf32>
    %241 = tpu.matmul %240, %224, %cst_83 {dimension_numbers = #tpu.dot_dimension_numbers<[1], [0], [0], [1], [0, 0, 1, 1], [], []>} : vector<1x128xf32>, vector<128x128xf32>, vector<1x128xf32> -> vector<1x128xf32>
    %cst_84 = arith.constant 0.0666666701 : f32
    %242 = vector.broadcast %cst_84 : f32 to vector<1x128xf32>
    %243 = arith.mulf %241, %242 : vector<1x128xf32>
    %244 = math.sqrt %243 : vector<1x128xf32>
    %245 = tpu.concatenate %46, %56, %140, %150, %234, %244 in 0 : vector<1x128xf32>, vector<1x128xf32>, vector<1x128xf32>, vector<1x128xf32>, vector<1x128xf32>, vector<1x128xf32> -> vector<6x128xf32>
    %c0_85 = arith.constant 0 : index
    %c0_86 = arith.constant 0 : index
    %c0_87 = arith.constant 0 : index
    %246 = vector.load %arg4[%c0_85, %c0_86, %c0_87] : memref<1x6x128xf32, #tpu.memory_space<vmem>>, vector<1x6x128xf32>
    %247 = vector.shape_cast %246 : vector<1x6x128xf32> to vector<6x128xf32>
    %248 = vector.shape_cast %245 : vector<6x128xf32> to vector<1x6x128xf32>
    tpu.vector_store %arg4[%c0_85, %c0_86, %c0_87], %248 {strides = array<i32>} : memref<1x6x128xf32, #tpu.memory_space<vmem>>, vector<1x6x128xf32>,
    return
  }
  func.func @transform_0(%arg0: i32) -> (i32, i32, i32) {
    %c0_i32 = arith.constant 0 : i32
    %c0_i32_0 = arith.constant 0 : i32
    %c0_i32_1 = arith.constant 0 : i32
    return %arg0, %c0_i32, %c0_i32_0 : i32, i32, i32
  }
  func.func @transform_1(%arg0: i32) -> (i32, i32, i32) {
    %c0_i32 = arith.constant 0 : i32
    %c0_i32_0 = arith.constant 0 : i32
    %c0_i32_1 = arith.constant 0 : i32
    %c0_i32_2 = arith.constant 0 : i32
    return %c0_i32, %c0_i32_0, %c0_i32_1 : i32, i32, i32
  }
  func.func @transform_2(%arg0: i32) -> (i32, i32) {
    %c0_i32 = arith.constant 0 : i32
    %c0_i32_0 = arith.constant 0 : i32
    %c0_i32_1 = arith.constant 0 : i32
    return %c0_i32, %c0_i32_0 : i32, i32
  }
  func.func @transform_3(%arg0: i32) -> (i32, i32, i32) {
    %c0_i32 = arith.constant 0 : i32
    %c0_i32_0 = arith.constant 0 : i32
    %c0_i32_1 = arith.constant 0 : i32
    return %arg0, %c0_i32, %c0_i32_0 : i32, i32, i32
  }
}

</mosaic_0001>

<llo_original>
// kernel: tpu_custom_call.1
$region0: #{tpu_custom_call.1}
  #allocation0 [shape = 'u32[]', space=smem, size = 0x4, offset = 0x4, fixed_abs, tag = 'smem constant byte address 0x4 - core index']
  #allocation1 [shape = 'u32[144,128]{1,0:T(1,128)}', space=vmem, size = 0x12000, scoped, tag = 'internal scratch']
  %s0 = inlined_call_operand.hbm [shape: f32[2,16,128], index: 0, kind: input, shape index: {}]
  %s1 = inlined_call_operand.hbm [shape: f32[6,384,128], index: 1, kind: input, shape index: {}]
  %s2 = inlined_call_operand.hbm [shape: f32[6,128], index: 2, kind: input, shape index: {}]
  %s3 = inlined_call_operand.vmem [shape: f32[2,6,128], index: 3, kind: output, shape index: {}]
  %s4 = sld [smem:[#allocation0]]
  $region57: #{tpu_custom_call.1} parent=0
    _
  %s6 = ssub.s32 1, %s4
  %s7 = scalar_select 0, %s6, %s4
  $region1: #{tpu_custom_call.1} parent=0
    #allocation2 [shape = 'u8[16384]{0}', space=vmem, size = 0x4000, scoped, tag = 'input window, operand 0']
    #allocation3 [shape = 's32[2]{0}', space=sflag, size = 0x8, scoped, tag = 'scoped memory for tpu_custom_call.1']
    #allocation4 [shape = 'u8[1179648]{0}', space=vmem, size = 0x120000, scoped, tag = 'input window, operand 1, single buffered']
    #allocation5 [shape = 's32[1]{0}', space=sflag, size = 0x4, scoped, tag = 'scoped memory for tpu_custom_call.1']
    #allocation6 [shape = 'u8[4096]{0}', space=vmem, size = 0x1000, scoped, tag = 'input window, operand 2, single buffered']
    %8 = vsyncpa [#allocation3], 0
    %s9 = scalar_lea.sflag [#allocation3], 1
    %10 = vsyncpa %s9, 0
    %11 = vsyncpa [#allocation5], 0
    loop: start=0, step=1, limit=4
    $region2: #{tpu_custom_call.1} parent=1 // loop_pre_header
      _
    $region3: #{tpu_custom_call.1} parent=1 // loop_header
      %s13 = sphi 0, %s17
      %p14 = scmp.ge.s32.totalorder %s13, 4
      %s23 = sphi 0, %s25
      %s26 = sphi 0, %s23
      %s27 = sphi 0, %s26
      %s43 = sphi 0, %s27
      %s47 = sphi 0, %s47
      %s49 = sphi 0, %s47
      %s50 = sphi 0, %s49
      %s64 = sphi 0, %s50
      %s68 = sphi 0, %s68
      %s70 = sphi 0, %s68
      %s71 = sphi 0, %s70
      %s85 = sphi 0, %s71
      %s91 = sphi 0, %s93
      %s94 = sphi 0, %s91
      %s95 = sphi 0, %s94
      %s111 = sphi 0, %s95
    $region4: #{tpu_custom_call.1} parent=1 // loop_header_branch
      %16 = sbr.rel (%p14) target = $region8
    $region5: #{tpu_custom_call.1} parent=1 // loop_body
      %s18 = ssub.s32 %s13, 1
      %s19 = ssub.s32 %s13, 2
      %s20 = sadd.s32 %s13, 1
      %s21 = ssub.s32 %s13, %s20
      %p22 = scmp.eq.s32.totalorder %s21, 0
      %s24 = sadd.s32 %s23, 1
      %s25 = scalar_select %p22, %s23, %s24
      %p28 = pneg %p22
      %p29 = scmp.eq.s32.totalorder %s13, 1
      %p30 = por %p28, %p29
      %p31 = scmp.ne.s32.totalorder %s23, %s26
      %p32 = scmp.eq.s32.totalorder %s13, 0
      %p33 = por %p31, %p32
      %p34 = scmp.ne.s32.totalorder %s23, %s26
      %p35 = scmp.eq.s32.totalorder %s18, 1
      %p36 = por %p34, %p35
      %p37 = scmp.ne.s32.totalorder %s26, %s27
      %p38 = scmp.eq.s32.totalorder %s18, 0
      %p39 = por %p37, %p38
      %p40 = scmp.ne.s32.totalorder %s26, %s27
      %p41 = scmp.eq.s32.totalorder %s19, 1
      %p42 = por %p40, %p41
      %p44 = scmp.ne.s32.totalorder %s27, %s43
      %p45 = scmp.eq.s32.totalorder %s19, 0
      %p46 = por %p44, %p45
      %s48 = sadd.s32 %s47, 1
      %p51 = scmp.eq.s32.totalorder %s13, 1
      %p52 = scmp.ne.s32.totalorder %s47, %s49
      %p53 = scmp.eq.s32.totalorder %s13, 0
      %p54 = por %p52, %p53
      %p55 = scmp.ne.s32.totalorder %s47, %s49
      %p56 = scmp.eq.s32.totalorder %s18, 1
      %p57 = por %p55, %p56
      %p58 = scmp.ne.s32.totalorder %s49, %s50
      %p59 = scmp.eq.s32.totalorder %s18, 0
      %p60 = por %p58, %p59
      %p61 = scmp.ne.s32.totalorder %s49, %s50
      %p62 = scmp.eq.s32.totalorder %s19, 1
      %p63 = por %p61, %p62
      %p65 = scmp.ne.s32.totalorder %s50, %s64
      %p66 = scmp.eq.s32.totalorder %s19, 0
      %p67 = por %p65, %p66
      %s69 = sadd.s32 %s68, 1
      %p72 = scmp.eq.s32.totalorder %s13, 1
      %p73 = scmp.ne.s32.totalorder %s68, %s70
      %p74 = scmp.eq.s32.totalorder %s13, 0
      %p75 = por %p73, %p74
      %p76 = scmp.ne.s32.totalorder %s68, %s70
      %p77 = scmp.eq.s32.totalorder %s18, 1
      %p78 = por %p76, %p77
      %p79 = scmp.ne.s32.totalorder %s70, %s71
      %p80 = scmp.eq.s32.totalorder %s18, 0
      %p81 = por %p79, %p80
      %p82 = scmp.ne.s32.totalorder %s70, %s71
      %p83 = scmp.eq.s32.totalorder %s19, 1
      %p84 = por %p82, %p83
      %p86 = scmp.ne.s32.totalorder %s71, %s85
      %p87 = scmp.eq.s32.totalorder %s19, 0
      %p88 = por %p86, %p87
      %s89 = ssub.s32 %s13, %s20
      %p90 = scmp.eq.s32.totalorder %s89, 0
      %s92 = sadd.s32 %s91, 1
      %s93 = scalar_select %p90, %s91, %s92
      %p96 = pneg %p90
      %p97 = scmp.eq.s32.totalorder %s13, 1
      %p98 = por %p96, %p97
      %p99 = scmp.ne.s32.totalorder %s91, %s94
      %p100 = scmp.eq.s32.totalorder %s13, 0
      %p101 = por %p99, %p100
      %p102 = scmp.ne.s32.totalorder %s91, %s94
      %p103 = scmp.eq.s32.totalorder %s18, 1
      %p104 = por %p102, %p103
      %p105 = scmp.ne.s32.totalorder %s94, %s95
      %p106 = scmp.eq.s32.totalorder %s18, 0
      %p107 = por %p105, %p106
      %p108 = scmp.ne.s32.totalorder %s94, %s95
      %p109 = scmp.eq.s32.totalorder %s19, 1
      %p110 = por %p108, %p109
      %p112 = scmp.ne.s32.totalorder %s95, %s111
      %p113 = scmp.eq.s32.totalorder %s19, 0
      %p114 = por %p112, %p113
      %p115 = scmp.le.s32.totalorder 1, %s13
      %p116 = scmp.lt.s32.totalorder %s13, 3
      %p117 = pnand %p115, %p116
      %p118 = pneg %p117
      // Predicated region
      $region9: #{tpu_custom_call.1} parent=5 // pred_check
        _
      $region10: #{tpu_custom_call.1} parent=5 // pred_check_branch
        %120 = sbr.rel (%p117) target = $region12
      $region11: #{tpu_custom_call.1} parent=5 // pred_region
        %s121 = ssub.s32 %s13, 1
        // Predicated region
        $region13: #{tpu_custom_call.1} parent=11 // pred_check
          %p122 = pneg %p60
        $region14: #{tpu_custom_call.1} parent=11 // pred_check_branch
          %124 = sbr.rel (%p122) target = $region16
        $region15: #{tpu_custom_call.1} parent=11 // pred_region
          %s126 = ssub.s32 36864, 36864
          %127 = vsyncadd [#allocation5], %s126
          %s128 = sshll.u32 [#allocation4], 4
          %s129 = int_to_ptr.vmem [resolvable:$true] %s128
          %134 = dma.hbm_to_vmem [thread:$0]  %s1, 36864, %s129, [#allocation5], 128, 128, 8
        $region16: #{tpu_custom_call.1} parent=11 // pred_fallthru
          _
        // Predicated region
        $region17: #{tpu_custom_call.1} parent=11 // pred_check
          %p135 = pneg %p81
        $region18: #{tpu_custom_call.1} parent=11 // pred_check_branch
          %137 = sbr.rel (%p135) target = $region20
        $region19: #{tpu_custom_call.1} parent=11 // pred_region
          %s139 = ssub.s32 128, 128
          %140 = vsyncadd [#allocation5], %s139
          %s142 = sshll.u32 [#allocation6], 4
          %s143 = int_to_ptr.vmem [resolvable:$true] %s142
          %145 = dma.hbm_to_vmem [thread:$0]  %s2, 128, %s143, [#allocation5]
        $region20: #{tpu_custom_call.1} parent=11 // pred_fallthru
          _
      $region12: #{tpu_custom_call.1} parent=5 // pred_fallthru
        _
      %p146 = scmp.lt.s32.totalorder %s13, 2
      // Predicated region
      $region21: #{tpu_custom_call.1} parent=5 // pred_check
        %p147 = pneg %p146
      $region22: #{tpu_custom_call.1} parent=5 // pred_check_branch
        %149 = sbr.rel (%p147) target = $region24
      $region23: #{tpu_custom_call.1} parent=5 // pred_region
        // Predicated region
        $region25: #{tpu_custom_call.1} parent=23 // pred_check
          %p150 = pneg %p33
        $region26: #{tpu_custom_call.1} parent=23 // pred_check_branch
          %152 = sbr.rel (%p150) target = $region28
        $region27: #{tpu_custom_call.1} parent=23 // pred_region
          %s153 = sand.u32 %s23, 1
          %s154 = scalar_lea.sflag [#allocation3], %s153
          %s155 = sand.u32 %s23, 1
          %s156 = smul.addr %s155, 16
          %s157 = scalar_lea.vmem [#allocation2], %s156
          %s159 = ssub.s32 256, 256
          %160 = vsyncadd %s154, %s159
          %s161 = smul.addr %s13, 2
          %s162 = smul.addr %s161, 128
          %s163 = scalar_lea.hbm %s0, %s162
          %s164 = sshll.u32 %s157, 4
          %s165 = int_to_ptr.vmem [resolvable:$true] %s164
          %170 = dma.hbm_to_vmem [thread:$0]  %s163, 256, %s165, %s154, 128, 128, 8
        $region28: #{tpu_custom_call.1} parent=23 // pred_fallthru
          _
      $region24: #{tpu_custom_call.1} parent=5 // pred_fallthru
        _
      %p171 = scmp.le.s32.totalorder 1, %s13
      %p172 = scmp.lt.s32.totalorder %s13, 3
      %p173 = pnand %p171, %p172
      %p174 = pneg %p173
      // Predicated region
      $region29: #{tpu_custom_call.1} parent=5 // pred_check
        _
      $region30: #{tpu_custom_call.1} parent=5 // pred_check_branch
        %176 = sbr.rel (%p173) target = $region32
      $region31: #{tpu_custom_call.1} parent=5 // pred_region
        %s177 = ssub.s32 %s13, 1
        %s178 = sand.u32 %s26, 1
        %s179 = scalar_lea.sflag [#allocation3], %s178
        %s180 = sand.u32 %s26, 1
        %s181 = smul.addr %s180, 16
        %s182 = scalar_lea.vmem [#allocation2], %s181
        // Predicated region
        $region33: #{tpu_custom_call.1} parent=31 // pred_check
          %p183 = pneg %p39
        $region34: #{tpu_custom_call.1} parent=31 // pred_check_branch
          %185 = sbr.rel (%p183) target = $region36
        $region35: #{tpu_custom_call.1} parent=31 // pred_region
          %186 = dma.done %s179, 256
        $region36: #{tpu_custom_call.1} parent=31 // pred_fallthru
          _
        // Predicated region
        $region37: #{tpu_custom_call.1} parent=31 // pred_check
          %p187 = pneg %p60
        $region38: #{tpu_custom_call.1} parent=31 // pred_check_branch
          %189 = sbr.rel (%p187) target = $region40
        $region39: #{tpu_custom_call.1} parent=31 // pred_region
          %190 = dma.done [#allocation5], 36864
        $region40: #{tpu_custom_call.1} parent=31 // pred_fallthru
          _
        // Predicated region
        $region41: #{tpu_custom_call.1} parent=31 // pred_check
          %p191 = pneg %p81
        $region42: #{tpu_custom_call.1} parent=31 // pred_check_branch
          %193 = sbr.rel (%p191) target = $region44
        $region43: #{tpu_custom_call.1} parent=31 // pred_region
          %194 = dma.done [#allocation5], 128
        $region44: #{tpu_custom_call.1} parent=31 // pred_fallthru
          _
        %s195 = sand.u32 %s26, 1
        %s196 = scalar_lea.sflag [#allocation3], %s195
        %s197 = sand.u32 %s26, 1
        %s198 = smul.addr %s197, 16
        %s199 = scalar_lea.vmem [#allocation2], %s198
        %p200 = pneg %p39
        %p201 = pneg %p36
        %p202 = pneg %p60
        %p203 = pneg %p57
        %p204 = pneg %p81
        %p205 = pneg %p78
        %p206 = pneg %p107
        %p207 = pneg %p104
        %p208 = scmp.lt.s32.totalorder %s18, 1
        %s209 = scalar_select %p208, %s18, 1
        %s210 = smul.addr %s209, 8
        %s211 = scalar_lea.vmem %s3, %s210
        %p212 = scmp.lt.s32.totalorder %s18, 1
        %s213 = scalar_select %p212, %s18, 1
        %s214 = smul.addr %s213, 8
        %s215 = scalar_lea.vmem %s3, %s214
        %v216 = vld [vmem:[%s182] sm:$0xff]
        %v217 = vld [vmem:[%s182 + $0x8] sm:$0xff]
        %v218 = vld [vmem:[#allocation4] sm:$0xff]
        %v219 = vld [vmem:[#allocation4 + $0x8] sm:$0xff]
        %v220 = vld [vmem:[#allocation4 + $0x10] sm:$0xff]
        %v221 = vld [vmem:[#allocation4 + $0x18] sm:$0xff]
        %v222 = vld [vmem:[#allocation4 + $0x20] sm:$0xff]
        %v223 = vld [vmem:[#allocation4 + $0x28] sm:$0xff]
        %v224 = vld [vmem:[#allocation4 + $0x30] sm:$0xff]
        %v225 = vld [vmem:[#allocation4 + $0x38] sm:$0xff]
        %v226 = vld [vmem:[#allocation4 + $0x40] sm:$0xff]
        %v227 = vld [vmem:[#allocation4 + $0x48] sm:$0xff]
        %v228 = vld [vmem:[#allocation4 + $0x50] sm:$0xff]
        %v229 = vld [vmem:[#allocation4 + $0x58] sm:$0xff]
        %v230 = vld [vmem:[#allocation4 + $0x60] sm:$0xff]
        %v231 = vld [vmem:[#allocation4 + $0x68] sm:$0xff]
        %v232 = vld [vmem:[#allocation4 + $0x70] sm:$0xff]
        %v233 = vld [vmem:[#allocation4 + $0x78] sm:$0xff]
        %v234 = vld [vmem:[#allocation4 + $0x80] sm:$0xff]
        %v235 = vld [vmem:[#allocation4 + $0x88] sm:$0xff]
        %v236 = vld [vmem:[#allocation4 + $0x90] sm:$0xff]
        %v237 = vld [vmem:[#allocation4 + $0x98] sm:$0xff]
        %v238 = vld [vmem:[#allocation4 + $0xa0] sm:$0xff]
        %v239 = vld [vmem:[#allocation4 + $0xa8] sm:$0xff]
        %v240 = vld [vmem:[#allocation4 + $0xb0] sm:$0xff]
        %v241 = vld [vmem:[#allocation4 + $0xb8] sm:$0xff]
        %v242 = vld [vmem:[#allocation4 + $0xc0] sm:$0xff]
        %v243 = vld [vmem:[#allocation4 + $0xc8] sm:$0xff]
        %v244 = vld [vmem:[#allocation4 + $0xd0] sm:$0xff]
        %v245 = vld [vmem:[#allocation4 + $0xd8] sm:$0xff]
        %v246 = vld [vmem:[#allocation4 + $0xe0] sm:$0xff]
        %v247 = vld [vmem:[#allocation4 + $0xe8] sm:$0xff]
        %v248 = vld [vmem:[#allocation4 + $0xf0] sm:$0xff]
        %v249 = vld [vmem:[#allocation4 + $0xf8] sm:$0xff]
        %v250 = vld [vmem:[#allocation4 + $0x100] sm:$0xff]
        %v251 = vld [vmem:[#allocation4 + $0x108] sm:$0xff]
        %v252 = vld [vmem:[#allocation4 + $0x110] sm:$0xff]
        %v253 = vld [vmem:[#allocation4 + $0x118] sm:$0xff]
        %v254 = vld [vmem:[#allocation4 + $0x120] sm:$0xff]
        %v255 = vld [vmem:[#allocation4 + $0x128] sm:$0xff]
        %v256 = vld [vmem:[#allocation4 + $0x130] sm:$0xff]
        %v257 = vld [vmem:[#allocation4 + $0x138] sm:$0xff]
        %v258 = vld [vmem:[#allocation4 + $0x140] sm:$0xff]
        %v259 = vld [vmem:[#allocation4 + $0x148] sm:$0xff]
        %v260 = vld [vmem:[#allocation4 + $0x150] sm:$0xff]
        %v261 = vld [vmem:[#allocation4 + $0x158] sm:$0xff]
        %v262 = vld [vmem:[#allocation4 + $0x160] sm:$0xff]
        %v263 = vld [vmem:[#allocation4 + $0x168] sm:$0xff]
        %v264 = vld [vmem:[#allocation4 + $0x170] sm:$0xff]
        %v265 = vld [vmem:[#allocation4 + $0x178] sm:$0xff]
        %v266 = vld [vmem:[#allocation6] sm:$0x1]
        %vm269 = vcmask 1040384
        %v270 = vrot.slane %v216, 7
        %v271 = vrot.slane %v217, 7
        %v272 = vsel %vm269, %v270, %v271
        %v275 = vsel %vm269, 0.0, %v270
        %vm276 = vcmask 1046528
        %v277 = vrot.slane %v216, 1
        %v278 = vrot.slane %v217, 1
        %v279 = vsel %vm276, %v277, %v278
        %v282 = vsel %vm276, %v278, 0.0
        %v283 = vlaneseq
        %v284 = vshrl.u32 %v283, 7
        %v285 = vsub.s32 0, %v284
        %v286 = vrot.slane %v266, %v285
        %287 = vmatprep.subr.mxu0 0.0
        %288 = vmatpush1.msra.mxu0 %v218
        %289 = vmatprep.subr.mxu0 0.0
        %290 = vmatpush1.msra.mxu0 %v219
        %291 = vmatprep.subr.mxu0 0.0
        %292 = vmatpush1.msra.mxu0 %v220
        %293 = vmatprep.subr.mxu0 0.0
        %294 = vmatpush1.msra.mxu0 %v221
        %295 = vmatprep.subr.mxu0 0.0
        %296 = vmatpush1.msra.mxu0 %v222
        %297 = vmatprep.subr.mxu0 0.0
        %298 = vmatpush1.msra.mxu0 %v223
        %299 = vmatprep.subr.mxu0 0.0
        %300 = vmatpush1.msra.mxu0 %v224
        %301 = vmatprep.subr.mxu0 0.0
        %302 = vmatpush1.msra.mxu0 %v225
        %303 = vmatprep.subr.mxu0 0.0
        %304 = vmatpush1.msra.mxu0 %v226
        %305 = vmatprep.subr.mxu0 0.0
        %306 = vmatpush1.msra.mxu0 %v227
        %307 = vmatprep.subr.mxu0 0.0
        %308 = vmatpush1.msra.mxu0 %v228
        %309 = vmatprep.subr.mxu0 0.0
        %310 = vmatpush1.msra.mxu0 %v229
        %311 = vmatprep.subr.mxu0 0.0
        %312 = vmatpush1.msra.mxu0 %v230
        %313 = vmatprep.subr.mxu0 0.0
        %314 = vmatpush1.msra.mxu0 %v231
        %315 = vmatprep.subr.mxu0 0.0
        %316 = vmatpush1.msra.mxu0 %v232
        %317 = vmatprep.subr.mxu0 0.0
        %318 = vmatpush1.msra.mxu0 %v233
        %319 = vmatprep.subr.mxu0 0.0
        %320 = vmatpush1.msra.mxu0 %v234
        %321 = vmatprep.subr.mxu0 0.0
        %322 = vmatpush1.msra.mxu0 %v235
        %323 = vmatprep.subr.mxu0 0.0
        %324 = vmatpush1.msra.mxu0 %v236
        %325 = vmatprep.subr.mxu0 0.0
        %326 = vmatpush1.msra.mxu0 %v237
        %327 = vmatprep.subr.mxu0 0.0
        %328 = vmatpush1.msra.mxu0 %v238
        %329 = vmatprep.subr.mxu0 0.0
        %330 = vmatpush1.msra.mxu0 %v239
        %331 = vmatprep.subr.mxu0 0.0
        %332 = vmatpush1.msra.mxu0 %v240
        %333 = vmatprep.subr.mxu0 0.0
        %334 = vmatpush1.msra.mxu0 %v241
        %335 = vmatprep.subr.mxu0 0.0
        %336 = vmatpush1.msra.mxu0 %v242
        %337 = vmatprep.subr.mxu0 0.0
        %338 = vmatpush1.msra.mxu0 %v243
        %339 = vmatprep.subr.mxu0 0.0
        %340 = vmatpush1.msra.mxu0 %v244
        %341 = vmatprep.subr.mxu0 0.0
        %342 = vmatpush1.msra.mxu0 %v245
        %343 = vmatprep.subr.mxu0 0.0
        %344 = vmatpush1.msra.mxu0 %v246
        %345 = vmatprep.subr.mxu0 0.0
        %346 = vmatpush1.msra.mxu0 %v247
        %347 = vmatprep.subr.mxu0 0.0
        %348 = vmatpush1.msra.mxu0 %v248
        %349 = vmatprep.subr.mxu0 0.0
        %350 = vmatpush1.msra.mxu0 %v249
        %351 = vmatprep.mubr.f32.mxu0 %v216
        %352 = vmatmul.mubr.f32.gmra.mrb[0].mxu0 %v275
        %v353 = vpop.f32.mrb[0].mxu0
        %v354 = vadd.f32 %v286, %v353
        %v355 = vpop.f32.mrb[0].mxu0
        %356 = vmatprep.mubr.f32.mxu0 %v217
        %357 = vmatmul.mubr.f32.gmra.mrb[0].mxu0 %v272
        %v358 = vpop.f32.mrb[0].mxu0
        %v359 = vadd.f32 %v286, %v358
        %v360 = vpop.f32.mrb[0].mxu0
        %361 = vdwg.mxu0
        %362 = vmatprep.subr.mxu0 0.0
        %363 = vmatpush1.msra.mxu0 %v250
        %364 = vmatprep.subr.mxu0 0.0
        %365 = vmatpush1.msra.mxu0 %v251
        %366 = vmatprep.subr.mxu0 0.0
        %367 = vmatpush1.msra.mxu0 %v252
        %368 = vmatprep.subr.mxu0 0.0
        %369 = vmatpush1.msra.mxu0 %v253
        %370 = vmatprep.subr.mxu0 0.0
        %371 = vmatpush1.msra.mxu0 %v254
        %372 = vmatprep.subr.mxu0 0.0
        %373 = vmatpush1.msra.mxu0 %v255
        %374 = vmatprep.subr.mxu0 0.0
        %375 = vmatpush1.msra.mxu0 %v256
        %376 = vmatprep.subr.mxu0 0.0
        %377 = vmatpush1.msra.mxu0 %v257
        %378 = vmatprep.subr.mxu0 0.0
        %379 = vmatpush1.msra.mxu0 %v258
        %380 = vmatprep.subr.mxu0 0.0
        %381 = vmatpush1.msra.mxu0 %v259
        %382 = vmatprep.subr.mxu0 0.0
        %383 = vmatpush1.msra.mxu0 %v260
        %384 = vmatprep.subr.mxu0 0.0
        %385 = vmatpush1.msra.mxu0 %v261
        %386 = vmatprep.subr.mxu0 0.0
        %387 = vmatpush1.msra.mxu0 %v262
        %388 = vmatprep.subr.mxu0 0.0
        %389 = vmatpush1.msra.mxu0 %v263
        %390 = vmatprep.subr.mxu0 0.0
        %391 = vmatpush1.msra.mxu0 %v264
        %392 = vmatprep.subr.mxu0 0.0
        %393 = vmatpush1.msra.mxu0 %v265
        %394 = vmatprep.subr.mxu0 0.0
        %395 = vmatpush1.msra.mxu0 0.0
        %396 = vmatprep.subr.mxu0 0.0
        %397 = vmatpush1.msra.mxu0 0.0
        %398 = vmatprep.subr.mxu0 0.0
        %399 = vmatpush1.msra.mxu0 0.0
        %400 = vmatprep.subr.mxu0 0.0
        %401 = vmatpush1.msra.mxu0 0.0
        %402 = vmatprep.subr.mxu0 0.0
        %403 = vmatpush1.msra.mxu0 0.0
        %404 = vmatprep.subr.mxu0 0.0
        %405 = vmatpush1.msra.mxu0 0.0
        %406 = vmatprep.subr.mxu0 0.0
        %407 = vmatpush1.msra.mxu0 0.0
        %408 = vmatprep.subr.mxu0 0.0
        %409 = vmatpush1.msra.mxu0 0.0
        %410 = vmatprep.subr.mxu0 0.0
        %411 = vmatpush1.msra.mxu0 0.0
        %412 = vmatprep.subr.mxu0 0.0
        %413 = vmatpush1.msra.mxu0 0.0
        %414 = vmatprep.subr.mxu0 0.0
        %415 = vmatpush1.msra.mxu0 0.0
        %416 = vmatprep.subr.mxu0 0.0
        %417 = vmatpush1.msra.mxu0 0.0
        %418 = vmatprep.subr.mxu0 0.0
        %419 = vmatpush1.msra.mxu0 0.0
        %420 = vmatprep.subr.mxu0 0.0
        %421 = vmatpush1.msra.mxu0 0.0
        %422 = vmatprep.subr.mxu0 0.0
        %423 = vmatpush1.msra.mxu0 0.0
        %424 = vmatprep.subr.mxu0 0.0
        %425 = vmatpush1.msra.mxu0 0.0
        %426 = vmatprep.mubr.f32.mxu0 0.0
        %427 = vmatmul.mubr.f32.gmra.mrb[0].mxu0 %v279
        %v428 = vpop.f32.mrb[0].mxu0
        %v429 = vadd.f32 %v354, %v428
        %v430 = vpop.f32.mrb[0].mxu0
        %431 = vmatprep.mubr.f32.mxu0 0.0
        %432 = vmatmul.mubr.f32.gmra.mrb[0].mxu0 %v282
        %v433 = vpop.f32.mrb[0].mxu0
        %v434 = vadd.f32 %v359, %v433
        %v435 = vpop.f32.mrb[0].mxu0
        %436 = vdwg.mxu0
        %v437 = vmax.f32 %v429, 0.0
        %v438 = vmax.f32 %v434, 0.0
        %s439 = scalar_lea.vmem [#allocation4], 384
        %v440 = vld [vmem:[%s439] sm:$0xff]
        %v441 = vld [vmem:[%s439 + $0x8] sm:$0xff]
        %v442 = vld [vmem:[%s439 + $0x10] sm:$0xff]
        %v443 = vld [vmem:[%s439 + $0x18] sm:$0xff]
        %v444 = vld [vmem:[%s439 + $0x20] sm:$0xff]
        %v445 = vld [vmem:[%s439 + $0x28] sm:$0xff]
        %v446 = vld [vmem:[%s439 + $0x30] sm:$0xff]
        %v447 = vld [vmem:[%s439 + $0x38] sm:$0xff]
        %v448 = vld [vmem:[%s439 + $0x40] sm:$0xff]
        %v449 = vld [vmem:[%s439 + $0x48] sm:$0xff]
        %v450 = vld [vmem:[%s439 + $0x50] sm:$0xff]
        %v451 = vld [vmem:[%s439 + $0x58] sm:$0xff]
        %v452 = vld [vmem:[%s439 + $0x60] sm:$0xff]
        %v453 = vld [vmem:[%s439 + $0x68] sm:$0xff]
        %v454 = vld [vmem:[%s439 + $0x70] sm:$0xff]
        %v455 = vld [vmem:[%s439 + $0x78] sm:$0xff]
        %v456 = vld [vmem:[%s439 + $0x80] sm:$0xff]
        %v457 = vld [vmem:[%s439 + $0x88] sm:$0xff]
        %v458 = vld [vmem:[%s439 + $0x90] sm:$0xff]
        %v459 = vld [vmem:[%s439 + $0x98] sm:$0xff]
        %v460 = vld [vmem:[%s439 + $0xa0] sm:$0xff]
        %v461 = vld [vmem:[%s439 + $0xa8] sm:$0xff]
        %v462 = vld [vmem:[%s439 + $0xb0] sm:$0xff]
        %v463 = vld [vmem:[%s439 + $0xb8] sm:$0xff]
        %v464 = vld [vmem:[%s439 + $0xc0] sm:$0xff]
        %v465 = vld [vmem:[%s439 + $0xc8] sm:$0xff]
        %v466 = vld [vmem:[%s439 + $0xd0] sm:$0xff]
        %v467 = vld [vmem:[%s439 + $0xd8] sm:$0xff]
        %v468 = vld [vmem:[%s439 + $0xe0] sm:$0xff]
        %v469 = vld [vmem:[%s439 + $0xe8] sm:$0xff]
        %v470 = vld [vmem:[%s439 + $0xf0] sm:$0xff]
        %v471 = vld [vmem:[%s439 + $0xf8] sm:$0xff]
        %v472 = vld [vmem:[%s439 + $0x100] sm:$0xff]
        %v473 = vld [vmem:[%s439 + $0x108] sm:$0xff]
        %v474 = vld [vmem:[%s439 + $0x110] sm:$0xff]
        %v475 = vld [vmem:[%s439 + $0x118] sm:$0xff]
        %v476 = vld [vmem:[%s439 + $0x120] sm:$0xff]
        %v477 = vld [vmem:[%s439 + $0x128] sm:$0xff]
        %v478 = vld [vmem:[%s439 + $0x130] sm:$0xff]
        %v479 = vld [vmem:[%s439 + $0x138] sm:$0xff]
        %v480 = vld [vmem:[%s439 + $0x140] sm:$0xff]
        %v481 = vld [vmem:[%s439 + $0x148] sm:$0xff]
        %v482 = vld [vmem:[%s439 + $0x150] sm:$0xff]
        %v483 = vld [vmem:[%s439 + $0x158] sm:$0xff]
        %v484 = vld [vmem:[%s439 + $0x160] sm:$0xff]
        %v485 = vld [vmem:[%s439 + $0x168] sm:$0xff]
        %v486 = vld [vmem:[%s439 + $0x170] sm:$0xff]
        %v487 = vld [vmem:[%s439 + $0x178] sm:$0xff]
        %v488 = vld [vmem:[#allocation6 + $0x1] sm:$0x1]
        %v491 = vrot.slane %v437, 7
        %v492 = vrot.slane %v438, 7
        %v493 = vsel %vm269, %v491, %v492
        %v496 = vsel %vm269, 0.0, %v491
        %v497 = vrot.slane %v437, 1
        %v498 = vrot.slane %v438, 1
        %v499 = vsel %vm276, %v497, %v498
        %v502 = vsel %vm276, %v498, 0.0
        %v503 = vlaneseq
        %v504 = vshrl.u32 %v503, 7
        %v505 = vsub.s32 0, %v504
        %v506 = vrot.slane %v488, %v505
        %507 = vmatprep.subr.mxu0 0.0
        %508 = vmatpush1.msra.mxu0 %v440
        %509 = vmatprep.subr.mxu0 0.0
        %510 = vmatpush1.msra.mxu0 %v441
        %511 = vmatprep.subr.mxu0 0.0
        %512 = vmatpush1.msra.mxu0 %v442
        %513 = vmatprep.subr.mxu0 0.0
        %514 = vmatpush1.msra.mxu0 %v443
        %515 = vmatprep.subr.mxu0 0.0
        %516 = vmatpush1.msra.mxu0 %v444
        %517 = vmatprep.subr.mxu0 0.0
        %518 = vmatpush1.msra.mxu0 %v445
        %519 = vmatprep.subr.mxu0 0.0
        %520 = vmatpush1.msra.mxu0 %v446
        %521 = vmatprep.subr.mxu0 0.0
        %522 = vmatpush1.msra.mxu0 %v447
        %523 = vmatprep.subr.mxu0 0.0
        %524 = vmatpush1.msra.mxu0 %v448
        %525 = vmatprep.subr.mxu0 0.0
        %526 = vmatpush1.msra.mxu0 %v449
        %527 = vmatprep.subr.mxu0 0.0
        %528 = vmatpush1.msra.mxu0 %v450
        %529 = vmatprep.subr.mxu0 0.0
        %530 = vmatpush1.msra.mxu0 %v451
        %531 = vmatprep.subr.mxu0 0.0
        %532 = vmatpush1.msra.mxu0 %v452
        %533 = vmatprep.subr.mxu0 0.0
        %534 = vmatpush1.msra.mxu0 %v453
        %535 = vmatprep.subr.mxu0 0.0
        %536 = vmatpush1.msra.mxu0 %v454
        %537 = vmatprep.subr.mxu0 0.0
        %538 = vmatpush1.msra.mxu0 %v455
        %539 = vmatprep.subr.mxu0 0.0
        %540 = vmatpush1.msra.mxu0 %v456
        %541 = vmatprep.subr.mxu0 0.0
        %542 = vmatpush1.msra.mxu0 %v457
        %543 = vmatprep.subr.mxu0 0.0
        %544 = vmatpush1.msra.mxu0 %v458
        %545 = vmatprep.subr.mxu0 0.0
        %546 = vmatpush1.msra.mxu0 %v459
        %547 = vmatprep.subr.mxu0 0.0
        %548 = vmatpush1.msra.mxu0 %v460
        %549 = vmatprep.subr.mxu0 0.0
        %550 = vmatpush1.msra.mxu0 %v461
        %551 = vmatprep.subr.mxu0 0.0
        %552 = vmatpush1.msra.mxu0 %v462
        %553 = vmatprep.subr.mxu0 0.0
        %554 = vmatpush1.msra.mxu0 %v463
        %555 = vmatprep.subr.mxu0 0.0
        %556 = vmatpush1.msra.mxu0 %v464
        %557 = vmatprep.subr.mxu0 0.0
        %558 = vmatpush1.msra.mxu0 %v465
        %559 = vmatprep.subr.mxu0 0.0
        %560 = vmatpush1.msra.mxu0 %v466
        %561 = vmatprep.subr.mxu0 0.0
        %562 = vmatpush1.msra.mxu0 %v467
        %563 = vmatprep.subr.mxu0 0.0
        %564 = vmatpush1.msra.mxu0 %v468
        %565 = vmatprep.subr.mxu0 0.0
        %566 = vmatpush1.msra.mxu0 %v469
        %567 = vmatprep.subr.mxu0 0.0
        %568 = vmatpush1.msra.mxu0 %v470
        %569 = vmatprep.subr.mxu0 0.0
        %570 = vmatpush1.msra.mxu0 %v471
        %571 = vmatprep.mubr.f32.mxu0 %v437
        %572 = vmatmul.mubr.f32.gmra.mrb[0].mxu0 %v496
        %v573 = vpop.f32.mrb[0].mxu0
        %v574 = vadd.f32 %v506, %v573
        %v575 = vpop.f32.mrb[0].mxu0
        %576 = vmatprep.mubr.f32.mxu0 %v438
        %577 = vmatmul.mubr.f32.gmra.mrb[0].mxu0 %v493
        %v578 = vpop.f32.mrb[0].mxu0
        %v579 = vadd.f32 %v506, %v578
        %v580 = vpop.f32.mrb[0].mxu0
        %581 = vdwg.mxu0
        %582 = vmatprep.subr.mxu0 0.0
        %583 = vmatpush1.msra.mxu0 %v472
        %584 = vmatprep.subr.mxu0 0.0
        %585 = vmatpush1.msra.mxu0 %v473
        %586 = vmatprep.subr.mxu0 0.0
        %587 = vmatpush1.msra.mxu0 %v474
        %588 = vmatprep.subr.mxu0 0.0
        %589 = vmatpush1.msra.mxu0 %v475
        %590 = vmatprep.subr.mxu0 0.0
        %591 = vmatpush1.msra.mxu0 %v476
        %592 = vmatprep.subr.mxu0 0.0
        %593 = vmatpush1.msra.mxu0 %v477
        %594 = vmatprep.subr.mxu0 0.0
        %595 = vmatpush1.msra.mxu0 %v478
        %596 = vmatprep.subr.mxu0 0.0
        %597 = vmatpush1.msra.mxu0 %v479
        %598 = vmatprep.subr.mxu0 0.0
        %599 = vmatpush1.msra.mxu0 %v480
        %600 = vmatprep.subr.mxu0 0.0
        %601 = vmatpush1.msra.mxu0 %v481
        %602 = vmatprep.subr.mxu0 0.0
        %603 = vmatpush1.msra.mxu0 %v482
        %604 = vmatprep.subr.mxu0 0.0
        %605 = vmatpush1.msra.mxu0 %v483
        %606 = vmatprep.subr.mxu0 0.0
        %607 = vmatpush1.msra.mxu0 %v484
        %608 = vmatprep.subr.mxu0 0.0
        %609 = vmatpush1.msra.mxu0 %v485
        %610 = vmatprep.subr.mxu0 0.0
        %611 = vmatpush1.msra.mxu0 %v486
        %612 = vmatprep.subr.mxu0 0.0
        %613 = vmatpush1.msra.mxu0 %v487
        %614 = vmatprep.subr.mxu0 0.0
        %615 = vmatpush1.msra.mxu0 0.0
        %616 = vmatprep.subr.mxu0 0.0
        %617 = vmatpush1.msra.mxu0 0.0
        %618 = vmatprep.subr.mxu0 0.0
        %619 = vmatpush1.msra.mxu0 0.0
        %620 = vmatprep.subr.mxu0 0.0
        %621 = vmatpush1.msra.mxu0 0.0
        %622 = vmatprep.subr.mxu0 0.0
        %623 = vmatpush1.msra.mxu0 0.0
        %624 = vmatprep.subr.mxu0 0.0
        %625 = vmatpush1.msra.mxu0 0.0
        %626 = vmatprep.subr.mxu0 0.0
        %627 = vmatpush1.msra.mxu0 0.0
        %628 = vmatprep.subr.mxu0 0.0
        %629 = vmatpush1.msra.mxu0 0.0
        %630 = vmatprep.subr.mxu0 0.0
        %631 = vmatpush1.msra.mxu0 0.0
        %632 = vmatprep.subr.mxu0 0.0
        %633 = vmatpush1.msra.mxu0 0.0
        %634 = vmatprep.subr.mxu0 0.0
        %635 = vmatpush1.msra.mxu0 0.0
        %636 = vmatprep.subr.mxu0 0.0
        %637 = vmatpush1.msra.mxu0 0.0
        %638 = vmatprep.subr.mxu0 0.0
        %639 = vmatpush1.msra.mxu0 0.0
        %640 = vmatprep.subr.mxu0 0.0
        %641 = vmatpush1.msra.mxu0 0.0
        %642 = vmatprep.subr.mxu0 0.0
        %643 = vmatpush1.msra.mxu0 0.0
        %644 = vmatprep.subr.mxu0 0.0
        %645 = vmatpush1.msra.mxu0 0.0
        %646 = vmatprep.mubr.f32.mxu0 0.0
        %647 = vmatmul.mubr.f32.gmra.mrb[0].mxu0 %v499
        %v648 = vpop.f32.mrb[0].mxu0
        %v649 = vadd.f32 %v574, %v648
        %v650 = vpop.f32.mrb[0].mxu0
        %651 = vmatprep.mubr.f32.mxu0 0.0
        %652 = vmatmul.mubr.f32.gmra.mrb[0].mxu0 %v502
        %v653 = vpop.f32.mrb[0].mxu0
        %v654 = vadd.f32 %v579, %v653
        %v655 = vpop.f32.mrb[0].mxu0
        %656 = vdwg.mxu0
        %v657 = vmax.f32 %v649, 0.0
        %v658 = vmax.f32 %v654, 0.0
        %v659 = vlaneseq
        %v660 = vshrl.u32 %v659, 7
        %v661 = vadd.s32 %v660, 8
        %v662 = vadd.s32 %v660, 16
        %v663 = vadd.s32 %v660, 24
        %v664 = vadd.s32 %v660, 32
        %v665 = vadd.s32 %v660, 40
        %v666 = vadd.s32 %v660, 48
        %v667 = vadd.s32 %v660, 56
        %v668 = vadd.s32 %v660, 64
        %v669 = vadd.s32 %v660, 72
        %v670 = vadd.s32 %v660, 80
        %v671 = vadd.s32 %v660, 88
        %v672 = vadd.s32 %v660, 96
        %v673 = vadd.s32 %v660, 104
        %v674 = vadd.s32 %v660, 112
        %v675 = vadd.s32 %v660, 120
        %v676 = vlaneseq
        %v677 = vand.u32 %v676, 127
        %v678 = vand.u32 %v660, 7
        %v679 = vand.u32 %v661, 7
        %v680 = vand.u32 %v662, 7
        %v681 = vand.u32 %v663, 7
        %v682 = vand.u32 %v664, 7
        %v683 = vand.u32 %v665, 7
        %v684 = vand.u32 %v666, 7
        %v685 = vand.u32 %v667, 7
        %v686 = vand.u32 %v668, 7
        %v687 = vand.u32 %v669, 7
        %v688 = vand.u32 %v670, 7
        %v689 = vand.u32 %v671, 7
        %v690 = vand.u32 %v672, 7
        %v691 = vand.u32 %v673, 7
        %v692 = vand.u32 %v674, 7
        %v693 = vand.u32 %v675, 7
        %vm694 = vcmp.eq.s32.totalorder %v677, %v678
        %vm695 = vcmp.eq.s32.totalorder %v677, %v679
        %vm696 = vcmp.eq.s32.totalorder %v677, %v680
        %vm697 = vcmp.eq.s32.totalorder %v677, %v681
        %vm698 = vcmp.eq.s32.totalorder %v677, %v682
        %vm699 = vcmp.eq.s32.totalorder %v677, %v683
        %vm700 = vcmp.eq.s32.totalorder %v677, %v684
        %vm701 = vcmp.eq.s32.totalorder %v677, %v685
        %vm702 = vcmp.eq.s32.totalorder %v677, %v686
        %vm703 = vcmp.eq.s32.totalorder %v677, %v687
        %vm704 = vcmp.eq.s32.totalorder %v677, %v688
        %vm705 = vcmp.eq.s32.totalorder %v677, %v689
        %vm706 = vcmp.eq.s32.totalorder %v677, %v690
        %vm707 = vcmp.eq.s32.totalorder %v677, %v691
        %vm708 = vcmp.eq.s32.totalorder %v677, %v692
        %vm709 = vcmp.eq.s32.totalorder %v677, %v693
        %v710 = vsel %vm694, 1, 0
        %v711 = vsel %vm695, 1, 0
        %v712 = vsel %vm696, 1, 0
        %v713 = vsel %vm697, 1, 0
        %v714 = vsel %vm698, 1, 0
        %v715 = vsel %vm699, 1, 0
        %v716 = vsel %vm700, 1, 0
        %v717 = vsel %vm701, 1, 0
        %v718 = vsel %vm702, 1, 0
        %v719 = vsel %vm703, 1, 0
        %v720 = vsel %vm704, 1, 0
        %v721 = vsel %vm705, 1, 0
        %v722 = vsel %vm706, 1, 0
        %v723 = vsel %vm707, 1, 0
        %v724 = vsel %vm708, 1, 0
        %v725 = vsel %vm709, 1, 0
        %v726 = vcvt.s32.f32 %v710
        %v727 = vcvt.s32.f32 %v711
        %v728 = vcvt.s32.f32 %v712
        %v729 = vcvt.s32.f32 %v713
        %v730 = vcvt.s32.f32 %v714
        %v731 = vcvt.s32.f32 %v715
        %v732 = vcvt.s32.f32 %v716
        %v733 = vcvt.s32.f32 %v717
        %v734 = vcvt.s32.f32 %v718
        %v735 = vcvt.s32.f32 %v719
        %v736 = vcvt.s32.f32 %v720
        %v737 = vcvt.s32.f32 %v721
        %v738 = vcvt.s32.f32 %v722
        %v739 = vcvt.s32.f32 %v723
        %v740 = vcvt.s32.f32 %v724
        %v741 = vcvt.s32.f32 %v725
        %v742 = vand.u32 %v677, 7
        %vm743 = vcmp.eq.s32.totalorder %v660, %v742
        %vm744 = vcmp.eq.s32.totalorder %v661, %v742
        %vm745 = vcmp.eq.s32.totalorder %v662, %v742
        %vm746 = vcmp.eq.s32.totalorder %v663, %v742
        %vm747 = vcmp.eq.s32.totalorder %v664, %v742
        %vm748 = vcmp.eq.s32.totalorder %v665, %v742
        %vm749 = vcmp.eq.s32.totalorder %v666, %v742
        %vm750 = vcmp.eq.s32.totalorder %v667, %v742
        %vm751 = vcmp.eq.s32.totalorder %v668, %v742
        %vm752 = vcmp.eq.s32.totalorder %v669, %v742
        %vm753 = vcmp.eq.s32.totalorder %v670, %v742
        %vm754 = vcmp.eq.s32.totalorder %v671, %v742
        %vm755 = vcmp.eq.s32.totalorder %v672, %v742
        %vm756 = vcmp.eq.s32.totalorder %v673, %v742
        %vm757 = vcmp.eq.s32.totalorder %v674, %v742
        %vm758 = vcmp.eq.s32.totalorder %v675, %v742
        %v759 = vsel %vm743, 1, 0
        %v760 = vsel %vm744, 1, 0
        %v761 = vsel %vm745, 1, 0
        %v762 = vsel %vm746, 1, 0
        %v763 = vsel %vm747, 1, 0
        %v764 = vsel %vm748, 1, 0
        %v765 = vsel %vm749, 1, 0
        %v766 = vsel %vm750, 1, 0
        %v767 = vsel %vm751, 1, 0
        %v768 = vsel %vm752, 1, 0
        %v769 = vsel %vm753, 1, 0
        %v770 = vsel %vm754, 1, 0
        %v771 = vsel %vm755, 1, 0
        %v772 = vsel %vm756, 1, 0
        %v773 = vsel %vm757, 1, 0
        %v774 = vsel %vm758, 1, 0
        %v775 = vcvt.s32.f32 %v759
        %v776 = vcvt.s32.f32 %v760
        %v777 = vcvt.s32.f32 %v761
        %v778 = vcvt.s32.f32 %v762
        %v779 = vcvt.s32.f32 %v763
        %v780 = vcvt.s32.f32 %v764
        %v781 = vcvt.s32.f32 %v765
        %v782 = vcvt.s32.f32 %v766
        %v783 = vcvt.s32.f32 %v767
        %v784 = vcvt.s32.f32 %v768
        %v785 = vcvt.s32.f32 %v769
        %v786 = vcvt.s32.f32 %v770
        %v787 = vcvt.s32.f32 %v771
        %v788 = vcvt.s32.f32 %v772
        %v789 = vcvt.s32.f32 %v773
        %v790 = vcvt.s32.f32 %v774
        %v791 = vadd.f32 %v657, %v658
        %v792 = vrot.slane %v791, 4
        %v793 = vadd.f32 %v791, %v792
        %v794 = vrot.slane %v793, 2
        %v795 = vadd.f32 %v793, %v794
        %v796 = vrot.slane %v795, 1
        %v797 = vadd.f32 %v795, %v796
        %798 = vmatprep.subr.mxu0 0.0
        %799 = vmatpush1.msra.mxu0 %v726
        %800 = vmatprep.subr.mxu0 0.0
        %801 = vmatpush1.msra.mxu0 %v727
        %802 = vmatprep.subr.mxu0 0.0
        %803 = vmatpush1.msra.mxu0 %v728
        %804 = vmatprep.subr.mxu0 0.0
        %805 = vmatpush1.msra.mxu0 %v729
        %806 = vmatprep.subr.mxu0 0.0
        %807 = vmatpush1.msra.mxu0 %v730
        %808 = vmatprep.subr.mxu0 0.0
        %809 = vmatpush1.msra.mxu0 %v731
        %810 = vmatprep.subr.mxu0 0.0
        %811 = vmatpush1.msra.mxu0 %v732
        %812 = vmatprep.subr.mxu0 0.0
        %813 = vmatpush1.msra.mxu0 %v733
        %814 = vmatprep.subr.mxu0 0.0
        %815 = vmatpush1.msra.mxu0 %v734
        %816 = vmatprep.subr.mxu0 0.0
        %817 = vmatpush1.msra.mxu0 %v735
        %818 = vmatprep.subr.mxu0 0.0
        %819 = vmatpush1.msra.mxu0 %v736
        %820 = vmatprep.subr.mxu0 0.0
        %821 = vmatpush1.msra.mxu0 %v737
        %822 = vmatprep.subr.mxu0 0.0
        %823 = vmatpush1.msra.mxu0 %v738
        %824 = vmatprep.subr.mxu0 0.0
        %825 = vmatpush1.msra.mxu0 %v739
        %826 = vmatprep.subr.mxu0 0.0
        %827 = vmatpush1.msra.mxu0 %v740
        %828 = vmatprep.subr.mxu0 0.0
        %829 = vmatpush1.msra.mxu0 %v741
        %830 = vmatprep.subr.mxu0 0.0
        %831 = vmatpush1.msra.mxu0 0.0
        %832 = vmatprep.subr.mxu0 0.0
        %833 = vmatpush1.msra.mxu0 0.0
        %834 = vmatprep.subr.mxu0 0.0
        %835 = vmatpush1.msra.mxu0 0.0
        %836 = vmatprep.subr.mxu0 0.0
        %837 = vmatpush1.msra.mxu0 0.0
        %838 = vmatprep.subr.mxu0 0.0
        %839 = vmatpush1.msra.mxu0 0.0
        %840 = vmatprep.subr.mxu0 0.0
        %841 = vmatpush1.msra.mxu0 0.0
        %842 = vmatprep.subr.mxu0 0.0
        %843 = vmatpush1.msra.mxu0 0.0
        %844 = vmatprep.subr.mxu0 0.0
        %845 = vmatpush1.msra.mxu0 0.0
        %846 = vmatprep.subr.mxu0 0.0
        %847 = vmatpush1.msra.mxu0 0.0
        %848 = vmatprep.subr.mxu0 0.0
        %849 = vmatpush1.msra.mxu0 0.0
        %850 = vmatprep.subr.mxu0 0.0
        %851 = vmatpush1.msra.mxu0 0.0
        %852 = vmatprep.subr.mxu0 0.0
        %853 = vmatpush1.msra.mxu0 0.0
        %854 = vmatprep.subr.mxu0 0.0
        %855 = vmatpush1.msra.mxu0 0.0
        %856 = vmatprep.subr.mxu0 0.0
        %857 = vmatpush1.msra.mxu0 0.0
        %858 = vmatprep.subr.mxu0 0.0
        %859 = vmatpush1.msra.mxu0 0.0
        %860 = vmatprep.subr.mxu0 0.0
        %861 = vmatpush1.msra.mxu0 0.0
        %862 = vmatprep.mubr.f32.mxu0 0.0
        %863 = vmatmul.mubr.f32.gmra.mrb[0].mxu0 %v797
        %v864 = vpop.f32.mrb[0].mxu0
        %v865 = vadd.f32 0.0, %v864
        %v866 = vpop.f32.mrb[0].mxu0
        %867 = vdwg.mxu0
        %v868 = vmul.f32 %v865, 0.00390625
        %869 = vmatprep.subr.mxu0 0.0
        %870 = vmatpush1.msra.mxu0 %v775
        %871 = vmatprep.subr.mxu0 0.0
        %872 = vmatpush1.msra.mxu0 %v776
        %873 = vmatprep.subr.mxu0 0.0
        %874 = vmatpush1.msra.mxu0 %v777
        %875 = vmatprep.subr.mxu0 0.0
        %876 = vmatpush1.msra.mxu0 %v778
        %877 = vmatprep.subr.mxu0 0.0
        %878 = vmatpush1.msra.mxu0 %v779
        %879 = vmatprep.subr.mxu0 0.0
        %880 = vmatpush1.msra.mxu0 %v780
        %881 = vmatprep.subr.mxu0 0.0
        %882 = vmatpush1.msra.mxu0 %v781
        %883 = vmatprep.subr.mxu0 0.0
        %884 = vmatpush1.msra.mxu0 %v782
        %885 = vmatprep.subr.mxu0 0.0
        %886 = vmatpush1.msra.mxu0 %v783
        %887 = vmatprep.subr.mxu0 0.0
        %888 = vmatpush1.msra.mxu0 %v784
        %889 = vmatprep.subr.mxu0 0.0
        %890 = vmatpush1.msra.mxu0 %v785
        %891 = vmatprep.subr.mxu0 0.0
        %892 = vmatpush1.msra.mxu0 %v786
        %893 = vmatprep.subr.mxu0 0.0
        %894 = vmatpush1.msra.mxu0 %v787
        %895 = vmatprep.subr.mxu0 0.0
        %896 = vmatpush1.msra.mxu0 %v788
        %897 = vmatprep.subr.mxu0 0.0
        %898 = vmatpush1.msra.mxu0 %v789
        %899 = vmatprep.subr.mxu0 0.0
        %900 = vmatpush1.msra.mxu0 %v790
        %901 = vmatprep.subr.mxu0 0.0
        %902 = vmatpush1.msra.mxu0 0.0
        %903 = vmatprep.subr.mxu0 0.0
        %904 = vmatpush1.msra.mxu0 0.0
        %905 = vmatprep.subr.mxu0 0.0
        %906 = vmatpush1.msra.mxu0 0.0
        %907 = vmatprep.subr.mxu0 0.0
        %908 = vmatpush1.msra.mxu0 0.0
        %909 = vmatprep.subr.mxu0 0.0
        %910 = vmatpush1.msra.mxu0 0.0
        %911 = vmatprep.subr.mxu0 0.0
        %912 = vmatpush1.msra.mxu0 0.0
        %913 = vmatprep.subr.mxu0 0.0
        %914 = vmatpush1.msra.mxu0 0.0
        %915 = vmatprep.subr.mxu0 0.0
        %916 = vmatpush1.msra.mxu0 0.0
        %917 = vmatprep.subr.mxu0 0.0
        %918 = vmatpush1.msra.mxu0 0.0
        %919 = vmatprep.subr.mxu0 0.0
        %920 = vmatpush1.msra.mxu0 0.0
        %921 = vmatprep.subr.mxu0 0.0
        %922 = vmatpush1.msra.mxu0 0.0
        %923 = vmatprep.subr.mxu0 0.0
        %924 = vmatpush1.msra.mxu0 0.0
        %925 = vmatprep.subr.mxu0 0.0
        %926 = vmatpush1.msra.mxu0 0.0
        %927 = vmatprep.subr.mxu0 0.0
        %928 = vmatpush1.msra.mxu0 0.0
        %929 = vmatprep.subr.mxu0 0.0
        %930 = vmatpush1.msra.mxu0 0.0
        %931 = vmatprep.subr.mxu0 0.0
        %932 = vmatpush1.msra.mxu0 0.0
        %933 = vmatprep.mubr.f32.mxu0 0.0
        %934 = vmatmul.mubr.f32.gmra.mrb[0].mxu0 %v868
        %v935 = vpop.f32.mrb[0].mxu0
        %v936 = vadd.f32 0.0, %v935
        %v937 = vpop.f32.mrb[0].mxu0
        %938 = vdwg.mxu0
        %v939 = vlaneseq
        %v940 = vshrl.u32 %v939, 7
        %v941 = vsub.s32 0, %v940
        %v942 = vrot.slane %v936, %v941
        %v943 = vsub.f32 %v657, %v942
        %v944 = vsub.f32 %v658, %v942
        %v945 = vmul.f32 %v943, %v943
        %v946 = vmul.f32 %v944, %v944
        %v947 = vadd.f32 %v945, %v946
        %v948 = vrot.slane %v947, 4
        %v949 = vadd.f32 %v947, %v948
        %v950 = vrot.slane %v949, 2
        %v951 = vadd.f32 %v949, %v950
        %v952 = vrot.slane %v951, 1
        %v953 = vadd.f32 %v951, %v952
        %954 = vmatprep.subr.mxu0 0.0
        %955 = vmatpush1.msra.mxu0 %v726
        %956 = vmatprep.subr.mxu0 0.0
        %957 = vmatpush1.msra.mxu0 %v727
        %958 = vmatprep.subr.mxu0 0.0
        %959 = vmatpush1.msra.mxu0 %v728
        %960 = vmatprep.subr.mxu0 0.0
        %961 = vmatpush1.msra.mxu0 %v729
        %962 = vmatprep.subr.mxu0 0.0
        %963 = vmatpush1.msra.mxu0 %v730
        %964 = vmatprep.subr.mxu0 0.0
        %965 = vmatpush1.msra.mxu0 %v731
        %966 = vmatprep.subr.mxu0 0.0
        %967 = vmatpush1.msra.mxu0 %v732
        %968 = vmatprep.subr.mxu0 0.0
        %969 = vmatpush1.msra.mxu0 %v733
        %970 = vmatprep.subr.mxu0 0.0
        %971 = vmatpush1.msra.mxu0 %v734
        %972 = vmatprep.subr.mxu0 0.0
        %973 = vmatpush1.msra.mxu0 %v735
        %974 = vmatprep.subr.mxu0 0.0
        %975 = vmatpush1.msra.mxu0 %v736
        %976 = vmatprep.subr.mxu0 0.0
        %977 = vmatpush1.msra.mxu0 %v737
        %978 = vmatprep.subr.mxu0 0.0
        %979 = vmatpush1.msra.mxu0 %v738
        %980 = vmatprep.subr.mxu0 0.0
        %981 = vmatpush1.msra.mxu0 %v739
        %982 = vmatprep.subr.mxu0 0.0
        %983 = vmatpush1.msra.mxu0 %v740
        %984 = vmatprep.subr.mxu0 0.0
        %985 = vmatpush1.msra.mxu0 %v741
        %986 = vmatprep.subr.mxu0 0.0
        %987 = vmatpush1.msra.mxu0 0.0
        %988 = vmatprep.subr.mxu0 0.0
        %989 = vmatpush1.msra.mxu0 0.0
        %990 = vmatprep.subr.mxu0 0.0
        %991 = vmatpush1.msra.mxu0 0.0
        %992 = vmatprep.subr.mxu0 0.0
        %993 = vmatpush1.msra.mxu0 0.0
        %994 = vmatprep.subr.mxu0 0.0
        %995 = vmatpush1.msra.mxu0 0.0
        %996 = vmatprep.subr.mxu0 0.0
        %997 = vmatpush1.msra.mxu0 0.0
        %998 = vmatprep.subr.mxu0 0.0
        %999 = vmatpush1.msra.mxu0 0.0
        %1000 = vmatprep.subr.mxu0 0.0
        %1001 = vmatpush1.msra.mxu0 0.0
        %1002 = vmatprep.subr.mxu0 0.0
        %1003 = vmatpush1.msra.mxu0 0.0
        %1004 = vmatprep.subr.mxu0 0.0
        %1005 = vmatpush1.msra.mxu0 0.0
        %1006 = vmatprep.subr.mxu0 0.0
        %1007 = vmatpush1.msra.mxu0 0.0
        %1008 = vmatprep.subr.mxu0 0.0
        %1009 = vmatpush1.msra.mxu0 0.0
        %1010 = vmatprep.subr.mxu0 0.0
        %1011 = vmatpush1.msra.mxu0 0.0
        %1012 = vmatprep.subr.mxu0 0.0
        %1013 = vmatpush1.msra.mxu0 0.0
        %1014 = vmatprep.subr.mxu0 0.0
        %1015 = vmatpush1.msra.mxu0 0.0
        %1016 = vmatprep.subr.mxu0 0.0
        %1017 = vmatpush1.msra.mxu0 0.0
        %1018 = vmatprep.mubr.f32.mxu0 0.0
        %1019 = vmatmul.mubr.f32.gmra.mrb[0].mxu0 %v953
        %v1020 = vpop.f32.mrb[0].mxu0
        %v1021 = vadd.f32 0.0, %v1020
        %v1022 = vpop.f32.mrb[0].mxu0
        %1023 = vdwg.mxu0
        %v1024 = vmul.f32 %v1021, 0.003921569
        %v1025 = vrsqrt.pop %v1024
        %v1026 = vmul.f32 %v1024, %v1025
        %vm1027 = vcmp.eq.f32.partialorder %v1024, inf
        %v1028 = vsel %vm1027, %v1024, %v1026
        %vm1029 = vcmp.eq.f32.partialorder %v1024, 0.0
        %v1030 = vand.u32 %v1024, 2147483648
        %v1031 = vsel %vm1029, %v1030, %v1028
        %v1032 = vmul.u32 %v660, 2
        %vm1033 = vcmp.eq.s32.totalorder %v677, %v1032
        %v1034 = vsel %vm1033, 1, 0
        %v1035 = vcvt.s32.f32 %v1034
        %v1036 = vadd.s32 %v1032, 1
        %vm1037 = vcmp.eq.s32.totalorder %v677, %v1036
        %v1038 = vsel %vm1037, 1, 0
        %v1039 = vcvt.s32.f32 %v1038
        %vm1040 = vcmask 130048
        %v1042 = vsel %vm1040, %v1035, 0
        %1044 = vmatprep.subr.mxu0 0.0
        %1045 = vmatpush1.msra.mxu0 %v657
        %1046 = vmatprep.subr.mxu0 0.0
        %1047 = vmatpush1.msra.mxu0 %v658
        %1048 = vmatprep.subr.mxu0 0.0
        %1049 = vmatpush1.msra.mxu0 0.0
        %1050 = vmatprep.subr.mxu0 0.0
        %1051 = vmatpush1.msra.mxu0 0.0
        %1052 = vmatprep.subr.mxu0 0.0
        %1053 = vmatpush1.msra.mxu0 0.0
        %1054 = vmatprep.subr.mxu0 0.0
        %1055 = vmatpush1.msra.mxu0 0.0
        %1056 = vmatprep.subr.mxu0 0.0
        %1057 = vmatpush1.msra.mxu0 0.0
        %1058 = vmatprep.subr.mxu0 0.0
        %1059 = vmatpush1.msra.mxu0 0.0
        %1060 = vmatprep.subr.mxu0 0.0
        %1061 = vmatpush1.msra.mxu0 0.0
        %1062 = vmatprep.subr.mxu0 0.0
        %1063 = vmatpush1.msra.mxu0 0.0
        %1064 = vmatprep.subr.mxu0 0.0
        %1065 = vmatpush1.msra.mxu0 0.0
        %1066 = vmatprep.subr.mxu0 0.0
        %1067 = vmatpush1.msra.mxu0 0.0
        %1068 = vmatprep.subr.mxu0 0.0
        %1069 = vmatpush1.msra.mxu0 0.0
        %1070 = vmatprep.subr.mxu0 0.0
        %1071 = vmatpush1.msra.mxu0 0.0
        %1072 = vmatprep.subr.mxu0 0.0
        %1073 = vmatpush1.msra.mxu0 0.0
        %1074 = vmatprep.subr.mxu0 0.0
        %1075 = vmatpush1.msra.mxu0 0.0
        %1076 = vmatprep.subr.mxu0 0.0
        %1077 = vmatpush1.msra.mxu0 0.0
        %1078 = vmatprep.subr.mxu0 0.0
        %1079 = vmatpush1.msra.mxu0 0.0
        %1080 = vmatprep.subr.mxu0 0.0
        %1081 = vmatpush1.msra.mxu0 0.0
        %1082 = vmatprep.subr.mxu0 0.0
        %1083 = vmatpush1.msra.mxu0 0.0
        %1084 = vmatprep.subr.mxu0 0.0
        %1085 = vmatpush1.msra.mxu0 0.0
        %1086 = vmatprep.subr.mxu0 0.0
        %1087 = vmatpush1.msra.mxu0 0.0
        %1088 = vmatprep.subr.mxu0 0.0
        %1089 = vmatpush1.msra.mxu0 0.0
        %1090 = vmatprep.subr.mxu0 0.0
        %1091 = vmatpush1.msra.mxu0 0.0
        %1092 = vmatprep.subr.mxu0 0.0
        %1093 = vmatpush1.msra.mxu0 0.0
        %1094 = vmatprep.subr.mxu0 0.0
        %1095 = vmatpush1.msra.mxu0 0.0
        %1096 = vmatprep.subr.mxu0 0.0
        %1097 = vmatpush1.msra.mxu0 0.0
        %1098 = vmatprep.subr.mxu0 0.0
        %1099 = vmatpush1.msra.mxu0 0.0
        %1100 = vmatprep.subr.mxu0 0.0
        %1101 = vmatpush1.msra.mxu0 0.0
        %1102 = vmatprep.subr.mxu0 0.0
        %1103 = vmatpush1.msra.mxu0 0.0
        %1104 = vmatprep.subr.mxu0 0.0
        %1105 = vmatpush1.msra.mxu0 0.0
        %1106 = vmatprep.subr.mxu0 0.0
        %1107 = vmatpush1.msra.mxu0 0.0
        %1108 = vmatprep.mubr.f32.mxu0 0.0
        %1109 = vmatmul.mubr.f32.gmra.mrb[0].mxu0 %v1042
        %v1110 = vpop.f32.mrb[0].mxu0
        %v1111 = vadd.f32 0.0, %v1110
        %v1112 = vpop.f32.mrb[0].mxu0
        %1113 = vdwg.mxu0
        %v1115 = vsel %vm1040, %v1039, 0
        %1117 = vmatprep.subr.mxu0 0.0
        %1118 = vmatpush1.msra.mxu0 %v657
        %1119 = vmatprep.subr.mxu0 0.0
        %1120 = vmatpush1.msra.mxu0 %v658
        %1121 = vmatprep.subr.mxu0 0.0
        %1122 = vmatpush1.msra.mxu0 0.0
        %1123 = vmatprep.subr.mxu0 0.0
        %1124 = vmatpush1.msra.mxu0 0.0
        %1125 = vmatprep.subr.mxu0 0.0
        %1126 = vmatpush1.msra.mxu0 0.0
        %1127 = vmatprep.subr.mxu0 0.0
        %1128 = vmatpush1.msra.mxu0 0.0
        %1129 = vmatprep.subr.mxu0 0.0
        %1130 = vmatpush1.msra.mxu0 0.0
        %1131 = vmatprep.subr.mxu0 0.0
        %1132 = vmatpush1.msra.mxu0 0.0
        %1133 = vmatprep.subr.mxu0 0.0
        %1134 = vmatpush1.msra.mxu0 0.0
        %1135 = vmatprep.subr.mxu0 0.0
        %1136 = vmatpush1.msra.mxu0 0.0
        %1137 = vmatprep.subr.mxu0 0.0
        %1138 = vmatpush1.msra.mxu0 0.0
        %1139 = vmatprep.subr.mxu0 0.0
        %1140 = vmatpush1.msra.mxu0 0.0
        %1141 = vmatprep.subr.mxu0 0.0
        %1142 = vmatpush1.msra.mxu0 0.0
        %1143 = vmatprep.subr.mxu0 0.0
        %1144 = vmatpush1.msra.mxu0 0.0
        %1145 = vmatprep.subr.mxu0 0.0
        %1146 = vmatpush1.msra.mxu0 0.0
        %1147 = vmatprep.subr.mxu0 0.0
        %1148 = vmatpush1.msra.mxu0 0.0
        %1149 = vmatprep.subr.mxu0 0.0
        %1150 = vmatpush1.msra.mxu0 0.0
        %1151 = vmatprep.subr.mxu0 0.0
        %1152 = vmatpush1.msra.mxu0 0.0
        %1153 = vmatprep.subr.mxu0 0.0
        %1154 = vmatpush1.msra.mxu0 0.0
        %1155 = vmatprep.subr.mxu0 0.0
        %1156 = vmatpush1.msra.mxu0 0.0
        %1157 = vmatprep.subr.mxu0 0.0
        %1158 = vmatpush1.msra.mxu0 0.0
        %1159 = vmatprep.subr.mxu0 0.0
        %1160 = vmatpush1.msra.mxu0 0.0
        %1161 = vmatprep.subr.mxu0 0.0
        %1162 = vmatpush1.msra.mxu0 0.0
        %1163 = vmatprep.subr.mxu0 0.0
        %1164 = vmatpush1.msra.mxu0 0.0
        %1165 = vmatprep.subr.mxu0 0.0
        %1166 = vmatpush1.msra.mxu0 0.0
        %1167 = vmatprep.subr.mxu0 0.0
        %1168 = vmatpush1.msra.mxu0 0.0
        %1169 = vmatprep.subr.mxu0 0.0
        %1170 = vmatpush1.msra.mxu0 0.0
        %1171 = vmatprep.subr.mxu0 0.0
        %1172 = vmatpush1.msra.mxu0 0.0
        %1173 = vmatprep.subr.mxu0 0.0
        %1174 = vmatpush1.msra.mxu0 0.0
        %1175 = vmatprep.subr.mxu0 0.0
        %1176 = vmatpush1.msra.mxu0 0.0
        %1177 = vmatprep.subr.mxu0 0.0
        %1178 = vmatpush1.msra.mxu0 0.0
        %1179 = vmatprep.subr.mxu0 0.0
        %1180 = vmatpush1.msra.mxu0 0.0
        %1181 = vmatprep.mubr.f32.mxu0 0.0
        %1182 = vmatmul.mubr.f32.gmra.mrb[0].mxu0 %v1115
        %v1183 = vpop.f32.mrb[0].mxu0
        %v1184 = vadd.f32 0.0, %v1183
        %v1185 = vpop.f32.mrb[0].mxu0
        %1186 = vdwg.mxu0
        %v1187 = vmax.f32 %v1111, %v1184
        %vm1188 = vcmp.lt.s32.totalorder %v677, 64
        %v1189 = vmul.u32 %v677, 2
        %v1190 = vsub.s32 %v1189, %v742
        %vm1191 = vcmp.eq.s32.totalorder %v660, %v1190
        %vm1192 = vcmp.eq.s32.totalorder %v661, %v1190
        %vm1193 = vcmp.eq.s32.totalorder %v662, %v1190
        %vm1194 = vcmp.eq.s32.totalorder %v663, %v1190
        %vm1195 = vcmp.eq.s32.totalorder %v664, %v1190
        %vm1196 = vcmp.eq.s32.totalorder %v665, %v1190
        %vm1197 = vcmp.eq.s32.totalorder %v666, %v1190
        %vm1198 = vcmp.eq.s32.totalorder %v667, %v1190
        %vm1199 = vcmp.eq.s32.totalorder %v668, %v1190
        %vm1200 = vcmp.eq.s32.totalorder %v669, %v1190
        %vm1201 = vcmp.eq.s32.totalorder %v670, %v1190
        %vm1202 = vcmp.eq.s32.totalorder %v671, %v1190
        %vm1203 = vcmp.eq.s32.totalorder %v672, %v1190
        %vm1204 = vcmp.eq.s32.totalorder %v673, %v1190
        %vm1205 = vcmp.eq.s32.totalorder %v674, %v1190
        %vm1206 = vcmp.eq.s32.totalorder %v675, %v1190
        %vm1207 = vmand %vm1191, %vm1188
        %vm1208 = vmand %vm1192, %vm1188
        %vm1209 = vmand %vm1193, %vm1188
        %vm1210 = vmand %vm1194, %vm1188
        %vm1211 = vmand %vm1195, %vm1188
        %vm1212 = vmand %vm1196, %vm1188
        %vm1213 = vmand %vm1197, %vm1188
        %vm1214 = vmand %vm1198, %vm1188
        %vm1215 = vmand %vm1199, %vm1188
        %vm1216 = vmand %vm1200, %vm1188
        %vm1217 = vmand %vm1201, %vm1188
        %vm1218 = vmand %vm1202, %vm1188
        %vm1219 = vmand %vm1203, %vm1188
        %vm1220 = vmand %vm1204, %vm1188
        %vm1221 = vmand %vm1205, %vm1188
        %vm1222 = vmand %vm1206, %vm1188
        %v1223 = vsel %vm1207, 1, 0
        %v1224 = vsel %vm1208, 1, 0
        %v1225 = vsel %vm1209, 1, 0
        %v1226 = vsel %vm1210, 1, 0
        %v1227 = vsel %vm1211, 1, 0
        %v1228 = vsel %vm1212, 1, 0
        %v1229 = vsel %vm1213, 1, 0
        %v1230 = vsel %vm1214, 1, 0
        %v1231 = vsel %vm1215, 1, 0
        %v1232 = vsel %vm1216, 1, 0
        %v1233 = vsel %vm1217, 1, 0
        %v1234 = vsel %vm1218, 1, 0
        %v1235 = vsel %vm1219, 1, 0
        %v1236 = vsel %vm1220, 1, 0
        %v1237 = vsel %vm1221, 1, 0
        %v1238 = vsel %vm1222, 1, 0
        %v1239 = vcvt.s32.f32 %v1223
        %v1240 = vcvt.s32.f32 %v1224
        %v1241 = vcvt.s32.f32 %v1225
        %v1242 = vcvt.s32.f32 %v1226
        %v1243 = vcvt.s32.f32 %v1227
        %v1244 = vcvt.s32.f32 %v1228
        %v1245 = vcvt.s32.f32 %v1229
        %v1246 = vcvt.s32.f32 %v1230
        %v1247 = vcvt.s32.f32 %v1231
        %v1248 = vcvt.s32.f32 %v1232
        %v1249 = vcvt.s32.f32 %v1233
        %v1250 = vcvt.s32.f32 %v1234
        %v1251 = vcvt.s32.f32 %v1235
        %v1252 = vcvt.s32.f32 %v1236
        %v1253 = vcvt.s32.f32 %v1237
        %v1254 = vcvt.s32.f32 %v1238
        %v1255 = vadd.s32 %v1190, 8
        %vm1256 = vcmp.eq.s32.totalorder %v660, %v1255
        %vm1257 = vcmp.eq.s32.totalorder %v661, %v1255
        %vm1258 = vcmp.eq.s32.totalorder %v662, %v1255
        %vm1259 = vcmp.eq.s32.totalorder %v663, %v1255
        %vm1260 = vcmp.eq.s32.totalorder %v664, %v1255
        %vm1261 = vcmp.eq.s32.totalorder %v665, %v1255
        %vm1262 = vcmp.eq.s32.totalorder %v666, %v1255
        %vm1263 = vcmp.eq.s32.totalorder %v667, %v1255
        %vm1264 = vcmp.eq.s32.totalorder %v668, %v1255
        %vm1265 = vcmp.eq.s32.totalorder %v669, %v1255
        %vm1266 = vcmp.eq.s32.totalorder %v670, %v1255
        %vm1267 = vcmp.eq.s32.totalorder %v671, %v1255
        %vm1268 = vcmp.eq.s32.totalorder %v672, %v1255
        %vm1269 = vcmp.eq.s32.totalorder %v673, %v1255
        %vm1270 = vcmp.eq.s32.totalorder %v674, %v1255
        %vm1271 = vcmp.eq.s32.totalorder %v675, %v1255
        %vm1272 = vmand %vm1256, %vm1188
        %vm1273 = vmand %vm1257, %vm1188
        %vm1274 = vmand %vm1258, %vm1188
        %vm1275 = vmand %vm1259, %vm1188
        %vm1276 = vmand %vm1260, %vm1188
        %vm1277 = vmand %vm1261, %vm1188
        %vm1278 = vmand %vm1262, %vm1188
        %vm1279 = vmand %vm1263, %vm1188
        %vm1280 = vmand %vm1264, %vm1188
        %vm1281 = vmand %vm1265, %vm1188
        %vm1282 = vmand %vm1266, %vm1188
        %vm1283 = vmand %vm1267, %vm1188
        %vm1284 = vmand %vm1268, %vm1188
        %vm1285 = vmand %vm1269, %vm1188
        %vm1286 = vmand %vm1270, %vm1188
        %vm1287 = vmand %vm1271, %vm1188
        %v1288 = vsel %vm1272, 1, 0
        %v1289 = vsel %vm1273, 1, 0
        %v1290 = vsel %vm1274, 1, 0
        %v1291 = vsel %vm1275, 1, 0
        %v1292 = vsel %vm1276, 1, 0
        %v1293 = vsel %vm1277, 1, 0
        %v1294 = vsel %vm1278, 1, 0
        %v1295 = vsel %vm1279, 1, 0
        %v1296 = vsel %vm1280, 1, 0
        %v1297 = vsel %vm1281, 1, 0
        %v1298 = vsel %vm1282, 1, 0
        %v1299 = vsel %vm1283, 1, 0
        %v1300 = vsel %vm1284, 1, 0
        %v1301 = vsel %vm1285, 1, 0
        %v1302 = vsel %vm1286, 1, 0
        %v1303 = vsel %vm1287, 1, 0
        %v1304 = vcvt.s32.f32 %v1288
        %v1305 = vcvt.s32.f32 %v1289
        %v1306 = vcvt.s32.f32 %v1290
        %v1307 = vcvt.s32.f32 %v1291
        %v1308 = vcvt.s32.f32 %v1292
        %v1309 = vcvt.s32.f32 %v1293
        %v1310 = vcvt.s32.f32 %v1294
        %v1311 = vcvt.s32.f32 %v1295
        %v1312 = vcvt.s32.f32 %v1296
        %v1313 = vcvt.s32.f32 %v1297
        %v1314 = vcvt.s32.f32 %v1298
        %v1315 = vcvt.s32.f32 %v1299
        %v1316 = vcvt.s32.f32 %v1300
        %v1317 = vcvt.s32.f32 %v1301
        %v1318 = vcvt.s32.f32 %v1302
        %v1319 = vcvt.s32.f32 %v1303
        %1320 = vmatprep.subr.mxu0 0.0
        %1321 = vmatpush1.msra.mxu0 %v1239
        %1322 = vmatprep.subr.mxu0 0.0
        %1323 = vmatpush1.msra.mxu0 %v1240
        %1324 = vmatprep.subr.mxu0 0.0
        %1325 = vmatpush1.msra.mxu0 %v1241
        %1326 = vmatprep.subr.mxu0 0.0
        %1327 = vmatpush1.msra.mxu0 %v1242
        %1328 = vmatprep.subr.mxu0 0.0
        %1329 = vmatpush1.msra.mxu0 %v1243
        %1330 = vmatprep.subr.mxu0 0.0
        %1331 = vmatpush1.msra.mxu0 %v1244
        %1332 = vmatprep.subr.mxu0 0.0
        %1333 = vmatpush1.msra.mxu0 %v1245
        %1334 = vmatprep.subr.mxu0 0.0
        %1335 = vmatpush1.msra.mxu0 %v1246
        %1336 = vmatprep.subr.mxu0 0.0
        %1337 = vmatpush1.msra.mxu0 %v1247
        %1338 = vmatprep.subr.mxu0 0.0
        %1339 = vmatpush1.msra.mxu0 %v1248
        %1340 = vmatprep.subr.mxu0 0.0
        %1341 = vmatpush1.msra.mxu0 %v1249
        %1342 = vmatprep.subr.mxu0 0.0
        %1343 = vmatpush1.msra.mxu0 %v1250
        %1344 = vmatprep.subr.mxu0 0.0
        %1345 = vmatpush1.msra.mxu0 %v1251
        %1346 = vmatprep.subr.mxu0 0.0
        %1347 = vmatpush1.msra.mxu0 %v1252
        %1348 = vmatprep.subr.mxu0 0.0
        %1349 = vmatpush1.msra.mxu0 %v1253
        %1350 = vmatprep.subr.mxu0 0.0
        %1351 = vmatpush1.msra.mxu0 %v1254
        %1352 = vmatprep.subr.mxu0 0.0
        %1353 = vmatpush1.msra.mxu0 0.0
        %1354 = vmatprep.subr.mxu0 0.0
        %1355 = vmatpush1.msra.mxu0 0.0
        %1356 = vmatprep.subr.mxu0 0.0
        %1357 = vmatpush1.msra.mxu0 0.0
        %1358 = vmatprep.subr.mxu0 0.0
        %1359 = vmatpush1.msra.mxu0 0.0
        %1360 = vmatprep.subr.mxu0 0.0
        %1361 = vmatpush1.msra.mxu0 0.0
        %1362 = vmatprep.subr.mxu0 0.0
        %1363 = vmatpush1.msra.mxu0 0.0
        %1364 = vmatprep.subr.mxu0 0.0
        %1365 = vmatpush1.msra.mxu0 0.0
        %1366 = vmatprep.subr.mxu0 0.0
        %1367 = vmatpush1.msra.mxu0 0.0
        %1368 = vmatprep.subr.mxu0 0.0
        %1369 = vmatpush1.msra.mxu0 0.0
        %1370 = vmatprep.subr.mxu0 0.0
        %1371 = vmatpush1.msra.mxu0 0.0
        %1372 = vmatprep.subr.mxu0 0.0
        %1373 = vmatpush1.msra.mxu0 0.0
        %1374 = vmatprep.subr.mxu0 0.0
        %1375 = vmatpush1.msra.mxu0 0.0
        %1376 = vmatprep.subr.mxu0 0.0
        %1377 = vmatpush1.msra.mxu0 0.0
        %1378 = vmatprep.subr.mxu0 0.0
        %1379 = vmatpush1.msra.mxu0 0.0
        %1380 = vmatprep.subr.mxu0 0.0
        %1381 = vmatpush1.msra.mxu0 0.0
        %1382 = vmatprep.subr.mxu0 0.0
        %1383 = vmatpush1.msra.mxu0 0.0
        %1384 = vmatprep.mubr.f32.mxu0 0.0
        %1385 = vmatmul.mubr.f32.gmra.mrb[0].mxu0 %v1187
        %v1386 = vpop.f32.mrb[0].mxu0
        %v1387 = vadd.f32 0.0, %v1386
        %v1388 = vpop.f32.mrb[0].mxu0
        %1389 = vdwg.mxu0
        %1390 = vmatprep.subr.mxu0 0.0
        %1391 = vmatpush1.msra.mxu0 %v1304
        %1392 = vmatprep.subr.mxu0 0.0
        %1393 = vmatpush1.msra.mxu0 %v1305
        %1394 = vmatprep.subr.mxu0 0.0
        %1395 = vmatpush1.msra.mxu0 %v1306
        %1396 = vmatprep.subr.mxu0 0.0
        %1397 = vmatpush1.msra.mxu0 %v1307
        %1398 = vmatprep.subr.mxu0 0.0
        %1399 = vmatpush1.msra.mxu0 %v1308
        %1400 = vmatprep.subr.mxu0 0.0
        %1401 = vmatpush1.msra.mxu0 %v1309
        %1402 = vmatprep.subr.mxu0 0.0
        %1403 = vmatpush1.msra.mxu0 %v1310
        %1404 = vmatprep.subr.mxu0 0.0
        %1405 = vmatpush1.msra.mxu0 %v1311
        %1406 = vmatprep.subr.mxu0 0.0
        %1407 = vmatpush1.msra.mxu0 %v1312
        %1408 = vmatprep.subr.mxu0 0.0
        %1409 = vmatpush1.msra.mxu0 %v1313
        %1410 = vmatprep.subr.mxu0 0.0
        %1411 = vmatpush1.msra.mxu0 %v1314
        %1412 = vmatprep.subr.mxu0 0.0
        %1413 = vmatpush1.msra.mxu0 %v1315
        %1414 = vmatprep.subr.mxu0 0.0
        %1415 = vmatpush1.msra.mxu0 %v1316
        %1416 = vmatprep.subr.mxu0 0.0
        %1417 = vmatpush1.msra.mxu0 %v1317
        %1418 = vmatprep.subr.mxu0 0.0
        %1419 = vmatpush1.msra.mxu0 %v1318
        %1420 = vmatprep.subr.mxu0 0.0
        %1421 = vmatpush1.msra.mxu0 %v1319
        %1422 = vmatprep.subr.mxu0 0.0
        %1423 = vmatpush1.msra.mxu0 0.0
        %1424 = vmatprep.subr.mxu0 0.0
        %1425 = vmatpush1.msra.mxu0 0.0
        %1426 = vmatprep.subr.mxu0 0.0
        %1427 = vmatpush1.msra.mxu0 0.0
        %1428 = vmatprep.subr.mxu0 0.0
        %1429 = vmatpush1.msra.mxu0 0.0
        %1430 = vmatprep.subr.mxu0 0.0
        %1431 = vmatpush1.msra.mxu0 0.0
        %1432 = vmatprep.subr.mxu0 0.0
        %1433 = vmatpush1.msra.mxu0 0.0
        %1434 = vmatprep.subr.mxu0 0.0
        %1435 = vmatpush1.msra.mxu0 0.0
        %1436 = vmatprep.subr.mxu0 0.0
        %1437 = vmatpush1.msra.mxu0 0.0
        %1438 = vmatprep.subr.mxu0 0.0
        %1439 = vmatpush1.msra.mxu0 0.0
        %1440 = vmatprep.subr.mxu0 0.0
        %1441 = vmatpush1.msra.mxu0 0.0
        %1442 = vmatprep.subr.mxu0 0.0
        %1443 = vmatpush1.msra.mxu0 0.0
        %1444 = vmatprep.subr.mxu0 0.0
        %1445 = vmatpush1.msra.mxu0 0.0
        %1446 = vmatprep.subr.mxu0 0.0
        %1447 = vmatpush1.msra.mxu0 0.0
        %1448 = vmatprep.subr.mxu0 0.0
        %1449 = vmatpush1.msra.mxu0 0.0
        %1450 = vmatprep.subr.mxu0 0.0
        %1451 = vmatpush1.msra.mxu0 0.0
        %1452 = vmatprep.subr.mxu0 0.0
        %1453 = vmatpush1.msra.mxu0 0.0
        %1454 = vmatprep.mubr.f32.mxu0 0.0
        %1455 = vmatmul.mubr.f32.gmra.mrb[0].mxu0 %v1187
        %v1456 = vpop.f32.mrb[0].mxu0
        %v1457 = vadd.f32 0.0, %v1456
        %v1458 = vpop.f32.mrb[0].mxu0
        %1459 = vdwg.mxu0
        %v1460 = vmax.f32 %v1387, %v1457
        %s1461 = scalar_lea.vmem [#allocation4], 768
        %v1462 = vld [vmem:[%s1461] sm:$0xff]
        %v1463 = vld [vmem:[%s1461 + $0x8] sm:$0xff]
        %v1464 = vld [vmem:[%s1461 + $0x10] sm:$0xff]
        %v1465 = vld [vmem:[%s1461 + $0x18] sm:$0xff]
        %v1466 = vld [vmem:[%s1461 + $0x20] sm:$0xff]
        %v1467 = vld [vmem:[%s1461 + $0x28] sm:$0xff]
        %v1468 = vld [vmem:[%s1461 + $0x30] sm:$0xff]
        %v1469 = vld [vmem:[%s1461 + $0x38] sm:$0xff]
        %v1470 = vld [vmem:[%s1461 + $0x40] sm:$0xff]
        %v1471 = vld [vmem:[%s1461 + $0x48] sm:$0xff]
        %v1472 = vld [vmem:[%s1461 + $0x50] sm:$0xff]
        %v1473 = vld [vmem:[%s1461 + $0x58] sm:$0xff]
        %v1474 = vld [vmem:[%s1461 + $0x60] sm:$0xff]
        %v1475 = vld [vmem:[%s1461 + $0x68] sm:$0xff]
        %v1476 = vld [vmem:[%s1461 + $0x70] sm:$0xff]
        %v1477 = vld [vmem:[%s1461 + $0x78] sm:$0xff]
        %v1478 = vld [vmem:[%s1461 + $0x80] sm:$0xff]
        %v1479 = vld [vmem:[%s1461 + $0x88] sm:$0xff]
        %v1480 = vld [vmem:[%s1461 + $0x90] sm:$0xff]
        %v1481 = vld [vmem:[%s1461 + $0x98] sm:$0xff]
        %v1482 = vld [vmem:[%s1461 + $0xa0] sm:$0xff]
        %v1483 = vld [vmem:[%s1461 + $0xa8] sm:$0xff]
        %v1484 = vld [vmem:[%s1461 + $0xb0] sm:$0xff]
        %v1485 = vld [vmem:[%s1461 + $0xb8] sm:$0xff]
        %v1486 = vld [vmem:[%s1461 + $0xc0] sm:$0xff]
        %v1487 = vld [vmem:[%s1461 + $0xc8] sm:$0xff]
        %v1488 = vld [vmem:[%s1461 + $0xd0] sm:$0xff]
        %v1489 = vld [vmem:[%s1461 + $0xd8] sm:$0xff]
        %v1490 = vld [vmem:[%s1461 + $0xe0] sm:$0xff]
        %v1491 = vld [vmem:[%s1461 + $0xe8] sm:$0xff]
        %v1492 = vld [vmem:[%s1461 + $0xf0] sm:$0xff]
        %v1493 = vld [vmem:[%s1461 + $0xf8] sm:$0xff]
        %v1494 = vld [vmem:[%s1461 + $0x100] sm:$0xff]
        %v1495 = vld [vmem:[%s1461 + $0x108] sm:$0xff]
        %v1496 = vld [vmem:[%s1461 + $0x110] sm:$0xff]
        %v1497 = vld [vmem:[%s1461 + $0x118] sm:$0xff]
        %v1498 = vld [vmem:[%s1461 + $0x120] sm:$0xff]
        %v1499 = vld [vmem:[%s1461 + $0x128] sm:$0xff]
        %v1500 = vld [vmem:[%s1461 + $0x130] sm:$0xff]
        %v1501 = vld [vmem:[%s1461 + $0x138] sm:$0xff]
        %v1502 = vld [vmem:[%s1461 + $0x140] sm:$0xff]
        %v1503 = vld [vmem:[%s1461 + $0x148] sm:$0xff]
        %v1504 = vld [vmem:[%s1461 + $0x150] sm:$0xff]
        %v1505 = vld [vmem:[%s1461 + $0x158] sm:$0xff]
        %v1506 = vld [vmem:[%s1461 + $0x160] sm:$0xff]
        %v1507 = vld [vmem:[%s1461 + $0x168] sm:$0xff]
        %v1508 = vld [vmem:[%s1461 + $0x170] sm:$0xff]
        %v1509 = vld [vmem:[%s1461 + $0x178] sm:$0xff]
        %v1510 = vld [vmem:[#allocation6 + $0x2] sm:$0x1]
        %v1512 = vrot.slane %v1460, 7
        %v1514 = vsel %vm269, 0.0, %v1512
        %v1515 = vrot.slane %v1460, 1
        %v1517 = vsel %vm276, %v1515, 0.0
        %v1518 = vlaneseq
        %v1519 = vshrl.u32 %v1518, 7
        %v1520 = vsub.s32 0, %v1519
        %v1521 = vrot.slane %v1510, %v1520
        %1522 = vmatprep.subr.mxu0 0.0
        %1523 = vmatpush1.msra.mxu0 %v1462
        %1524 = vmatprep.subr.mxu0 0.0
        %1525 = vmatpush1.msra.mxu0 %v1463
        %1526 = vmatprep.subr.mxu0 0.0
        %1527 = vmatpush1.msra.mxu0 %v1464
        %1528 = vmatprep.subr.mxu0 0.0
        %1529 = vmatpush1.msra.mxu0 %v1465
        %1530 = vmatprep.subr.mxu0 0.0
        %1531 = vmatpush1.msra.mxu0 %v1466
        %1532 = vmatprep.subr.mxu0 0.0
        %1533 = vmatpush1.msra.mxu0 %v1467
        %1534 = vmatprep.subr.mxu0 0.0
        %1535 = vmatpush1.msra.mxu0 %v1468
        %1536 = vmatprep.subr.mxu0 0.0
        %1537 = vmatpush1.msra.mxu0 %v1469
        %1538 = vmatprep.subr.mxu0 0.0
        %1539 = vmatpush1.msra.mxu0 %v1470
        %1540 = vmatprep.subr.mxu0 0.0
        %1541 = vmatpush1.msra.mxu0 %v1471
        %1542 = vmatprep.subr.mxu0 0.0
        %1543 = vmatpush1.msra.mxu0 %v1472
        %1544 = vmatprep.subr.mxu0 0.0
        %1545 = vmatpush1.msra.mxu0 %v1473
        %1546 = vmatprep.subr.mxu0 0.0
        %1547 = vmatpush1.msra.mxu0 %v1474
        %1548 = vmatprep.subr.mxu0 0.0
        %1549 = vmatpush1.msra.mxu0 %v1475
        %1550 = vmatprep.subr.mxu0 0.0
        %1551 = vmatpush1.msra.mxu0 %v1476
        %1552 = vmatprep.subr.mxu0 0.0
        %1553 = vmatpush1.msra.mxu0 %v1477
        %1554 = vmatprep.subr.mxu0 0.0
        %1555 = vmatpush1.msra.mxu0 %v1478
        %1556 = vmatprep.subr.mxu0 0.0
        %1557 = vmatpush1.msra.mxu0 %v1479
        %1558 = vmatprep.subr.mxu0 0.0
        %1559 = vmatpush1.msra.mxu0 %v1480
        %1560 = vmatprep.subr.mxu0 0.0
        %1561 = vmatpush1.msra.mxu0 %v1481
        %1562 = vmatprep.subr.mxu0 0.0
        %1563 = vmatpush1.msra.mxu0 %v1482
        %1564 = vmatprep.subr.mxu0 0.0
        %1565 = vmatpush1.msra.mxu0 %v1483
        %1566 = vmatprep.subr.mxu0 0.0
        %1567 = vmatpush1.msra.mxu0 %v1484
        %1568 = vmatprep.subr.mxu0 0.0
        %1569 = vmatpush1.msra.mxu0 %v1485
        %1570 = vmatprep.subr.mxu0 0.0
        %1571 = vmatpush1.msra.mxu0 %v1486
        %1572 = vmatprep.subr.mxu0 0.0
        %1573 = vmatpush1.msra.mxu0 %v1487
        %1574 = vmatprep.subr.mxu0 0.0
        %1575 = vmatpush1.msra.mxu0 %v1488
        %1576 = vmatprep.subr.mxu0 0.0
        %1577 = vmatpush1.msra.mxu0 %v1489
        %1578 = vmatprep.subr.mxu0 0.0
        %1579 = vmatpush1.msra.mxu0 %v1490
        %1580 = vmatprep.subr.mxu0 0.0
        %1581 = vmatpush1.msra.mxu0 %v1491
        %1582 = vmatprep.subr.mxu0 0.0
        %1583 = vmatpush1.msra.mxu0 %v1492
        %1584 = vmatprep.subr.mxu0 0.0
        %1585 = vmatpush1.msra.mxu0 %v1493
        %1586 = vmatprep.mubr.f32.mxu0 %v1460
        %1587 = vmatmul.mubr.f32.gmra.mrb[0].mxu0 %v1514
        %v1588 = vpop.f32.mrb[0].mxu0
        %v1589 = vadd.f32 %v1521, %v1588
        %v1590 = vpop.f32.mrb[0].mxu0
        %1591 = vdwg.mxu0
        %1592 = vmatprep.subr.mxu0 0.0
        %1593 = vmatpush1.msra.mxu0 %v1494
        %1594 = vmatprep.subr.mxu0 0.0
        %1595 = vmatpush1.msra.mxu0 %v1495
        %1596 = vmatprep.subr.mxu0 0.0
        %1597 = vmatpush1.msra.mxu0 %v1496
        %1598 = vmatprep.subr.mxu0 0.0
        %1599 = vmatpush1.msra.mxu0 %v1497
        %1600 = vmatprep.subr.mxu0 0.0
        %1601 = vmatpush1.msra.mxu0 %v1498
        %1602 = vmatprep.subr.mxu0 0.0
        %1603 = vmatpush1.msra.mxu0 %v1499
        %1604 = vmatprep.subr.mxu0 0.0
        %1605 = vmatpush1.msra.mxu0 %v1500
        %1606 = vmatprep.subr.mxu0 0.0
        %1607 = vmatpush1.msra.mxu0 %v1501
        %1608 = vmatprep.subr.mxu0 0.0
        %1609 = vmatpush1.msra.mxu0 %v1502
        %1610 = vmatprep.subr.mxu0 0.0
        %1611 = vmatpush1.msra.mxu0 %v1503
        %1612 = vmatprep.subr.mxu0 0.0
        %1613 = vmatpush1.msra.mxu0 %v1504
        %1614 = vmatprep.subr.mxu0 0.0
        %1615 = vmatpush1.msra.mxu0 %v1505
        %1616 = vmatprep.subr.mxu0 0.0
        %1617 = vmatpush1.msra.mxu0 %v1506
        %1618 = vmatprep.subr.mxu0 0.0
        %1619 = vmatpush1.msra.mxu0 %v1507
        %1620 = vmatprep.subr.mxu0 0.0
        %1621 = vmatpush1.msra.mxu0 %v1508
        %1622 = vmatprep.subr.mxu0 0.0
        %1623 = vmatpush1.msra.mxu0 %v1509
        %1624 = vmatprep.subr.mxu0 0.0
        %1625 = vmatpush1.msra.mxu0 0.0
        %1626 = vmatprep.subr.mxu0 0.0
        %1627 = vmatpush1.msra.mxu0 0.0
        %1628 = vmatprep.subr.mxu0 0.0
        %1629 = vmatpush1.msra.mxu0 0.0
        %1630 = vmatprep.subr.mxu0 0.0
        %1631 = vmatpush1.msra.mxu0 0.0
        %1632 = vmatprep.subr.mxu0 0.0
        %1633 = vmatpush1.msra.mxu0 0.0
        %1634 = vmatprep.subr.mxu0 0.0
        %1635 = vmatpush1.msra.mxu0 0.0
        %1636 = vmatprep.subr.mxu0 0.0
        %1637 = vmatpush1.msra.mxu0 0.0
        %1638 = vmatprep.subr.mxu0 0.0
        %1639 = vmatpush1.msra.mxu0 0.0
        %1640 = vmatprep.subr.mxu0 0.0
        %1641 = vmatpush1.msra.mxu0 0.0
        %1642 = vmatprep.subr.mxu0 0.0
        %1643 = vmatpush1.msra.mxu0 0.0
        %1644 = vmatprep.subr.mxu0 0.0
        %1645 = vmatpush1.msra.mxu0 0.0
        %1646 = vmatprep.subr.mxu0 0.0
        %1647 = vmatpush1.msra.mxu0 0.0
        %1648 = vmatprep.subr.mxu0 0.0
        %1649 = vmatpush1.msra.mxu0 0.0
        %1650 = vmatprep.subr.mxu0 0.0
        %1651 = vmatpush1.msra.mxu0 0.0
        %1652 = vmatprep.subr.mxu0 0.0
        %1653 = vmatpush1.msra.mxu0 0.0
        %1654 = vmatprep.subr.mxu0 0.0
        %1655 = vmatpush1.msra.mxu0 0.0
        %1656 = vmatprep.mubr.f32.mxu0 0.0
        %1657 = vmatmul.mubr.f32.gmra.mrb[0].mxu0 %v1517
        %v1658 = vpop.f32.mrb[0].mxu0
        %v1659 = vadd.f32 %v1589, %v1658
        %v1660 = vpop.f32.mrb[0].mxu0
        %1661 = vdwg.mxu0
        %v1662 = vmax.f32 %v1659, 0.0
        %s1663 = scalar_lea.vmem [#allocation4], 1152
        %v1664 = vld [vmem:[%s1663] sm:$0xff]
        %v1665 = vld [vmem:[%s1663 + $0x8] sm:$0xff]
        %v1666 = vld [vmem:[%s1663 + $0x10] sm:$0xff]
        %v1667 = vld [vmem:[%s1663 + $0x18] sm:$0xff]
        %v1668 = vld [vmem:[%s1663 + $0x20] sm:$0xff]
        %v1669 = vld [vmem:[%s1663 + $0x28] sm:$0xff]
        %v1670 = vld [vmem:[%s1663 + $0x30] sm:$0xff]
        %v1671 = vld [vmem:[%s1663 + $0x38] sm:$0xff]
        %v1672 = vld [vmem:[%s1663 + $0x40] sm:$0xff]
        %v1673 = vld [vmem:[%s1663 + $0x48] sm:$0xff]
        %v1674 = vld [vmem:[%s1663 + $0x50] sm:$0xff]
        %v1675 = vld [vmem:[%s1663 + $0x58] sm:$0xff]
        %v1676 = vld [vmem:[%s1663 + $0x60] sm:$0xff]
        %v1677 = vld [vmem:[%s1663 + $0x68] sm:$0xff]
        %v1678 = vld [vmem:[%s1663 + $0x70] sm:$0xff]
        %v1679 = vld [vmem:[%s1663 + $0x78] sm:$0xff]
        %v1680 = vld [vmem:[%s1663 + $0x80] sm:$0xff]
        %v1681 = vld [vmem:[%s1663 + $0x88] sm:$0xff]
        %v1682 = vld [vmem:[%s1663 + $0x90] sm:$0xff]
        %v1683 = vld [vmem:[%s1663 + $0x98] sm:$0xff]
        %v1684 = vld [vmem:[%s1663 + $0xa0] sm:$0xff]
        %v1685 = vld [vmem:[%s1663 + $0xa8] sm:$0xff]
        %v1686 = vld [vmem:[%s1663 + $0xb0] sm:$0xff]
        %v1687 = vld [vmem:[%s1663 + $0xb8] sm:$0xff]
        %v1688 = vld [vmem:[%s1663 + $0xc0] sm:$0xff]
        %v1689 = vld [vmem:[%s1663 + $0xc8] sm:$0xff]
        %v1690 = vld [vmem:[%s1663 + $0xd0] sm:$0xff]
        %v1691 = vld [vmem:[%s1663 + $0xd8] sm:$0xff]
        %v1692 = vld [vmem:[%s1663 + $0xe0] sm:$0xff]
        %v1693 = vld [vmem:[%s1663 + $0xe8] sm:$0xff]
        %v1694 = vld [vmem:[%s1663 + $0xf0] sm:$0xff]
        %v1695 = vld [vmem:[%s1663 + $0xf8] sm:$0xff]
        %v1696 = vld [vmem:[%s1663 + $0x100] sm:$0xff]
        %v1697 = vld [vmem:[%s1663 + $0x108] sm:$0xff]
        %v1698 = vld [vmem:[%s1663 + $0x110] sm:$0xff]
        %v1699 = vld [vmem:[%s1663 + $0x118] sm:$0xff]
        %v1700 = vld [vmem:[%s1663 + $0x120] sm:$0xff]
        %v1701 = vld [vmem:[%s1663 + $0x128] sm:$0xff]
        %v1702 = vld [vmem:[%s1663 + $0x130] sm:$0xff]
        %v1703 = vld [vmem:[%s1663 + $0x138] sm:$0xff]
        %v1704 = vld [vmem:[%s1663 + $0x140] sm:$0xff]
        %v1705 = vld [vmem:[%s1663 + $0x148] sm:$0xff]
        %v1706 = vld [vmem:[%s1663 + $0x150] sm:$0xff]
        %v1707 = vld [vmem:[%s1663 + $0x158] sm:$0xff]
        %v1708 = vld [vmem:[%s1663 + $0x160] sm:$0xff]
        %v1709 = vld [vmem:[%s1663 + $0x168] sm:$0xff]
        %v1710 = vld [vmem:[%s1663 + $0x170] sm:$0xff]
        %v1711 = vld [vmem:[%s1663 + $0x178] sm:$0xff]
        %v1712 = vld [vmem:[#allocation6 + $0x3] sm:$0x1]
        %v1714 = vrot.slane %v1662, 7
        %v1716 = vsel %vm269, 0.0, %v1714
        %v1717 = vrot.slane %v1662, 1
        %v1719 = vsel %vm276, %v1717, 0.0
        %v1720 = vlaneseq
        %v1721 = vshrl.u32 %v1720, 7
        %v1722 = vsub.s32 0, %v1721
        %v1723 = vrot.slane %v1712, %v1722
        %1724 = vmatprep.subr.mxu0 0.0
        %1725 = vmatpush1.msra.mxu0 %v1664
        %1726 = vmatprep.subr.mxu0 0.0
        %1727 = vmatpush1.msra.mxu0 %v1665
        %1728 = vmatprep.subr.mxu0 0.0
        %1729 = vmatpush1.msra.mxu0 %v1666
        %1730 = vmatprep.subr.mxu0 0.0
        %1731 = vmatpush1.msra.mxu0 %v1667
        %1732 = vmatprep.subr.mxu0 0.0
        %1733 = vmatpush1.msra.mxu0 %v1668
        %1734 = vmatprep.subr.mxu0 0.0
        %1735 = vmatpush1.msra.mxu0 %v1669
        %1736 = vmatprep.subr.mxu0 0.0
        %1737 = vmatpush1.msra.mxu0 %v1670
        %1738 = vmatprep.subr.mxu0 0.0
        %1739 = vmatpush1.msra.mxu0 %v1671
        %1740 = vmatprep.subr.mxu0 0.0
        %1741 = vmatpush1.msra.mxu0 %v1672
        %1742 = vmatprep.subr.mxu0 0.0
        %1743 = vmatpush1.msra.mxu0 %v1673
        %1744 = vmatprep.subr.mxu0 0.0
        %1745 = vmatpush1.msra.mxu0 %v1674
        %1746 = vmatprep.subr.mxu0 0.0
        %1747 = vmatpush1.msra.mxu0 %v1675
        %1748 = vmatprep.subr.mxu0 0.0
        %1749 = vmatpush1.msra.mxu0 %v1676
        %1750 = vmatprep.subr.mxu0 0.0
        %1751 = vmatpush1.msra.mxu0 %v1677
        %1752 = vmatprep.subr.mxu0 0.0
        %1753 = vmatpush1.msra.mxu0 %v1678
        %1754 = vmatprep.subr.mxu0 0.0
        %1755 = vmatpush1.msra.mxu0 %v1679
        %1756 = vmatprep.subr.mxu0 0.0
        %1757 = vmatpush1.msra.mxu0 %v1680
        %1758 = vmatprep.subr.mxu0 0.0
        %1759 = vmatpush1.msra.mxu0 %v1681
        %1760 = vmatprep.subr.mxu0 0.0
        %1761 = vmatpush1.msra.mxu0 %v1682
        %1762 = vmatprep.subr.mxu0 0.0
        %1763 = vmatpush1.msra.mxu0 %v1683
        %1764 = vmatprep.subr.mxu0 0.0
        %1765 = vmatpush1.msra.mxu0 %v1684
        %1766 = vmatprep.subr.mxu0 0.0
        %1767 = vmatpush1.msra.mxu0 %v1685
        %1768 = vmatprep.subr.mxu0 0.0
        %1769 = vmatpush1.msra.mxu0 %v1686
        %1770 = vmatprep.subr.mxu0 0.0
        %1771 = vmatpush1.msra.mxu0 %v1687
        %1772 = vmatprep.subr.mxu0 0.0
        %1773 = vmatpush1.msra.mxu0 %v1688
        %1774 = vmatprep.subr.mxu0 0.0
        %1775 = vmatpush1.msra.mxu0 %v1689
        %1776 = vmatprep.subr.mxu0 0.0
        %1777 = vmatpush1.msra.mxu0 %v1690
        %1778 = vmatprep.subr.mxu0 0.0
        %1779 = vmatpush1.msra.mxu0 %v1691
        %1780 = vmatprep.subr.mxu0 0.0
        %1781 = vmatpush1.msra.mxu0 %v1692
        %1782 = vmatprep.subr.mxu0 0.0
        %1783 = vmatpush1.msra.mxu0 %v1693
        %1784 = vmatprep.subr.mxu0 0.0
        %1785 = vmatpush1.msra.mxu0 %v1694
        %1786 = vmatprep.subr.mxu0 0.0
        %1787 = vmatpush1.msra.mxu0 %v1695
        %1788 = vmatprep.mubr.f32.mxu0 %v1662
        %1789 = vmatmul.mubr.f32.gmra.mrb[0].mxu0 %v1716
        %v1790 = vpop.f32.mrb[0].mxu0
        %v1791 = vadd.f32 %v1723, %v1790
        %v1792 = vpop.f32.mrb[0].mxu0
        %1793 = vdwg.mxu0
        %1794 = vmatprep.subr.mxu0 0.0
        %1795 = vmatpush1.msra.mxu0 %v1696
        %1796 = vmatprep.subr.mxu0 0.0
        %1797 = vmatpush1.msra.mxu0 %v1697
        %1798 = vmatprep.subr.mxu0 0.0
        %1799 = vmatpush1.msra.mxu0 %v1698
        %1800 = vmatprep.subr.mxu0 0.0
        %1801 = vmatpush1.msra.mxu0 %v1699
        %1802 = vmatprep.subr.mxu0 0.0
        %1803 = vmatpush1.msra.mxu0 %v1700
        %1804 = vmatprep.subr.mxu0 0.0
        %1805 = vmatpush1.msra.mxu0 %v1701
        %1806 = vmatprep.subr.mxu0 0.0
        %1807 = vmatpush1.msra.mxu0 %v1702
        %1808 = vmatprep.subr.mxu0 0.0
        %1809 = vmatpush1.msra.mxu0 %v1703
        %1810 = vmatprep.subr.mxu0 0.0
        %1811 = vmatpush1.msra.mxu0 %v1704
        %1812 = vmatprep.subr.mxu0 0.0
        %1813 = vmatpush1.msra.mxu0 %v1705
        %1814 = vmatprep.subr.mxu0 0.0
        %1815 = vmatpush1.msra.mxu0 %v1706
        %1816 = vmatprep.subr.mxu0 0.0
        %1817 = vmatpush1.msra.mxu0 %v1707
        %1818 = vmatprep.subr.mxu0 0.0
        %1819 = vmatpush1.msra.mxu0 %v1708
        %1820 = vmatprep.subr.mxu0 0.0
        %1821 = vmatpush1.msra.mxu0 %v1709
        %1822 = vmatprep.subr.mxu0 0.0
        %1823 = vmatpush1.msra.mxu0 %v1710
        %1824 = vmatprep.subr.mxu0 0.0
        %1825 = vmatpush1.msra.mxu0 %v1711
        %1826 = vmatprep.subr.mxu0 0.0
        %1827 = vmatpush1.msra.mxu0 0.0
        %1828 = vmatprep.subr.mxu0 0.0
        %1829 = vmatpush1.msra.mxu0 0.0
        %1830 = vmatprep.subr.mxu0 0.0
        %1831 = vmatpush1.msra.mxu0 0.0
        %1832 = vmatprep.subr.mxu0 0.0
        %1833 = vmatpush1.msra.mxu0 0.0
        %1834 = vmatprep.subr.mxu0 0.0
        %1835 = vmatpush1.msra.mxu0 0.0
        %1836 = vmatprep.subr.mxu0 0.0
        %1837 = vmatpush1.msra.mxu0 0.0
        %1838 = vmatprep.subr.mxu0 0.0
        %1839 = vmatpush1.msra.mxu0 0.0
        %1840 = vmatprep.subr.mxu0 0.0
        %1841 = vmatpush1.msra.mxu0 0.0
        %1842 = vmatprep.subr.mxu0 0.0
        %1843 = vmatpush1.msra.mxu0 0.0
        %1844 = vmatprep.subr.mxu0 0.0
        %1845 = vmatpush1.msra.mxu0 0.0
        %1846 = vmatprep.subr.mxu0 0.0
        %1847 = vmatpush1.msra.mxu0 0.0
        %1848 = vmatprep.subr.mxu0 0.0
        %1849 = vmatpush1.msra.mxu0 0.0
        %1850 = vmatprep.subr.mxu0 0.0
        %1851 = vmatpush1.msra.mxu0 0.0
        %1852 = vmatprep.subr.mxu0 0.0
        %1853 = vmatpush1.msra.mxu0 0.0
        %1854 = vmatprep.subr.mxu0 0.0
        %1855 = vmatpush1.msra.mxu0 0.0
        %1856 = vmatprep.subr.mxu0 0.0
        %1857 = vmatpush1.msra.mxu0 0.0
        %1858 = vmatprep.mubr.f32.mxu0 0.0
        %1859 = vmatmul.mubr.f32.gmra.mrb[0].mxu0 %v1719
        %v1860 = vpop.f32.mrb[0].mxu0
        %v1861 = vadd.f32 %v1791, %v1860
        %v1862 = vpop.f32.mrb[0].mxu0
        %1863 = vdwg.mxu0
        %v1864 = vmax.f32 %v1861, 0.0
        %v1865 = vand.u32 %v660, 15
        %v1866 = vand.u32 %v661, 15
        %v1867 = vand.u32 %v662, 15
        %v1868 = vand.u32 %v663, 15
        %v1869 = vand.u32 %v664, 15
        %v1870 = vand.u32 %v665, 15
        %v1871 = vand.u32 %v666, 15
        %v1872 = vand.u32 %v667, 15
        %v1873 = vand.u32 %v668, 15
        %v1874 = vand.u32 %v669, 15
        %v1875 = vand.u32 %v670, 15
        %v1876 = vand.u32 %v671, 15
        %v1877 = vand.u32 %v672, 15
        %v1878 = vand.u32 %v673, 15
        %v1879 = vand.u32 %v674, 15
        %v1880 = vand.u32 %v675, 15
        %vm1881 = vcmp.eq.s32.totalorder %v677, %v1865
        %vm1882 = vcmp.eq.s32.totalorder %v677, %v1866
        %vm1883 = vcmp.eq.s32.totalorder %v677, %v1867
        %vm1884 = vcmp.eq.s32.totalorder %v677, %v1868
        %vm1885 = vcmp.eq.s32.totalorder %v677, %v1869
        %vm1886 = vcmp.eq.s32.totalorder %v677, %v1870
        %vm1887 = vcmp.eq.s32.totalorder %v677, %v1871
        %vm1888 = vcmp.eq.s32.totalorder %v677, %v1872
        %vm1889 = vcmp.eq.s32.totalorder %v677, %v1873
        %vm1890 = vcmp.eq.s32.totalorder %v677, %v1874
        %vm1891 = vcmp.eq.s32.totalorder %v677, %v1875
        %vm1892 = vcmp.eq.s32.totalorder %v677, %v1876
        %vm1893 = vcmp.eq.s32.totalorder %v677, %v1877
        %vm1894 = vcmp.eq.s32.totalorder %v677, %v1878
        %vm1895 = vcmp.eq.s32.totalorder %v677, %v1879
        %vm1896 = vcmp.eq.s32.totalorder %v677, %v1880
        %v1897 = vsel %vm1881, 1, 0
        %v1898 = vsel %vm1882, 1, 0
        %v1899 = vsel %vm1883, 1, 0
        %v1900 = vsel %vm1884, 1, 0
        %v1901 = vsel %vm1885, 1, 0
        %v1902 = vsel %vm1886, 1, 0
        %v1903 = vsel %vm1887, 1, 0
        %v1904 = vsel %vm1888, 1, 0
        %v1905 = vsel %vm1889, 1, 0
        %v1906 = vsel %vm1890, 1, 0
        %v1907 = vsel %vm1891, 1, 0
        %v1908 = vsel %vm1892, 1, 0
        %v1909 = vsel %vm1893, 1, 0
        %v1910 = vsel %vm1894, 1, 0
        %v1911 = vsel %vm1895, 1, 0
        %v1912 = vsel %vm1896, 1, 0
        %v1913 = vcvt.s32.f32 %v1897
        %v1914 = vcvt.s32.f32 %v1898
        %v1915 = vcvt.s32.f32 %v1899
        %v1916 = vcvt.s32.f32 %v1900
        %v1917 = vcvt.s32.f32 %v1901
        %v1918 = vcvt.s32.f32 %v1902
        %v1919 = vcvt.s32.f32 %v1903
        %v1920 = vcvt.s32.f32 %v1904
        %v1921 = vcvt.s32.f32 %v1905
        %v1922 = vcvt.s32.f32 %v1906
        %v1923 = vcvt.s32.f32 %v1907
        %v1924 = vcvt.s32.f32 %v1908
        %v1925 = vcvt.s32.f32 %v1909
        %v1926 = vcvt.s32.f32 %v1910
        %v1927 = vcvt.s32.f32 %v1911
        %v1928 = vcvt.s32.f32 %v1912
        %v1929 = vand.u32 %v677, 15
        %vm1930 = vcmp.eq.s32.totalorder %v660, %v1929
        %vm1931 = vcmp.eq.s32.totalorder %v661, %v1929
        %vm1932 = vcmp.eq.s32.totalorder %v662, %v1929
        %vm1933 = vcmp.eq.s32.totalorder %v663, %v1929
        %vm1934 = vcmp.eq.s32.totalorder %v664, %v1929
        %vm1935 = vcmp.eq.s32.totalorder %v665, %v1929
        %vm1936 = vcmp.eq.s32.totalorder %v666, %v1929
        %vm1937 = vcmp.eq.s32.totalorder %v667, %v1929
        %vm1938 = vcmp.eq.s32.totalorder %v668, %v1929
        %vm1939 = vcmp.eq.s32.totalorder %v669, %v1929
        %vm1940 = vcmp.eq.s32.totalorder %v670, %v1929
        %vm1941 = vcmp.eq.s32.totalorder %v671, %v1929
        %vm1942 = vcmp.eq.s32.totalorder %v672, %v1929
        %vm1943 = vcmp.eq.s32.totalorder %v673, %v1929
        %vm1944 = vcmp.eq.s32.totalorder %v674, %v1929
        %vm1945 = vcmp.eq.s32.totalorder %v675, %v1929
        %v1946 = vsel %vm1930, 1, 0
        %v1947 = vsel %vm1931, 1, 0
        %v1948 = vsel %vm1932, 1, 0
        %v1949 = vsel %vm1933, 1, 0
        %v1950 = vsel %vm1934, 1, 0
        %v1951 = vsel %vm1935, 1, 0
        %v1952 = vsel %vm1936, 1, 0
        %v1953 = vsel %vm1937, 1, 0
        %v1954 = vsel %vm1938, 1, 0
        %v1955 = vsel %vm1939, 1, 0
        %v1956 = vsel %vm1940, 1, 0
        %v1957 = vsel %vm1941, 1, 0
        %v1958 = vsel %vm1942, 1, 0
        %v1959 = vsel %vm1943, 1, 0
        %v1960 = vsel %vm1944, 1, 0
        %v1961 = vsel %vm1945, 1, 0
        %v1962 = vcvt.s32.f32 %v1946
        %v1963 = vcvt.s32.f32 %v1947
        %v1964 = vcvt.s32.f32 %v1948
        %v1965 = vcvt.s32.f32 %v1949
        %v1966 = vcvt.s32.f32 %v1950
        %v1967 = vcvt.s32.f32 %v1951
        %v1968 = vcvt.s32.f32 %v1952
        %v1969 = vcvt.s32.f32 %v1953
        %v1970 = vcvt.s32.f32 %v1954
        %v1971 = vcvt.s32.f32 %v1955
        %v1972 = vcvt.s32.f32 %v1956
        %v1973 = vcvt.s32.f32 %v1957
        %v1974 = vcvt.s32.f32 %v1958
        %v1975 = vcvt.s32.f32 %v1959
        %v1976 = vcvt.s32.f32 %v1960
        %v1977 = vcvt.s32.f32 %v1961
        %v1978 = vrot.slane %v1864, 4
        %v1979 = vadd.f32 %v1864, %v1978
        %v1980 = vrot.slane %v1979, 2
        %v1981 = vadd.f32 %v1979, %v1980
        %v1982 = vrot.slane %v1981, 1
        %v1983 = vadd.f32 %v1981, %v1982
        %1984 = vmatprep.subr.mxu0 0.0
        %1985 = vmatpush1.msra.mxu0 %v1913
        %1986 = vmatprep.subr.mxu0 0.0
        %1987 = vmatpush1.msra.mxu0 %v1914
        %1988 = vmatprep.subr.mxu0 0.0
        %1989 = vmatpush1.msra.mxu0 %v1915
        %1990 = vmatprep.subr.mxu0 0.0
        %1991 = vmatpush1.msra.mxu0 %v1916
        %1992 = vmatprep.subr.mxu0 0.0
        %1993 = vmatpush1.msra.mxu0 %v1917
        %1994 = vmatprep.subr.mxu0 0.0
        %1995 = vmatpush1.msra.mxu0 %v1918
        %1996 = vmatprep.subr.mxu0 0.0
        %1997 = vmatpush1.msra.mxu0 %v1919
        %1998 = vmatprep.subr.mxu0 0.0
        %1999 = vmatpush1.msra.mxu0 %v1920
        %2000 = vmatprep.subr.mxu0 0.0
        %2001 = vmatpush1.msra.mxu0 %v1921
        %2002 = vmatprep.subr.mxu0 0.0
        %2003 = vmatpush1.msra.mxu0 %v1922
        %2004 = vmatprep.subr.mxu0 0.0
        %2005 = vmatpush1.msra.mxu0 %v1923
        %2006 = vmatprep.subr.mxu0 0.0
        %2007 = vmatpush1.msra.mxu0 %v1924
        %2008 = vmatprep.subr.mxu0 0.0
        %2009 = vmatpush1.msra.mxu0 %v1925
        %2010 = vmatprep.subr.mxu0 0.0
        %2011 = vmatpush1.msra.mxu0 %v1926
        %2012 = vmatprep.subr.mxu0 0.0
        %2013 = vmatpush1.msra.mxu0 %v1927
        %2014 = vmatprep.subr.mxu0 0.0
        %2015 = vmatpush1.msra.mxu0 %v1928
        %2016 = vmatprep.subr.mxu0 0.0
        %2017 = vmatpush1.msra.mxu0 0.0
        %2018 = vmatprep.subr.mxu0 0.0
        %2019 = vmatpush1.msra.mxu0 0.0
        %2020 = vmatprep.subr.mxu0 0.0
        %2021 = vmatpush1.msra.mxu0 0.0
        %2022 = vmatprep.subr.mxu0 0.0
        %2023 = vmatpush1.msra.mxu0 0.0
        %2024 = vmatprep.subr.mxu0 0.0
        %2025 = vmatpush1.msra.mxu0 0.0
        %2026 = vmatprep.subr.mxu0 0.0
        %2027 = vmatpush1.msra.mxu0 0.0
        %2028 = vmatprep.subr.mxu0 0.0
        %2029 = vmatpush1.msra.mxu0 0.0
        %2030 = vmatprep.subr.mxu0 0.0
        %2031 = vmatpush1.msra.mxu0 0.0
        %2032 = vmatprep.subr.mxu0 0.0
        %2033 = vmatpush1.msra.mxu0 0.0
        %2034 = vmatprep.subr.mxu0 0.0
        %2035 = vmatpush1.msra.mxu0 0.0
        %2036 = vmatprep.subr.mxu0 0.0
        %2037 = vmatpush1.msra.mxu0 0.0
        %2038 = vmatprep.subr.mxu0 0.0
        %2039 = vmatpush1.msra.mxu0 0.0
        %2040 = vmatprep.subr.mxu0 0.0
        %2041 = vmatpush1.msra.mxu0 0.0
        %2042 = vmatprep.subr.mxu0 0.0
        %2043 = vmatpush1.msra.mxu0 0.0
        %2044 = vmatprep.subr.mxu0 0.0
        %2045 = vmatpush1.msra.mxu0 0.0
        %2046 = vmatprep.subr.mxu0 0.0
        %2047 = vmatpush1.msra.mxu0 0.0
        %2048 = vmatprep.mubr.f32.mxu0 0.0
        %2049 = vmatmul.mubr.f32.gmra.mrb[0].mxu0 %v1983
        %v2050 = vpop.f32.mrb[0].mxu0
        %v2051 = vadd.f32 0.0, %v2050
        %v2052 = vpop.f32.mrb[0].mxu0
        %2053 = vdwg.mxu0
        %v2054 = vmul.f32 %v2051, 0.015625
        %2055 = vmatprep.subr.mxu0 0.0
        %2056 = vmatpush1.msra.mxu0 %v1962
        %2057 = vmatprep.subr.mxu0 0.0
        %2058 = vmatpush1.msra.mxu0 %v1963
        %2059 = vmatprep.subr.mxu0 0.0
        %2060 = vmatpush1.msra.mxu0 %v1964
        %2061 = vmatprep.subr.mxu0 0.0
        %2062 = vmatpush1.msra.mxu0 %v1965
        %2063 = vmatprep.subr.mxu0 0.0
        %2064 = vmatpush1.msra.mxu0 %v1966
        %2065 = vmatprep.subr.mxu0 0.0
        %2066 = vmatpush1.msra.mxu0 %v1967
        %2067 = vmatprep.subr.mxu0 0.0
        %2068 = vmatpush1.msra.mxu0 %v1968
        %2069 = vmatprep.subr.mxu0 0.0
        %2070 = vmatpush1.msra.mxu0 %v1969
        %2071 = vmatprep.subr.mxu0 0.0
        %2072 = vmatpush1.msra.mxu0 %v1970
        %2073 = vmatprep.subr.mxu0 0.0
        %2074 = vmatpush1.msra.mxu0 %v1971
        %2075 = vmatprep.subr.mxu0 0.0
        %2076 = vmatpush1.msra.mxu0 %v1972
        %2077 = vmatprep.subr.mxu0 0.0
        %2078 = vmatpush1.msra.mxu0 %v1973
        %2079 = vmatprep.subr.mxu0 0.0
        %2080 = vmatpush1.msra.mxu0 %v1974
        %2081 = vmatprep.subr.mxu0 0.0
        %2082 = vmatpush1.msra.mxu0 %v1975
        %2083 = vmatprep.subr.mxu0 0.0
        %2084 = vmatpush1.msra.mxu0 %v1976
        %2085 = vmatprep.subr.mxu0 0.0
        %2086 = vmatpush1.msra.mxu0 %v1977
        %2087 = vmatprep.subr.mxu0 0.0
        %2088 = vmatpush1.msra.mxu0 0.0
        %2089 = vmatprep.subr.mxu0 0.0
        %2090 = vmatpush1.msra.mxu0 0.0
        %2091 = vmatprep.subr.mxu0 0.0
        %2092 = vmatpush1.msra.mxu0 0.0
        %2093 = vmatprep.subr.mxu0 0.0
        %2094 = vmatpush1.msra.mxu0 0.0
        %2095 = vmatprep.subr.mxu0 0.0
        %2096 = vmatpush1.msra.mxu0 0.0
        %2097 = vmatprep.subr.mxu0 0.0
        %2098 = vmatpush1.msra.mxu0 0.0
        %2099 = vmatprep.subr.mxu0 0.0
        %2100 = vmatpush1.msra.mxu0 0.0
        %2101 = vmatprep.subr.mxu0 0.0
        %2102 = vmatpush1.msra.mxu0 0.0
        %2103 = vmatprep.subr.mxu0 0.0
        %2104 = vmatpush1.msra.mxu0 0.0
        %2105 = vmatprep.subr.mxu0 0.0
        %2106 = vmatpush1.msra.mxu0 0.0
        %2107 = vmatprep.subr.mxu0 0.0
        %2108 = vmatpush1.msra.mxu0 0.0
        %2109 = vmatprep.subr.mxu0 0.0
        %2110 = vmatpush1.msra.mxu0 0.0
        %2111 = vmatprep.subr.mxu0 0.0
        %2112 = vmatpush1.msra.mxu0 0.0
        %2113 = vmatprep.subr.mxu0 0.0
        %2114 = vmatpush1.msra.mxu0 0.0
        %2115 = vmatprep.subr.mxu0 0.0
        %2116 = vmatpush1.msra.mxu0 0.0
        %2117 = vmatprep.subr.mxu0 0.0
        %2118 = vmatpush1.msra.mxu0 0.0
        %2119 = vmatprep.mubr.f32.mxu0 0.0
        %2120 = vmatmul.mubr.f32.gmra.mrb[0].mxu0 %v2054
        %v2121 = vpop.f32.mrb[0].mxu0
        %v2122 = vadd.f32 0.0, %v2121
        %v2123 = vpop.f32.mrb[0].mxu0
        %2124 = vdwg.mxu0
        %v2125 = vlaneseq
        %v2126 = vshrl.u32 %v2125, 7
        %v2127 = vsub.s32 0, %v2126
        %v2128 = vrot.slane %v2122, %v2127
        %v2129 = vsub.f32 %v1864, %v2128
        %v2130 = vmul.f32 %v2129, %v2129
        %v2131 = vrot.slane %v2130, 4
        %v2132 = vadd.f32 %v2130, %v2131
        %v2133 = vrot.slane %v2132, 2
        %v2134 = vadd.f32 %v2132, %v2133
        %v2135 = vrot.slane %v2134, 1
        %v2136 = vadd.f32 %v2134, %v2135
        %2137 = vmatprep.subr.mxu0 0.0
        %2138 = vmatpush1.msra.mxu0 %v1913
        %2139 = vmatprep.subr.mxu0 0.0
        %2140 = vmatpush1.msra.mxu0 %v1914
        %2141 = vmatprep.subr.mxu0 0.0
        %2142 = vmatpush1.msra.mxu0 %v1915
        %2143 = vmatprep.subr.mxu0 0.0
        %2144 = vmatpush1.msra.mxu0 %v1916
        %2145 = vmatprep.subr.mxu0 0.0
        %2146 = vmatpush1.msra.mxu0 %v1917
        %2147 = vmatprep.subr.mxu0 0.0
        %2148 = vmatpush1.msra.mxu0 %v1918
        %2149 = vmatprep.subr.mxu0 0.0
        %2150 = vmatpush1.msra.mxu0 %v1919
        %2151 = vmatprep.subr.mxu0 0.0
        %2152 = vmatpush1.msra.mxu0 %v1920
        %2153 = vmatprep.subr.mxu0 0.0
        %2154 = vmatpush1.msra.mxu0 %v1921
        %2155 = vmatprep.subr.mxu0 0.0
        %2156 = vmatpush1.msra.mxu0 %v1922
        %2157 = vmatprep.subr.mxu0 0.0
        %2158 = vmatpush1.msra.mxu0 %v1923
        %2159 = vmatprep.subr.mxu0 0.0
        %2160 = vmatpush1.msra.mxu0 %v1924
        %2161 = vmatprep.subr.mxu0 0.0
        %2162 = vmatpush1.msra.mxu0 %v1925
        %2163 = vmatprep.subr.mxu0 0.0
        %2164 = vmatpush1.msra.mxu0 %v1926
        %2165 = vmatprep.subr.mxu0 0.0
        %2166 = vmatpush1.msra.mxu0 %v1927
        %2167 = vmatprep.subr.mxu0 0.0
        %2168 = vmatpush1.msra.mxu0 %v1928
        %2169 = vmatprep.subr.mxu0 0.0
        %2170 = vmatpush1.msra.mxu0 0.0
        %2171 = vmatprep.subr.mxu0 0.0
        %2172 = vmatpush1.msra.mxu0 0.0
        %2173 = vmatprep.subr.mxu0 0.0
        %2174 = vmatpush1.msra.mxu0 0.0
        %2175 = vmatprep.subr.mxu0 0.0
        %2176 = vmatpush1.msra.mxu0 0.0
        %2177 = vmatprep.subr.mxu0 0.0
        %2178 = vmatpush1.msra.mxu0 0.0
        %2179 = vmatprep.subr.mxu0 0.0
        %2180 = vmatpush1.msra.mxu0 0.0
        %2181 = vmatprep.subr.mxu0 0.0
        %2182 = vmatpush1.msra.mxu0 0.0
        %2183 = vmatprep.subr.mxu0 0.0
        %2184 = vmatpush1.msra.mxu0 0.0
        %2185 = vmatprep.subr.mxu0 0.0
        %2186 = vmatpush1.msra.mxu0 0.0
        %2187 = vmatprep.subr.mxu0 0.0
        %2188 = vmatpush1.msra.mxu0 0.0
        %2189 = vmatprep.subr.mxu0 0.0
        %2190 = vmatpush1.msra.mxu0 0.0
        %2191 = vmatprep.subr.mxu0 0.0
        %2192 = vmatpush1.msra.mxu0 0.0
        %2193 = vmatprep.subr.mxu0 0.0
        %2194 = vmatpush1.msra.mxu0 0.0
        %2195 = vmatprep.subr.mxu0 0.0
        %2196 = vmatpush1.msra.mxu0 0.0
        %2197 = vmatprep.subr.mxu0 0.0
        %2198 = vmatpush1.msra.mxu0 0.0
        %2199 = vmatprep.subr.mxu0 0.0
        %2200 = vmatpush1.msra.mxu0 0.0
        %2201 = vmatprep.mubr.f32.mxu0 0.0
        %2202 = vmatmul.mubr.f32.gmra.mrb[0].mxu0 %v2136
        %v2203 = vpop.f32.mrb[0].mxu0
        %v2204 = vadd.f32 0.0, %v2203
        %v2205 = vpop.f32.mrb[0].mxu0
        %2206 = vdwg.mxu0
        %v2207 = vmul.f32 %v2204, 0.015873017
        %v2208 = vrsqrt.pop %v2207
        %v2209 = vmul.f32 %v2207, %v2208
        %vm2210 = vcmp.eq.f32.partialorder %v2207, inf
        %v2211 = vsel %vm2210, %v2207, %v2209
        %vm2212 = vcmp.eq.f32.partialorder %v2207, 0.0
        %v2213 = vand.u32 %v2207, 2147483648
        %v2214 = vsel %vm2212, %v2213, %v2211
        %vm2215 = vcmask 64512
        %v2216 = vsel %vm2215, %v1035, 0
        %2218 = vmatprep.subr.mxu0 0.0
        %2219 = vmatpush1.msra.mxu0 %v1864
        %2220 = vmatprep.subr.mxu0 0.0
        %2221 = vmatpush1.msra.mxu0 0.0
        %2222 = vmatprep.subr.mxu0 0.0
        %2223 = vmatpush1.msra.mxu0 0.0
        %2224 = vmatprep.subr.mxu0 0.0
        %2225 = vmatpush1.msra.mxu0 0.0
        %2226 = vmatprep.subr.mxu0 0.0
        %2227 = vmatpush1.msra.mxu0 0.0
        %2228 = vmatprep.subr.mxu0 0.0
        %2229 = vmatpush1.msra.mxu0 0.0
        %2230 = vmatprep.subr.mxu0 0.0
        %2231 = vmatpush1.msra.mxu0 0.0
        %2232 = vmatprep.subr.mxu0 0.0
        %2233 = vmatpush1.msra.mxu0 0.0
        %2234 = vmatprep.subr.mxu0 0.0
        %2235 = vmatpush1.msra.mxu0 0.0
        %2236 = vmatprep.subr.mxu0 0.0
        %2237 = vmatpush1.msra.mxu0 0.0
        %2238 = vmatprep.subr.mxu0 0.0
        %2239 = vmatpush1.msra.mxu0 0.0
        %2240 = vmatprep.subr.mxu0 0.0
        %2241 = vmatpush1.msra.mxu0 0.0
        %2242 = vmatprep.subr.mxu0 0.0
        %2243 = vmatpush1.msra.mxu0 0.0
        %2244 = vmatprep.subr.mxu0 0.0
        %2245 = vmatpush1.msra.mxu0 0.0
        %2246 = vmatprep.subr.mxu0 0.0
        %2247 = vmatpush1.msra.mxu0 0.0
        %2248 = vmatprep.subr.mxu0 0.0
        %2249 = vmatpush1.msra.mxu0 0.0
        %2250 = vmatprep.subr.mxu0 0.0
        %2251 = vmatpush1.msra.mxu0 0.0
        %2252 = vmatprep.subr.mxu0 0.0
        %2253 = vmatpush1.msra.mxu0 0.0
        %2254 = vmatprep.subr.mxu0 0.0
        %2255 = vmatpush1.msra.mxu0 0.0
        %2256 = vmatprep.subr.mxu0 0.0
        %2257 = vmatpush1.msra.mxu0 0.0
        %2258 = vmatprep.subr.mxu0 0.0
        %2259 = vmatpush1.msra.mxu0 0.0
        %2260 = vmatprep.subr.mxu0 0.0
        %2261 = vmatpush1.msra.mxu0 0.0
        %2262 = vmatprep.subr.mxu0 0.0
        %2263 = vmatpush1.msra.mxu0 0.0
        %2264 = vmatprep.subr.mxu0 0.0
        %2265 = vmatpush1.msra.mxu0 0.0
        %2266 = vmatprep.subr.mxu0 0.0
        %2267 = vmatpush1.msra.mxu0 0.0
        %2268 = vmatprep.subr.mxu0 0.0
        %2269 = vmatpush1.msra.mxu0 0.0
        %2270 = vmatprep.subr.mxu0 0.0
        %2271 = vmatpush1.msra.mxu0 0.0
        %2272 = vmatprep.subr.mxu0 0.0
        %2273 = vmatpush1.msra.mxu0 0.0
        %2274 = vmatprep.subr.mxu0 0.0
        %2275 = vmatpush1.msra.mxu0 0.0
        %2276 = vmatprep.subr.mxu0 0.0
        %2277 = vmatpush1.msra.mxu0 0.0
        %2278 = vmatprep.subr.mxu0 0.0
        %2279 = vmatpush1.msra.mxu0 0.0
        %2280 = vmatprep.subr.mxu0 0.0
        %2281 = vmatpush1.msra.mxu0 0.0
        %2282 = vmatprep.mubr.f32.mxu0 0.0
        %2283 = vmatmul.mubr.f32.gmra.mrb[0].mxu0 %v2216
        %v2284 = vpop.f32.mrb[0].mxu0
        %v2285 = vadd.f32 0.0, %v2284
        %v2286 = vpop.f32.mrb[0].mxu0
        %2287 = vdwg.mxu0
        %v2288 = vsel %vm2215, %v1039, 0
        %2290 = vmatprep.subr.mxu0 0.0
        %2291 = vmatpush1.msra.mxu0 %v1864
        %2292 = vmatprep.subr.mxu0 0.0
        %2293 = vmatpush1.msra.mxu0 0.0
        %2294 = vmatprep.subr.mxu0 0.0
        %2295 = vmatpush1.msra.mxu0 0.0
        %2296 = vmatprep.subr.mxu0 0.0
        %2297 = vmatpush1.msra.mxu0 0.0
        %2298 = vmatprep.subr.mxu0 0.0
        %2299 = vmatpush1.msra.mxu0 0.0
        %2300 = vmatprep.subr.mxu0 0.0
        %2301 = vmatpush1.msra.mxu0 0.0
        %2302 = vmatprep.subr.mxu0 0.0
        %2303 = vmatpush1.msra.mxu0 0.0
        %2304 = vmatprep.subr.mxu0 0.0
        %2305 = vmatpush1.msra.mxu0 0.0
        %2306 = vmatprep.subr.mxu0 0.0
        %2307 = vmatpush1.msra.mxu0 0.0
        %2308 = vmatprep.subr.mxu0 0.0
        %2309 = vmatpush1.msra.mxu0 0.0
        %2310 = vmatprep.subr.mxu0 0.0
        %2311 = vmatpush1.msra.mxu0 0.0
        %2312 = vmatprep.subr.mxu0 0.0
        %2313 = vmatpush1.msra.mxu0 0.0
        %2314 = vmatprep.subr.mxu0 0.0
        %2315 = vmatpush1.msra.mxu0 0.0
        %2316 = vmatprep.subr.mxu0 0.0
        %2317 = vmatpush1.msra.mxu0 0.0
        %2318 = vmatprep.subr.mxu0 0.0
        %2319 = vmatpush1.msra.mxu0 0.0
        %2320 = vmatprep.subr.mxu0 0.0
        %2321 = vmatpush1.msra.mxu0 0.0
        %2322 = vmatprep.subr.mxu0 0.0
        %2323 = vmatpush1.msra.mxu0 0.0
        %2324 = vmatprep.subr.mxu0 0.0
        %2325 = vmatpush1.msra.mxu0 0.0
        %2326 = vmatprep.subr.mxu0 0.0
        %2327 = vmatpush1.msra.mxu0 0.0
        %2328 = vmatprep.subr.mxu0 0.0
        %2329 = vmatpush1.msra.mxu0 0.0
        %2330 = vmatprep.subr.mxu0 0.0
        %2331 = vmatpush1.msra.mxu0 0.0
        %2332 = vmatprep.subr.mxu0 0.0
        %2333 = vmatpush1.msra.mxu0 0.0
        %2334 = vmatprep.subr.mxu0 0.0
        %2335 = vmatpush1.msra.mxu0 0.0
        %2336 = vmatprep.subr.mxu0 0.0
        %2337 = vmatpush1.msra.mxu0 0.0
        %2338 = vmatprep.subr.mxu0 0.0
        %2339 = vmatpush1.msra.mxu0 0.0
        %2340 = vmatprep.subr.mxu0 0.0
        %2341 = vmatpush1.msra.mxu0 0.0
        %2342 = vmatprep.subr.mxu0 0.0
        %2343 = vmatpush1.msra.mxu0 0.0
        %2344 = vmatprep.subr.mxu0 0.0
        %2345 = vmatpush1.msra.mxu0 0.0
        %2346 = vmatprep.subr.mxu0 0.0
        %2347 = vmatpush1.msra.mxu0 0.0
        %2348 = vmatprep.subr.mxu0 0.0
        %2349 = vmatpush1.msra.mxu0 0.0
        %2350 = vmatprep.subr.mxu0 0.0
        %2351 = vmatpush1.msra.mxu0 0.0
        %2352 = vmatprep.subr.mxu0 0.0
        %2353 = vmatpush1.msra.mxu0 0.0
        %2354 = vmatprep.mubr.f32.mxu0 0.0
        %2355 = vmatmul.mubr.f32.gmra.mrb[0].mxu0 %v2288
        %v2356 = vpop.f32.mrb[0].mxu0
        %v2357 = vadd.f32 0.0, %v2356
        %v2358 = vpop.f32.mrb[0].mxu0
        %2359 = vdwg.mxu0
        %v2360 = vmax.f32 %v2285, %v2357
        %v2361 = vsub.s32 %v1189, %v1929
        %vm2362 = vcmp.eq.s32.totalorder %v660, %v2361
        %vm2363 = vcmp.eq.s32.totalorder %v661, %v2361
        %vm2364 = vcmp.eq.s32.totalorder %v662, %v2361
        %vm2365 = vcmp.eq.s32.totalorder %v663, %v2361
        %vm2366 = vcmp.eq.s32.totalorder %v664, %v2361
        %vm2367 = vcmp.eq.s32.totalorder %v665, %v2361
        %vm2368 = vcmp.eq.s32.totalorder %v666, %v2361
        %vm2369 = vcmp.eq.s32.totalorder %v667, %v2361
        %vm2370 = vcmp.eq.s32.totalorder %v668, %v2361
        %vm2371 = vcmp.eq.s32.totalorder %v669, %v2361
        %vm2372 = vcmp.eq.s32.totalorder %v670, %v2361
        %vm2373 = vcmp.eq.s32.totalorder %v671, %v2361
        %vm2374 = vcmp.eq.s32.totalorder %v672, %v2361
        %vm2375 = vcmp.eq.s32.totalorder %v673, %v2361
        %vm2376 = vcmp.eq.s32.totalorder %v674, %v2361
        %vm2377 = vcmp.eq.s32.totalorder %v675, %v2361
        %vm2378 = vmand %vm2362, %vm1188
        %vm2379 = vmand %vm2363, %vm1188
        %vm2380 = vmand %vm2364, %vm1188
        %vm2381 = vmand %vm2365, %vm1188
        %vm2382 = vmand %vm2366, %vm1188
        %vm2383 = vmand %vm2367, %vm1188
        %vm2384 = vmand %vm2368, %vm1188
        %vm2385 = vmand %vm2369, %vm1188
        %vm2386 = vmand %vm2370, %vm1188
        %vm2387 = vmand %vm2371, %vm1188
        %vm2388 = vmand %vm2372, %vm1188
        %vm2389 = vmand %vm2373, %vm1188
        %vm2390 = vmand %vm2374, %vm1188
        %vm2391 = vmand %vm2375, %vm1188
        %vm2392 = vmand %vm2376, %vm1188
        %vm2393 = vmand %vm2377, %vm1188
        %v2394 = vsel %vm2378, 1, 0
        %v2395 = vsel %vm2379, 1, 0
        %v2396 = vsel %vm2380, 1, 0
        %v2397 = vsel %vm2381, 1, 0
        %v2398 = vsel %vm2382, 1, 0
        %v2399 = vsel %vm2383, 1, 0
        %v2400 = vsel %vm2384, 1, 0
        %v2401 = vsel %vm2385, 1, 0
        %v2402 = vsel %vm2386, 1, 0
        %v2403 = vsel %vm2387, 1, 0
        %v2404 = vsel %vm2388, 1, 0
        %v2405 = vsel %vm2389, 1, 0
        %v2406 = vsel %vm2390, 1, 0
        %v2407 = vsel %vm2391, 1, 0
        %v2408 = vsel %vm2392, 1, 0
        %v2409 = vsel %vm2393, 1, 0
        %v2410 = vcvt.s32.f32 %v2394
        %v2411 = vcvt.s32.f32 %v2395
        %v2412 = vcvt.s32.f32 %v2396
        %v2413 = vcvt.s32.f32 %v2397
        %v2414 = vcvt.s32.f32 %v2398
        %v2415 = vcvt.s32.f32 %v2399
        %v2416 = vcvt.s32.f32 %v2400
        %v2417 = vcvt.s32.f32 %v2401
        %v2418 = vcvt.s32.f32 %v2402
        %v2419 = vcvt.s32.f32 %v2403
        %v2420 = vcvt.s32.f32 %v2404
        %v2421 = vcvt.s32.f32 %v2405
        %v2422 = vcvt.s32.f32 %v2406
        %v2423 = vcvt.s32.f32 %v2407
        %v2424 = vcvt.s32.f32 %v2408
        %v2425 = vcvt.s32.f32 %v2409
        %v2426 = vadd.s32 %v2361, 16
        %vm2427 = vcmp.eq.s32.totalorder %v660, %v2426
        %vm2428 = vcmp.eq.s32.totalorder %v661, %v2426
        %vm2429 = vcmp.eq.s32.totalorder %v662, %v2426
        %vm2430 = vcmp.eq.s32.totalorder %v663, %v2426
        %vm2431 = vcmp.eq.s32.totalorder %v664, %v2426
        %vm2432 = vcmp.eq.s32.totalorder %v665, %v2426
        %vm2433 = vcmp.eq.s32.totalorder %v666, %v2426
        %vm2434 = vcmp.eq.s32.totalorder %v667, %v2426
        %vm2435 = vcmp.eq.s32.totalorder %v668, %v2426
        %vm2436 = vcmp.eq.s32.totalorder %v669, %v2426
        %vm2437 = vcmp.eq.s32.totalorder %v670, %v2426
        %vm2438 = vcmp.eq.s32.totalorder %v671, %v2426
        %vm2439 = vcmp.eq.s32.totalorder %v672, %v2426
        %vm2440 = vcmp.eq.s32.totalorder %v673, %v2426
        %vm2441 = vcmp.eq.s32.totalorder %v674, %v2426
        %vm2442 = vcmp.eq.s32.totalorder %v675, %v2426
        %vm2443 = vmand %vm2427, %vm1188
        %vm2444 = vmand %vm2428, %vm1188
        %vm2445 = vmand %vm2429, %vm1188
        %vm2446 = vmand %vm2430, %vm1188
        %vm2447 = vmand %vm2431, %vm1188
        %vm2448 = vmand %vm2432, %vm1188
        %vm2449 = vmand %vm2433, %vm1188
        %vm2450 = vmand %vm2434, %vm1188
        %vm2451 = vmand %vm2435, %vm1188
        %vm2452 = vmand %vm2436, %vm1188
        %vm2453 = vmand %vm2437, %vm1188
        %vm2454 = vmand %vm2438, %vm1188
        %vm2455 = vmand %vm2439, %vm1188
        %vm2456 = vmand %vm2440, %vm1188
        %vm2457 = vmand %vm2441, %vm1188
        %vm2458 = vmand %vm2442, %vm1188
        %v2459 = vsel %vm2443, 1, 0
        %v2460 = vsel %vm2444, 1, 0
        %v2461 = vsel %vm2445, 1, 0
        %v2462 = vsel %vm2446, 1, 0
        %v2463 = vsel %vm2447, 1, 0
        %v2464 = vsel %vm2448, 1, 0
        %v2465 = vsel %vm2449, 1, 0
        %v2466 = vsel %vm2450, 1, 0
        %v2467 = vsel %vm2451, 1, 0
        %v2468 = vsel %vm2452, 1, 0
        %v2469 = vsel %vm2453, 1, 0
        %v2470 = vsel %vm2454, 1, 0
        %v2471 = vsel %vm2455, 1, 0
        %v2472 = vsel %vm2456, 1, 0
        %v2473 = vsel %vm2457, 1, 0
        %v2474 = vsel %vm2458, 1, 0
        %v2475 = vcvt.s32.f32 %v2459
        %v2476 = vcvt.s32.f32 %v2460
        %v2477 = vcvt.s32.f32 %v2461
        %v2478 = vcvt.s32.f32 %v2462
        %v2479 = vcvt.s32.f32 %v2463
        %v2480 = vcvt.s32.f32 %v2464
        %v2481 = vcvt.s32.f32 %v2465
        %v2482 = vcvt.s32.f32 %v2466
        %v2483 = vcvt.s32.f32 %v2467
        %v2484 = vcvt.s32.f32 %v2468
        %v2485 = vcvt.s32.f32 %v2469
        %v2486 = vcvt.s32.f32 %v2470
        %v2487 = vcvt.s32.f32 %v2471
        %v2488 = vcvt.s32.f32 %v2472
        %v2489 = vcvt.s32.f32 %v2473
        %v2490 = vcvt.s32.f32 %v2474
        %2491 = vmatprep.subr.mxu0 0.0
        %2492 = vmatpush1.msra.mxu0 %v2410
        %2493 = vmatprep.subr.mxu0 0.0
        %2494 = vmatpush1.msra.mxu0 %v2411
        %2495 = vmatprep.subr.mxu0 0.0
        %2496 = vmatpush1.msra.mxu0 %v2412
        %2497 = vmatprep.subr.mxu0 0.0
        %2498 = vmatpush1.msra.mxu0 %v2413
        %2499 = vmatprep.subr.mxu0 0.0
        %2500 = vmatpush1.msra.mxu0 %v2414
        %2501 = vmatprep.subr.mxu0 0.0
        %2502 = vmatpush1.msra.mxu0 %v2415
        %2503 = vmatprep.subr.mxu0 0.0
        %2504 = vmatpush1.msra.mxu0 %v2416
        %2505 = vmatprep.subr.mxu0 0.0
        %2506 = vmatpush1.msra.mxu0 %v2417
        %2507 = vmatprep.subr.mxu0 0.0
        %2508 = vmatpush1.msra.mxu0 %v2418
        %2509 = vmatprep.subr.mxu0 0.0
        %2510 = vmatpush1.msra.mxu0 %v2419
        %2511 = vmatprep.subr.mxu0 0.0
        %2512 = vmatpush1.msra.mxu0 %v2420
        %2513 = vmatprep.subr.mxu0 0.0
        %2514 = vmatpush1.msra.mxu0 %v2421
        %2515 = vmatprep.subr.mxu0 0.0
        %2516 = vmatpush1.msra.mxu0 %v2422
        %2517 = vmatprep.subr.mxu0 0.0
        %2518 = vmatpush1.msra.mxu0 %v2423
        %2519 = vmatprep.subr.mxu0 0.0
        %2520 = vmatpush1.msra.mxu0 %v2424
        %2521 = vmatprep.subr.mxu0 0.0
        %2522 = vmatpush1.msra.mxu0 %v2425
        %2523 = vmatprep.subr.mxu0 0.0
        %2524 = vmatpush1.msra.mxu0 0.0
        %2525 = vmatprep.subr.mxu0 0.0
        %2526 = vmatpush1.msra.mxu0 0.0
        %2527 = vmatprep.subr.mxu0 0.0
        %2528 = vmatpush1.msra.mxu0 0.0
        %2529 = vmatprep.subr.mxu0 0.0
        %2530 = vmatpush1.msra.mxu0 0.0
        %2531 = vmatprep.subr.mxu0 0.0
        %2532 = vmatpush1.msra.mxu0 0.0
        %2533 = vmatprep.subr.mxu0 0.0
        %2534 = vmatpush1.msra.mxu0 0.0
        %2535 = vmatprep.subr.mxu0 0.0
        %2536 = vmatpush1.msra.mxu0 0.0
        %2537 = vmatprep.subr.mxu0 0.0
        %2538 = vmatpush1.msra.mxu0 0.0
        %2539 = vmatprep.subr.mxu0 0.0
        %2540 = vmatpush1.msra.mxu0 0.0
        %2541 = vmatprep.subr.mxu0 0.0
        %2542 = vmatpush1.msra.mxu0 0.0
        %2543 = vmatprep.subr.mxu0 0.0
        %2544 = vmatpush1.msra.mxu0 0.0
        %2545 = vmatprep.subr.mxu0 0.0
        %2546 = vmatpush1.msra.mxu0 0.0
        %2547 = vmatprep.subr.mxu0 0.0
        %2548 = vmatpush1.msra.mxu0 0.0
        %2549 = vmatprep.subr.mxu0 0.0
        %2550 = vmatpush1.msra.mxu0 0.0
        %2551 = vmatprep.subr.mxu0 0.0
        %2552 = vmatpush1.msra.mxu0 0.0
        %2553 = vmatprep.subr.mxu0 0.0
        %2554 = vmatpush1.msra.mxu0 0.0
        %2555 = vmatprep.mubr.f32.mxu0 0.0
        %2556 = vmatmul.mubr.f32.gmra.mrb[0].mxu0 %v2360
        %v2557 = vpop.f32.mrb[0].mxu0
        %v2558 = vadd.f32 0.0, %v2557
        %v2559 = vpop.f32.mrb[0].mxu0
        %2560 = vdwg.mxu0
        %2561 = vmatprep.subr.mxu0 0.0
        %2562 = vmatpush1.msra.mxu0 %v2475
        %2563 = vmatprep.subr.mxu0 0.0
        %2564 = vmatpush1.msra.mxu0 %v2476
        %2565 = vmatprep.subr.mxu0 0.0
        %2566 = vmatpush1.msra.mxu0 %v2477
        %2567 = vmatprep.subr.mxu0 0.0
        %2568 = vmatpush1.msra.mxu0 %v2478
        %2569 = vmatprep.subr.mxu0 0.0
        %2570 = vmatpush1.msra.mxu0 %v2479
        %2571 = vmatprep.subr.mxu0 0.0
        %2572 = vmatpush1.msra.mxu0 %v2480
        %2573 = vmatprep.subr.mxu0 0.0
        %2574 = vmatpush1.msra.mxu0 %v2481
        %2575 = vmatprep.subr.mxu0 0.0
        %2576 = vmatpush1.msra.mxu0 %v2482
        %2577 = vmatprep.subr.mxu0 0.0
        %2578 = vmatpush1.msra.mxu0 %v2483
        %2579 = vmatprep.subr.mxu0 0.0
        %2580 = vmatpush1.msra.mxu0 %v2484
        %2581 = vmatprep.subr.mxu0 0.0
        %2582 = vmatpush1.msra.mxu0 %v2485
        %2583 = vmatprep.subr.mxu0 0.0
        %2584 = vmatpush1.msra.mxu0 %v2486
        %2585 = vmatprep.subr.mxu0 0.0
        %2586 = vmatpush1.msra.mxu0 %v2487
        %2587 = vmatprep.subr.mxu0 0.0
        %2588 = vmatpush1.msra.mxu0 %v2488
        %2589 = vmatprep.subr.mxu0 0.0
        %2590 = vmatpush1.msra.mxu0 %v2489
        %2591 = vmatprep.subr.mxu0 0.0
        %2592 = vmatpush1.msra.mxu0 %v2490
        %2593 = vmatprep.subr.mxu0 0.0
        %2594 = vmatpush1.msra.mxu0 0.0
        %2595 = vmatprep.subr.mxu0 0.0
        %2596 = vmatpush1.msra.mxu0 0.0
        %2597 = vmatprep.subr.mxu0 0.0
        %2598 = vmatpush1.msra.mxu0 0.0
        %2599 = vmatprep.subr.mxu0 0.0
        %2600 = vmatpush1.msra.mxu0 0.0
        %2601 = vmatprep.subr.mxu0 0.0
        %2602 = vmatpush1.msra.mxu0 0.0
        %2603 = vmatprep.subr.mxu0 0.0
        %2604 = vmatpush1.msra.mxu0 0.0
        %2605 = vmatprep.subr.mxu0 0.0
        %2606 = vmatpush1.msra.mxu0 0.0
        %2607 = vmatprep.subr.mxu0 0.0
        %2608 = vmatpush1.msra.mxu0 0.0
        %2609 = vmatprep.subr.mxu0 0.0
        %2610 = vmatpush1.msra.mxu0 0.0
        %2611 = vmatprep.subr.mxu0 0.0
        %2612 = vmatpush1.msra.mxu0 0.0
        %2613 = vmatprep.subr.mxu0 0.0
        %2614 = vmatpush1.msra.mxu0 0.0
        %2615 = vmatprep.subr.mxu0 0.0
        %2616 = vmatpush1.msra.mxu0 0.0
        %2617 = vmatprep.subr.mxu0 0.0
        %2618 = vmatpush1.msra.mxu0 0.0
        %2619 = vmatprep.subr.mxu0 0.0
        %2620 = vmatpush1.msra.mxu0 0.0
        %2621 = vmatprep.subr.mxu0 0.0
        %2622 = vmatpush1.msra.mxu0 0.0
        %2623 = vmatprep.subr.mxu0 0.0
        %2624 = vmatpush1.msra.mxu0 0.0
        %2625 = vmatprep.mubr.f32.mxu0 0.0
        %2626 = vmatmul.mubr.f32.gmra.mrb[0].mxu0 %v2360
        %v2627 = vpop.f32.mrb[0].mxu0
        %v2628 = vadd.f32 0.0, %v2627
        %v2629 = vpop.f32.mrb[0].mxu0
        %2630 = vdwg.mxu0
        %v2631 = vmax.f32 %v2558, %v2628
        %s2632 = scalar_lea.vmem [#allocation4], 1536
        %v2633 = vld [vmem:[%s2632] sm:$0xff]
        %v2634 = vld [vmem:[%s2632 + $0x8] sm:$0xff]
        %v2635 = vld [vmem:[%s2632 + $0x10] sm:$0xff]
        %v2636 = vld [vmem:[%s2632 + $0x18] sm:$0xff]
        %v2637 = vld [vmem:[%s2632 + $0x20] sm:$0xff]
        %v2638 = vld [vmem:[%s2632 + $0x28] sm:$0xff]
        %v2639 = vld [vmem:[%s2632 + $0x30] sm:$0xff]
        %v2640 = vld [vmem:[%s2632 + $0x38] sm:$0xff]
        %v2641 = vld [vmem:[%s2632 + $0x40] sm:$0xff]
        %v2642 = vld [vmem:[%s2632 + $0x48] sm:$0xff]
        %v2643 = vld [vmem:[%s2632 + $0x50] sm:$0xff]
        %v2644 = vld [vmem:[%s2632 + $0x58] sm:$0xff]
        %v2645 = vld [vmem:[%s2632 + $0x60] sm:$0xff]
        %v2646 = vld [vmem:[%s2632 + $0x68] sm:$0xff]
        %v2647 = vld [vmem:[%s2632 + $0x70] sm:$0xff]
        %v2648 = vld [vmem:[%s2632 + $0x78] sm:$0xff]
        %v2649 = vld [vmem:[%s2632 + $0x80] sm:$0xff]
        %v2650 = vld [vmem:[%s2632 + $0x88] sm:$0xff]
        %v2651 = vld [vmem:[%s2632 + $0x90] sm:$0xff]
        %v2652 = vld [vmem:[%s2632 + $0x98] sm:$0xff]
        %v2653 = vld [vmem:[%s2632 + $0xa0] sm:$0xff]
        %v2654 = vld [vmem:[%s2632 + $0xa8] sm:$0xff]
        %v2655 = vld [vmem:[%s2632 + $0xb0] sm:$0xff]
        %v2656 = vld [vmem:[%s2632 + $0xb8] sm:$0xff]
        %v2657 = vld [vmem:[%s2632 + $0xc0] sm:$0xff]
        %v2658 = vld [vmem:[%s2632 + $0xc8] sm:$0xff]
        %v2659 = vld [vmem:[%s2632 + $0xd0] sm:$0xff]
        %v2660 = vld [vmem:[%s2632 + $0xd8] sm:$0xff]
        %v2661 = vld [vmem:[%s2632 + $0xe0] sm:$0xff]
        %v2662 = vld [vmem:[%s2632 + $0xe8] sm:$0xff]
        %v2663 = vld [vmem:[%s2632 + $0xf0] sm:$0xff]
        %v2664 = vld [vmem:[%s2632 + $0xf8] sm:$0xff]
        %v2665 = vld [vmem:[%s2632 + $0x100] sm:$0xff]
        %v2666 = vld [vmem:[%s2632 + $0x108] sm:$0xff]
        %v2667 = vld [vmem:[%s2632 + $0x110] sm:$0xff]
        %v2668 = vld [vmem:[%s2632 + $0x118] sm:$0xff]
        %v2669 = vld [vmem:[%s2632 + $0x120] sm:$0xff]
        %v2670 = vld [vmem:[%s2632 + $0x128] sm:$0xff]
        %v2671 = vld [vmem:[%s2632 + $0x130] sm:$0xff]
        %v2672 = vld [vmem:[%s2632 + $0x138] sm:$0xff]
        %v2673 = vld [vmem:[%s2632 + $0x140] sm:$0xff]
        %v2674 = vld [vmem:[%s2632 + $0x148] sm:$0xff]
        %v2675 = vld [vmem:[%s2632 + $0x150] sm:$0xff]
        %v2676 = vld [vmem:[%s2632 + $0x158] sm:$0xff]
        %v2677 = vld [vmem:[%s2632 + $0x160] sm:$0xff]
        %v2678 = vld [vmem:[%s2632 + $0x168] sm:$0xff]
        %v2679 = vld [vmem:[%s2632 + $0x170] sm:$0xff]
        %v2680 = vld [vmem:[%s2632 + $0x178] sm:$0xff]
        %v2681 = vld [vmem:[#allocation6 + $0x4] sm:$0x1]
        %v2683 = vrot.slane %v2631, 7
        %v2685 = vsel %vm269, 0.0, %v2683
        %v2686 = vrot.slane %v2631, 1
        %vm2688 = vcmask 1042432
        %v2689 = vsel %vm2688, %v2686, 0.0
        %v2690 = vlaneseq
        %v2691 = vshrl.u32 %v2690, 7
        %v2692 = vsub.s32 0, %v2691
        %v2693 = vrot.slane %v2681, %v2692
        %2694 = vmatprep.subr.mxu0 0.0
        %2695 = vmatpush1.msra.mxu0 %v2633
        %2696 = vmatprep.subr.mxu0 0.0
        %2697 = vmatpush1.msra.mxu0 %v2634
        %2698 = vmatprep.subr.mxu0 0.0
        %2699 = vmatpush1.msra.mxu0 %v2635
        %2700 = vmatprep.subr.mxu0 0.0
        %2701 = vmatpush1.msra.mxu0 %v2636
        %2702 = vmatprep.subr.mxu0 0.0
        %2703 = vmatpush1.msra.mxu0 %v2637
        %2704 = vmatprep.subr.mxu0 0.0
        %2705 = vmatpush1.msra.mxu0 %v2638
        %2706 = vmatprep.subr.mxu0 0.0
        %2707 = vmatpush1.msra.mxu0 %v2639
        %2708 = vmatprep.subr.mxu0 0.0
        %2709 = vmatpush1.msra.mxu0 %v2640
        %2710 = vmatprep.subr.mxu0 0.0
        %2711 = vmatpush1.msra.mxu0 %v2641
        %2712 = vmatprep.subr.mxu0 0.0
        %2713 = vmatpush1.msra.mxu0 %v2642
        %2714 = vmatprep.subr.mxu0 0.0
        %2715 = vmatpush1.msra.mxu0 %v2643
        %2716 = vmatprep.subr.mxu0 0.0
        %2717 = vmatpush1.msra.mxu0 %v2644
        %2718 = vmatprep.subr.mxu0 0.0
        %2719 = vmatpush1.msra.mxu0 %v2645
        %2720 = vmatprep.subr.mxu0 0.0
        %2721 = vmatpush1.msra.mxu0 %v2646
        %2722 = vmatprep.subr.mxu0 0.0
        %2723 = vmatpush1.msra.mxu0 %v2647
        %2724 = vmatprep.subr.mxu0 0.0
        %2725 = vmatpush1.msra.mxu0 %v2648
        %2726 = vmatprep.subr.mxu0 0.0
        %2727 = vmatpush1.msra.mxu0 %v2649
        %2728 = vmatprep.subr.mxu0 0.0
        %2729 = vmatpush1.msra.mxu0 %v2650
        %2730 = vmatprep.subr.mxu0 0.0
        %2731 = vmatpush1.msra.mxu0 %v2651
        %2732 = vmatprep.subr.mxu0 0.0
        %2733 = vmatpush1.msra.mxu0 %v2652
        %2734 = vmatprep.subr.mxu0 0.0
        %2735 = vmatpush1.msra.mxu0 %v2653
        %2736 = vmatprep.subr.mxu0 0.0
        %2737 = vmatpush1.msra.mxu0 %v2654
        %2738 = vmatprep.subr.mxu0 0.0
        %2739 = vmatpush1.msra.mxu0 %v2655
        %2740 = vmatprep.subr.mxu0 0.0
        %2741 = vmatpush1.msra.mxu0 %v2656
        %2742 = vmatprep.subr.mxu0 0.0
        %2743 = vmatpush1.msra.mxu0 %v2657
        %2744 = vmatprep.subr.mxu0 0.0
        %2745 = vmatpush1.msra.mxu0 %v2658
        %2746 = vmatprep.subr.mxu0 0.0
        %2747 = vmatpush1.msra.mxu0 %v2659
        %2748 = vmatprep.subr.mxu0 0.0
        %2749 = vmatpush1.msra.mxu0 %v2660
        %2750 = vmatprep.subr.mxu0 0.0
        %2751 = vmatpush1.msra.mxu0 %v2661
        %2752 = vmatprep.subr.mxu0 0.0
        %2753 = vmatpush1.msra.mxu0 %v2662
        %2754 = vmatprep.subr.mxu0 0.0
        %2755 = vmatpush1.msra.mxu0 %v2663
        %2756 = vmatprep.subr.mxu0 0.0
        %2757 = vmatpush1.msra.mxu0 %v2664
        %2758 = vmatprep.mubr.f32.mxu0 %v2631
        %2759 = vmatmul.mubr.f32.gmra.mrb[0].mxu0 %v2685
        %v2760 = vpop.f32.mrb[0].mxu0
        %v2761 = vadd.f32 %v2693, %v2760
        %v2762 = vpop.f32.mrb[0].mxu0
        %2763 = vdwg.mxu0
        %2764 = vmatprep.subr.mxu0 0.0
        %2765 = vmatpush1.msra.mxu0 %v2665
        %2766 = vmatprep.subr.mxu0 0.0
        %2767 = vmatpush1.msra.mxu0 %v2666
        %2768 = vmatprep.subr.mxu0 0.0
        %2769 = vmatpush1.msra.mxu0 %v2667
        %2770 = vmatprep.subr.mxu0 0.0
        %2771 = vmatpush1.msra.mxu0 %v2668
        %2772 = vmatprep.subr.mxu0 0.0
        %2773 = vmatpush1.msra.mxu0 %v2669
        %2774 = vmatprep.subr.mxu0 0.0
        %2775 = vmatpush1.msra.mxu0 %v2670
        %2776 = vmatprep.subr.mxu0 0.0
        %2777 = vmatpush1.msra.mxu0 %v2671
        %2778 = vmatprep.subr.mxu0 0.0
        %2779 = vmatpush1.msra.mxu0 %v2672
        %2780 = vmatprep.subr.mxu0 0.0
        %2781 = vmatpush1.msra.mxu0 %v2673
        %2782 = vmatprep.subr.mxu0 0.0
        %2783 = vmatpush1.msra.mxu0 %v2674
        %2784 = vmatprep.subr.mxu0 0.0
        %2785 = vmatpush1.msra.mxu0 %v2675
        %2786 = vmatprep.subr.mxu0 0.0
        %2787 = vmatpush1.msra.mxu0 %v2676
        %2788 = vmatprep.subr.mxu0 0.0
        %2789 = vmatpush1.msra.mxu0 %v2677
        %2790 = vmatprep.subr.mxu0 0.0
        %2791 = vmatpush1.msra.mxu0 %v2678
        %2792 = vmatprep.subr.mxu0 0.0
        %2793 = vmatpush1.msra.mxu0 %v2679
        %2794 = vmatprep.subr.mxu0 0.0
        %2795 = vmatpush1.msra.mxu0 %v2680
        %2796 = vmatprep.subr.mxu0 0.0
        %2797 = vmatpush1.msra.mxu0 0.0
        %2798 = vmatprep.subr.mxu0 0.0
        %2799 = vmatpush1.msra.mxu0 0.0
        %2800 = vmatprep.subr.mxu0 0.0
        %2801 = vmatpush1.msra.mxu0 0.0
        %2802 = vmatprep.subr.mxu0 0.0
        %2803 = vmatpush1.msra.mxu0 0.0
        %2804 = vmatprep.subr.mxu0 0.0
        %2805 = vmatpush1.msra.mxu0 0.0
        %2806 = vmatprep.subr.mxu0 0.0
        %2807 = vmatpush1.msra.mxu0 0.0
        %2808 = vmatprep.subr.mxu0 0.0
        %2809 = vmatpush1.msra.mxu0 0.0
        %2810 = vmatprep.subr.mxu0 0.0
        %2811 = vmatpush1.msra.mxu0 0.0
        %2812 = vmatprep.subr.mxu0 0.0
        %2813 = vmatpush1.msra.mxu0 0.0
        %2814 = vmatprep.subr.mxu0 0.0
        %2815 = vmatpush1.msra.mxu0 0.0
        %2816 = vmatprep.subr.mxu0 0.0
        %2817 = vmatpush1.msra.mxu0 0.0
        %2818 = vmatprep.subr.mxu0 0.0
        %2819 = vmatpush1.msra.mxu0 0.0
        %2820 = vmatprep.subr.mxu0 0.0
        %2821 = vmatpush1.msra.mxu0 0.0
        %2822 = vmatprep.subr.mxu0 0.0
        %2823 = vmatpush1.msra.mxu0 0.0
        %2824 = vmatprep.subr.mxu0 0.0
        %2825 = vmatpush1.msra.mxu0 0.0
        %2826 = vmatprep.subr.mxu0 0.0
        %2827 = vmatpush1.msra.mxu0 0.0
        %2828 = vmatprep.mubr.f32.mxu0 0.0
        %2829 = vmatmul.mubr.f32.gmra.mrb[0].mxu0 %v2689
        %v2830 = vpop.f32.mrb[0].mxu0
        %v2831 = vadd.f32 %v2761, %v2830
        %v2832 = vpop.f32.mrb[0].mxu0
        %2833 = vdwg.mxu0
        %v2834 = vmax.f32 %v2831, 0.0
        %s2835 = scalar_lea.vmem [#allocation4], 1920
        %v2836 = vld [vmem:[%s2835] sm:$0xff]
        %v2837 = vld [vmem:[%s2835 + $0x8] sm:$0xff]
        %v2838 = vld [vmem:[%s2835 + $0x10] sm:$0xff]
        %v2839 = vld [vmem:[%s2835 + $0x18] sm:$0xff]
        %v2840 = vld [vmem:[%s2835 + $0x20] sm:$0xff]
        %v2841 = vld [vmem:[%s2835 + $0x28] sm:$0xff]
        %v2842 = vld [vmem:[%s2835 + $0x30] sm:$0xff]
        %v2843 = vld [vmem:[%s2835 + $0x38] sm:$0xff]
        %v2844 = vld [vmem:[%s2835 + $0x40] sm:$0xff]
        %v2845 = vld [vmem:[%s2835 + $0x48] sm:$0xff]
        %v2846 = vld [vmem:[%s2835 + $0x50] sm:$0xff]
        %v2847 = vld [vmem:[%s2835 + $0x58] sm:$0xff]
        %v2848 = vld [vmem:[%s2835 + $0x60] sm:$0xff]
        %v2849 = vld [vmem:[%s2835 + $0x68] sm:$0xff]
        %v2850 = vld [vmem:[%s2835 + $0x70] sm:$0xff]
        %v2851 = vld [vmem:[%s2835 + $0x78] sm:$0xff]
        %v2852 = vld [vmem:[%s2835 + $0x80] sm:$0xff]
        %v2853 = vld [vmem:[%s2835 + $0x88] sm:$0xff]
        %v2854 = vld [vmem:[%s2835 + $0x90] sm:$0xff]
        %v2855 = vld [vmem:[%s2835 + $0x98] sm:$0xff]
        %v2856 = vld [vmem:[%s2835 + $0xa0] sm:$0xff]
        %v2857 = vld [vmem:[%s2835 + $0xa8] sm:$0xff]
        %v2858 = vld [vmem:[%s2835 + $0xb0] sm:$0xff]
        %v2859 = vld [vmem:[%s2835 + $0xb8] sm:$0xff]
        %v2860 = vld [vmem:[%s2835 + $0xc0] sm:$0xff]
        %v2861 = vld [vmem:[%s2835 + $0xc8] sm:$0xff]
        %v2862 = vld [vmem:[%s2835 + $0xd0] sm:$0xff]
        %v2863 = vld [vmem:[%s2835 + $0xd8] sm:$0xff]
        %v2864 = vld [vmem:[%s2835 + $0xe0] sm:$0xff]
        %v2865 = vld [vmem:[%s2835 + $0xe8] sm:$0xff]
        %v2866 = vld [vmem:[%s2835 + $0xf0] sm:$0xff]
        %v2867 = vld [vmem:[%s2835 + $0xf8] sm:$0xff]
        %v2868 = vld [vmem:[%s2835 + $0x100] sm:$0xff]
        %v2869 = vld [vmem:[%s2835 + $0x108] sm:$0xff]
        %v2870 = vld [vmem:[%s2835 + $0x110] sm:$0xff]
        %v2871 = vld [vmem:[%s2835 + $0x118] sm:$0xff]
        %v2872 = vld [vmem:[%s2835 + $0x120] sm:$0xff]
        %v2873 = vld [vmem:[%s2835 + $0x128] sm:$0xff]
        %v2874 = vld [vmem:[%s2835 + $0x130] sm:$0xff]
        %v2875 = vld [vmem:[%s2835 + $0x138] sm:$0xff]
        %v2876 = vld [vmem:[%s2835 + $0x140] sm:$0xff]
        %v2877 = vld [vmem:[%s2835 + $0x148] sm:$0xff]
        %v2878 = vld [vmem:[%s2835 + $0x150] sm:$0xff]
        %v2879 = vld [vmem:[%s2835 + $0x158] sm:$0xff]
        %v2880 = vld [vmem:[%s2835 + $0x160] sm:$0xff]
        %v2881 = vld [vmem:[%s2835 + $0x168] sm:$0xff]
        %v2882 = vld [vmem:[%s2835 + $0x170] sm:$0xff]
        %v2883 = vld [vmem:[%s2835 + $0x178] sm:$0xff]
        %v2884 = vld [vmem:[#allocation6 + $0x5] sm:$0x1]
        %v2886 = vrot.slane %v2834, 7
        %v2888 = vsel %vm269, 0.0, %v2886
        %v2889 = vrot.slane %v2834, 1
        %v2891 = vsel %vm2688, %v2889, 0.0
        %v2892 = vlaneseq
        %v2893 = vshrl.u32 %v2892, 7
        %v2894 = vsub.s32 0, %v2893
        %v2895 = vrot.slane %v2884, %v2894
        %2896 = vmatprep.subr.mxu0 0.0
        %2897 = vmatpush1.msra.mxu0 %v2836
        %2898 = vmatprep.subr.mxu0 0.0
        %2899 = vmatpush1.msra.mxu0 %v2837
        %2900 = vmatprep.subr.mxu0 0.0
        %2901 = vmatpush1.msra.mxu0 %v2838
        %2902 = vmatprep.subr.mxu0 0.0
        %2903 = vmatpush1.msra.mxu0 %v2839
        %2904 = vmatprep.subr.mxu0 0.0
        %2905 = vmatpush1.msra.mxu0 %v2840
        %2906 = vmatprep.subr.mxu0 0.0
        %2907 = vmatpush1.msra.mxu0 %v2841
        %2908 = vmatprep.subr.mxu0 0.0
        %2909 = vmatpush1.msra.mxu0 %v2842
        %2910 = vmatprep.subr.mxu0 0.0
        %2911 = vmatpush1.msra.mxu0 %v2843
        %2912 = vmatprep.subr.mxu0 0.0
        %2913 = vmatpush1.msra.mxu0 %v2844
        %2914 = vmatprep.subr.mxu0 0.0
        %2915 = vmatpush1.msra.mxu0 %v2845
        %2916 = vmatprep.subr.mxu0 0.0
        %2917 = vmatpush1.msra.mxu0 %v2846
        %2918 = vmatprep.subr.mxu0 0.0
        %2919 = vmatpush1.msra.mxu0 %v2847
        %2920 = vmatprep.subr.mxu0 0.0
        %2921 = vmatpush1.msra.mxu0 %v2848
        %2922 = vmatprep.subr.mxu0 0.0
        %2923 = vmatpush1.msra.mxu0 %v2849
        %2924 = vmatprep.subr.mxu0 0.0
        %2925 = vmatpush1.msra.mxu0 %v2850
        %2926 = vmatprep.subr.mxu0 0.0
        %2927 = vmatpush1.msra.mxu0 %v2851
        %2928 = vmatprep.subr.mxu0 0.0
        %2929 = vmatpush1.msra.mxu0 %v2852
        %2930 = vmatprep.subr.mxu0 0.0
        %2931 = vmatpush1.msra.mxu0 %v2853
        %2932 = vmatprep.subr.mxu0 0.0
        %2933 = vmatpush1.msra.mxu0 %v2854
        %2934 = vmatprep.subr.mxu0 0.0
        %2935 = vmatpush1.msra.mxu0 %v2855
        %2936 = vmatprep.subr.mxu0 0.0
        %2937 = vmatpush1.msra.mxu0 %v2856
        %2938 = vmatprep.subr.mxu0 0.0
        %2939 = vmatpush1.msra.mxu0 %v2857
        %2940 = vmatprep.subr.mxu0 0.0
        %2941 = vmatpush1.msra.mxu0 %v2858
        %2942 = vmatprep.subr.mxu0 0.0
        %2943 = vmatpush1.msra.mxu0 %v2859
        %2944 = vmatprep.subr.mxu0 0.0
        %2945 = vmatpush1.msra.mxu0 %v2860
        %2946 = vmatprep.subr.mxu0 0.0
        %2947 = vmatpush1.msra.mxu0 %v2861
        %2948 = vmatprep.subr.mxu0 0.0
        %2949 = vmatpush1.msra.mxu0 %v2862
        %2950 = vmatprep.subr.mxu0 0.0
        %2951 = vmatpush1.msra.mxu0 %v2863
        %2952 = vmatprep.subr.mxu0 0.0
        %2953 = vmatpush1.msra.mxu0 %v2864
        %2954 = vmatprep.subr.mxu0 0.0
        %2955 = vmatpush1.msra.mxu0 %v2865
        %2956 = vmatprep.subr.mxu0 0.0
        %2957 = vmatpush1.msra.mxu0 %v2866
        %2958 = vmatprep.subr.mxu0 0.0
        %2959 = vmatpush1.msra.mxu0 %v2867
        %2960 = vmatprep.mubr.f32.mxu0 %v2834
        %2961 = vmatmul.mubr.f32.gmra.mrb[0].mxu0 %v2888
        %v2962 = vpop.f32.mrb[0].mxu0
        %v2963 = vadd.f32 %v2895, %v2962
        %v2964 = vpop.f32.mrb[0].mxu0
        %2965 = vdwg.mxu0
        %2966 = vmatprep.subr.mxu0 0.0
        %2967 = vmatpush1.msra.mxu0 %v2868
        %2968 = vmatprep.subr.mxu0 0.0
        %2969 = vmatpush1.msra.mxu0 %v2869
        %2970 = vmatprep.subr.mxu0 0.0
        %2971 = vmatpush1.msra.mxu0 %v2870
        %2972 = vmatprep.subr.mxu0 0.0
        %2973 = vmatpush1.msra.mxu0 %v2871
        %2974 = vmatprep.subr.mxu0 0.0
        %2975 = vmatpush1.msra.mxu0 %v2872
        %2976 = vmatprep.subr.mxu0 0.0
        %2977 = vmatpush1.msra.mxu0 %v2873
        %2978 = vmatprep.subr.mxu0 0.0
        %2979 = vmatpush1.msra.mxu0 %v2874
        %2980 = vmatprep.subr.mxu0 0.0
        %2981 = vmatpush1.msra.mxu0 %v2875
        %2982 = vmatprep.subr.mxu0 0.0
        %2983 = vmatpush1.msra.mxu0 %v2876
        %2984 = vmatprep.subr.mxu0 0.0
        %2985 = vmatpush1.msra.mxu0 %v2877
        %2986 = vmatprep.subr.mxu0 0.0
        %2987 = vmatpush1.msra.mxu0 %v2878
        %2988 = vmatprep.subr.mxu0 0.0
        %2989 = vmatpush1.msra.mxu0 %v2879
        %2990 = vmatprep.subr.mxu0 0.0
        %2991 = vmatpush1.msra.mxu0 %v2880
        %2992 = vmatprep.subr.mxu0 0.0
        %2993 = vmatpush1.msra.mxu0 %v2881
        %2994 = vmatprep.subr.mxu0 0.0
        %2995 = vmatpush1.msra.mxu0 %v2882
        %2996 = vmatprep.subr.mxu0 0.0
        %2997 = vmatpush1.msra.mxu0 %v2883
        %2998 = vmatprep.subr.mxu0 0.0
        %2999 = vmatpush1.msra.mxu0 0.0
        %3000 = vmatprep.subr.mxu0 0.0
        %3001 = vmatpush1.msra.mxu0 0.0
        %3002 = vmatprep.subr.mxu0 0.0
        %3003 = vmatpush1.msra.mxu0 0.0
        %3004 = vmatprep.subr.mxu0 0.0
        %3005 = vmatpush1.msra.mxu0 0.0
        %3006 = vmatprep.subr.mxu0 0.0
        %3007 = vmatpush1.msra.mxu0 0.0
        %3008 = vmatprep.subr.mxu0 0.0
        %3009 = vmatpush1.msra.mxu0 0.0
        %3010 = vmatprep.subr.mxu0 0.0
        %3011 = vmatpush1.msra.mxu0 0.0
        %3012 = vmatprep.subr.mxu0 0.0
        %3013 = vmatpush1.msra.mxu0 0.0
        %3014 = vmatprep.subr.mxu0 0.0
        %3015 = vmatpush1.msra.mxu0 0.0
        %3016 = vmatprep.subr.mxu0 0.0
        %3017 = vmatpush1.msra.mxu0 0.0
        %3018 = vmatprep.subr.mxu0 0.0
        %3019 = vmatpush1.msra.mxu0 0.0
        %3020 = vmatprep.subr.mxu0 0.0
        %3021 = vmatpush1.msra.mxu0 0.0
        %3022 = vmatprep.subr.mxu0 0.0
        %3023 = vmatpush1.msra.mxu0 0.0
        %3024 = vmatprep.subr.mxu0 0.0
        %3025 = vmatpush1.msra.mxu0 0.0
        %3026 = vmatprep.subr.mxu0 0.0
        %3027 = vmatpush1.msra.mxu0 0.0
        %3028 = vmatprep.subr.mxu0 0.0
        %3029 = vmatpush1.msra.mxu0 0.0
        %3030 = vmatprep.mubr.f32.mxu0 0.0
        %3031 = vmatmul.mubr.f32.gmra.mrb[0].mxu0 %v2891
        %v3032 = vpop.f32.mrb[0].mxu0
        %v3033 = vadd.f32 %v2963, %v3032
        %v3034 = vpop.f32.mrb[0].mxu0
        %3035 = vdwg.mxu0
        %v3036 = vmax.f32 %v3033, 0.0
        %v3037 = vand.u32 %v660, 31
        %v3038 = vand.u32 %v661, 31
        %v3039 = vand.u32 %v662, 31
        %v3040 = vand.u32 %v663, 31
        %v3041 = vand.u32 %v664, 31
        %v3042 = vand.u32 %v665, 31
        %v3043 = vand.u32 %v666, 31
        %v3044 = vand.u32 %v667, 31
        %v3045 = vand.u32 %v668, 31
        %v3046 = vand.u32 %v669, 31
        %v3047 = vand.u32 %v670, 31
        %v3048 = vand.u32 %v671, 31
        %v3049 = vand.u32 %v672, 31
        %v3050 = vand.u32 %v673, 31
        %v3051 = vand.u32 %v674, 31
        %v3052 = vand.u32 %v675, 31
        %vm3053 = vcmp.eq.s32.totalorder %v677, %v3037
        %vm3054 = vcmp.eq.s32.totalorder %v677, %v3038
        %vm3055 = vcmp.eq.s32.totalorder %v677, %v3039
        %vm3056 = vcmp.eq.s32.totalorder %v677, %v3040
        %vm3057 = vcmp.eq.s32.totalorder %v677, %v3041
        %vm3058 = vcmp.eq.s32.totalorder %v677, %v3042
        %vm3059 = vcmp.eq.s32.totalorder %v677, %v3043
        %vm3060 = vcmp.eq.s32.totalorder %v677, %v3044
        %vm3061 = vcmp.eq.s32.totalorder %v677, %v3045
        %vm3062 = vcmp.eq.s32.totalorder %v677, %v3046
        %vm3063 = vcmp.eq.s32.totalorder %v677, %v3047
        %vm3064 = vcmp.eq.s32.totalorder %v677, %v3048
        %vm3065 = vcmp.eq.s32.totalorder %v677, %v3049
        %vm3066 = vcmp.eq.s32.totalorder %v677, %v3050
        %vm3067 = vcmp.eq.s32.totalorder %v677, %v3051
        %vm3068 = vcmp.eq.s32.totalorder %v677, %v3052
        %v3069 = vsel %vm3053, 1, 0
        %v3070 = vsel %vm3054, 1, 0
        %v3071 = vsel %vm3055, 1, 0
        %v3072 = vsel %vm3056, 1, 0
        %v3073 = vsel %vm3057, 1, 0
        %v3074 = vsel %vm3058, 1, 0
        %v3075 = vsel %vm3059, 1, 0
        %v3076 = vsel %vm3060, 1, 0
        %v3077 = vsel %vm3061, 1, 0
        %v3078 = vsel %vm3062, 1, 0
        %v3079 = vsel %vm3063, 1, 0
        %v3080 = vsel %vm3064, 1, 0
        %v3081 = vsel %vm3065, 1, 0
        %v3082 = vsel %vm3066, 1, 0
        %v3083 = vsel %vm3067, 1, 0
        %v3084 = vsel %vm3068, 1, 0
        %v3085 = vcvt.s32.f32 %v3069
        %v3086 = vcvt.s32.f32 %v3070
        %v3087 = vcvt.s32.f32 %v3071
        %v3088 = vcvt.s32.f32 %v3072
        %v3089 = vcvt.s32.f32 %v3073
        %v3090 = vcvt.s32.f32 %v3074
        %v3091 = vcvt.s32.f32 %v3075
        %v3092 = vcvt.s32.f32 %v3076
        %v3093 = vcvt.s32.f32 %v3077
        %v3094 = vcvt.s32.f32 %v3078
        %v3095 = vcvt.s32.f32 %v3079
        %v3096 = vcvt.s32.f32 %v3080
        %v3097 = vcvt.s32.f32 %v3081
        %v3098 = vcvt.s32.f32 %v3082
        %v3099 = vcvt.s32.f32 %v3083
        %v3100 = vcvt.s32.f32 %v3084
        %v3101 = vand.u32 %v677, 31
        %vm3102 = vcmp.eq.s32.totalorder %v660, %v3101
        %vm3103 = vcmp.eq.s32.totalorder %v661, %v3101
        %vm3104 = vcmp.eq.s32.totalorder %v662, %v3101
        %vm3105 = vcmp.eq.s32.totalorder %v663, %v3101
        %vm3106 = vcmp.eq.s32.totalorder %v664, %v3101
        %vm3107 = vcmp.eq.s32.totalorder %v665, %v3101
        %vm3108 = vcmp.eq.s32.totalorder %v666, %v3101
        %vm3109 = vcmp.eq.s32.totalorder %v667, %v3101
        %vm3110 = vcmp.eq.s32.totalorder %v668, %v3101
        %vm3111 = vcmp.eq.s32.totalorder %v669, %v3101
        %vm3112 = vcmp.eq.s32.totalorder %v670, %v3101
        %vm3113 = vcmp.eq.s32.totalorder %v671, %v3101
        %vm3114 = vcmp.eq.s32.totalorder %v672, %v3101
        %vm3115 = vcmp.eq.s32.totalorder %v673, %v3101
        %vm3116 = vcmp.eq.s32.totalorder %v674, %v3101
        %vm3117 = vcmp.eq.s32.totalorder %v675, %v3101
        %v3118 = vsel %vm3102, 1, 0
        %v3119 = vsel %vm3103, 1, 0
        %v3120 = vsel %vm3104, 1, 0
        %v3121 = vsel %vm3105, 1, 0
        %v3122 = vsel %vm3106, 1, 0
        %v3123 = vsel %vm3107, 1, 0
        %v3124 = vsel %vm3108, 1, 0
        %v3125 = vsel %vm3109, 1, 0
        %v3126 = vsel %vm3110, 1, 0
        %v3127 = vsel %vm3111, 1, 0
        %v3128 = vsel %vm3112, 1, 0
        %v3129 = vsel %vm3113, 1, 0
        %v3130 = vsel %vm3114, 1, 0
        %v3131 = vsel %vm3115, 1, 0
        %v3132 = vsel %vm3116, 1, 0
        %v3133 = vsel %vm3117, 1, 0
        %v3134 = vcvt.s32.f32 %v3118
        %v3135 = vcvt.s32.f32 %v3119
        %v3136 = vcvt.s32.f32 %v3120
        %v3137 = vcvt.s32.f32 %v3121
        %v3138 = vcvt.s32.f32 %v3122
        %v3139 = vcvt.s32.f32 %v3123
        %v3140 = vcvt.s32.f32 %v3124
        %v3141 = vcvt.s32.f32 %v3125
        %v3142 = vcvt.s32.f32 %v3126
        %v3143 = vcvt.s32.f32 %v3127
        %v3144 = vcvt.s32.f32 %v3128
        %v3145 = vcvt.s32.f32 %v3129
        %v3146 = vcvt.s32.f32 %v3130
        %v3147 = vcvt.s32.f32 %v3131
        %v3148 = vcvt.s32.f32 %v3132
        %v3149 = vcvt.s32.f32 %v3133
        %vm3150 = vcmask 1043456
        %v3151 = vsel %vm3150, %v3036, 0.0
        %v3152 = vrot.slane %v3151, 4
        %v3153 = vadd.f32 %v3151, %v3152
        %v3154 = vrot.slane %v3153, 2
        %v3155 = vadd.f32 %v3153, %v3154
        %v3156 = vrot.slane %v3155, 1
        %v3157 = vadd.f32 %v3155, %v3156
        %3158 = vmatprep.subr.mxu0 0.0
        %3159 = vmatpush1.msra.mxu0 %v3085
        %3160 = vmatprep.subr.mxu0 0.0
        %3161 = vmatpush1.msra.mxu0 %v3086
        %3162 = vmatprep.subr.mxu0 0.0
        %3163 = vmatpush1.msra.mxu0 %v3087
        %3164 = vmatprep.subr.mxu0 0.0
        %3165 = vmatpush1.msra.mxu0 %v3088
        %3166 = vmatprep.subr.mxu0 0.0
        %3167 = vmatpush1.msra.mxu0 %v3089
        %3168 = vmatprep.subr.mxu0 0.0
        %3169 = vmatpush1.msra.mxu0 %v3090
        %3170 = vmatprep.subr.mxu0 0.0
        %3171 = vmatpush1.msra.mxu0 %v3091
        %3172 = vmatprep.subr.mxu0 0.0
        %3173 = vmatpush1.msra.mxu0 %v3092
        %3174 = vmatprep.subr.mxu0 0.0
        %3175 = vmatpush1.msra.mxu0 %v3093
        %3176 = vmatprep.subr.mxu0 0.0
        %3177 = vmatpush1.msra.mxu0 %v3094
        %3178 = vmatprep.subr.mxu0 0.0
        %3179 = vmatpush1.msra.mxu0 %v3095
        %3180 = vmatprep.subr.mxu0 0.0
        %3181 = vmatpush1.msra.mxu0 %v3096
        %3182 = vmatprep.subr.mxu0 0.0
        %3183 = vmatpush1.msra.mxu0 %v3097
        %3184 = vmatprep.subr.mxu0 0.0
        %3185 = vmatpush1.msra.mxu0 %v3098
        %3186 = vmatprep.subr.mxu0 0.0
        %3187 = vmatpush1.msra.mxu0 %v3099
        %3188 = vmatprep.subr.mxu0 0.0
        %3189 = vmatpush1.msra.mxu0 %v3100
        %3190 = vmatprep.subr.mxu0 0.0
        %3191 = vmatpush1.msra.mxu0 0.0
        %3192 = vmatprep.subr.mxu0 0.0
        %3193 = vmatpush1.msra.mxu0 0.0
        %3194 = vmatprep.subr.mxu0 0.0
        %3195 = vmatpush1.msra.mxu0 0.0
        %3196 = vmatprep.subr.mxu0 0.0
        %3197 = vmatpush1.msra.mxu0 0.0
        %3198 = vmatprep.subr.mxu0 0.0
        %3199 = vmatpush1.msra.mxu0 0.0
        %3200 = vmatprep.subr.mxu0 0.0
        %3201 = vmatpush1.msra.mxu0 0.0
        %3202 = vmatprep.subr.mxu0 0.0
        %3203 = vmatpush1.msra.mxu0 0.0
        %3204 = vmatprep.subr.mxu0 0.0
        %3205 = vmatpush1.msra.mxu0 0.0
        %3206 = vmatprep.subr.mxu0 0.0
        %3207 = vmatpush1.msra.mxu0 0.0
        %3208 = vmatprep.subr.mxu0 0.0
        %3209 = vmatpush1.msra.mxu0 0.0
        %3210 = vmatprep.subr.mxu0 0.0
        %3211 = vmatpush1.msra.mxu0 0.0
        %3212 = vmatprep.subr.mxu0 0.0
        %3213 = vmatpush1.msra.mxu0 0.0
        %3214 = vmatprep.subr.mxu0 0.0
        %3215 = vmatpush1.msra.mxu0 0.0
        %3216 = vmatprep.subr.mxu0 0.0
        %3217 = vmatpush1.msra.mxu0 0.0
        %3218 = vmatprep.subr.mxu0 0.0
        %3219 = vmatpush1.msra.mxu0 0.0
        %3220 = vmatprep.subr.mxu0 0.0
        %3221 = vmatpush1.msra.mxu0 0.0
        %3222 = vmatprep.mubr.f32.mxu0 0.0
        %3223 = vmatmul.mubr.f32.gmra.mrb[0].mxu0 %v3157
        %v3224 = vpop.f32.mrb[0].mxu0
        %v3225 = vadd.f32 0.0, %v3224
        %v3226 = vpop.f32.mrb[0].mxu0
        %3227 = vdwg.mxu0
        %v3228 = vmul.f32 %v3225, 0.0625
        %3229 = vmatprep.subr.mxu0 0.0
        %3230 = vmatpush1.msra.mxu0 %v3134
        %3231 = vmatprep.subr.mxu0 0.0
        %3232 = vmatpush1.msra.mxu0 %v3135
        %3233 = vmatprep.subr.mxu0 0.0
        %3234 = vmatpush1.msra.mxu0 %v3136
        %3235 = vmatprep.subr.mxu0 0.0
        %3236 = vmatpush1.msra.mxu0 %v3137
        %3237 = vmatprep.subr.mxu0 0.0
        %3238 = vmatpush1.msra.mxu0 %v3138
        %3239 = vmatprep.subr.mxu0 0.0
        %3240 = vmatpush1.msra.mxu0 %v3139
        %3241 = vmatprep.subr.mxu0 0.0
        %3242 = vmatpush1.msra.mxu0 %v3140
        %3243 = vmatprep.subr.mxu0 0.0
        %3244 = vmatpush1.msra.mxu0 %v3141
        %3245 = vmatprep.subr.mxu0 0.0
        %3246 = vmatpush1.msra.mxu0 %v3142
        %3247 = vmatprep.subr.mxu0 0.0
        %3248 = vmatpush1.msra.mxu0 %v3143
        %3249 = vmatprep.subr.mxu0 0.0
        %3250 = vmatpush1.msra.mxu0 %v3144
        %3251 = vmatprep.subr.mxu0 0.0
        %3252 = vmatpush1.msra.mxu0 %v3145
        %3253 = vmatprep.subr.mxu0 0.0
        %3254 = vmatpush1.msra.mxu0 %v3146
        %3255 = vmatprep.subr.mxu0 0.0
        %3256 = vmatpush1.msra.mxu0 %v3147
        %3257 = vmatprep.subr.mxu0 0.0
        %3258 = vmatpush1.msra.mxu0 %v3148
        %3259 = vmatprep.subr.mxu0 0.0
        %3260 = vmatpush1.msra.mxu0 %v3149
        %3261 = vmatprep.subr.mxu0 0.0
        %3262 = vmatpush1.msra.mxu0 0.0
        %3263 = vmatprep.subr.mxu0 0.0
        %3264 = vmatpush1.msra.mxu0 0.0
        %3265 = vmatprep.subr.mxu0 0.0
        %3266 = vmatpush1.msra.mxu0 0.0
        %3267 = vmatprep.subr.mxu0 0.0
        %3268 = vmatpush1.msra.mxu0 0.0
        %3269 = vmatprep.subr.mxu0 0.0
        %3270 = vmatpush1.msra.mxu0 0.0
        %3271 = vmatprep.subr.mxu0 0.0
        %3272 = vmatpush1.msra.mxu0 0.0
        %3273 = vmatprep.subr.mxu0 0.0
        %3274 = vmatpush1.msra.mxu0 0.0
        %3275 = vmatprep.subr.mxu0 0.0
        %3276 = vmatpush1.msra.mxu0 0.0
        %3277 = vmatprep.subr.mxu0 0.0
        %3278 = vmatpush1.msra.mxu0 0.0
        %3279 = vmatprep.subr.mxu0 0.0
        %3280 = vmatpush1.msra.mxu0 0.0
        %3281 = vmatprep.subr.mxu0 0.0
        %3282 = vmatpush1.msra.mxu0 0.0
        %3283 = vmatprep.subr.mxu0 0.0
        %3284 = vmatpush1.msra.mxu0 0.0
        %3285 = vmatprep.subr.mxu0 0.0
        %3286 = vmatpush1.msra.mxu0 0.0
        %3287 = vmatprep.subr.mxu0 0.0
        %3288 = vmatpush1.msra.mxu0 0.0
        %3289 = vmatprep.subr.mxu0 0.0
        %3290 = vmatpush1.msra.mxu0 0.0
        %3291 = vmatprep.subr.mxu0 0.0
        %3292 = vmatpush1.msra.mxu0 0.0
        %3293 = vmatprep.mubr.f32.mxu0 0.0
        %3294 = vmatmul.mubr.f32.gmra.mrb[0].mxu0 %v3228
        %v3295 = vpop.f32.mrb[0].mxu0
        %v3296 = vadd.f32 0.0, %v3295
        %v3297 = vpop.f32.mrb[0].mxu0
        %3298 = vdwg.mxu0
        %v3299 = vlaneseq
        %v3300 = vshrl.u32 %v3299, 7
        %v3301 = vsub.s32 0, %v3300
        %v3302 = vrot.slane %v3296, %v3301
        %v3303 = vsub.f32 %v3036, %v3302
        %v3304 = vmul.f32 %v3303, %v3303
        %v3305 = vsel %vm3150, %v3304, 0.0
        %v3306 = vrot.slane %v3305, 4
        %v3307 = vadd.f32 %v3305, %v3306
        %v3308 = vrot.slane %v3307, 2
        %v3309 = vadd.f32 %v3307, %v3308
        %v3310 = vrot.slane %v3309, 1
        %v3311 = vadd.f32 %v3309, %v3310
        %3312 = vmatprep.subr.mxu0 0.0
        %3313 = vmatpush1.msra.mxu0 %v3085
        %3314 = vmatprep.subr.mxu0 0.0
        %3315 = vmatpush1.msra.mxu0 %v3086
        %3316 = vmatprep.subr.mxu0 0.0
        %3317 = vmatpush1.msra.mxu0 %v3087
        %3318 = vmatprep.subr.mxu0 0.0
        %3319 = vmatpush1.msra.mxu0 %v3088
        %3320 = vmatprep.subr.mxu0 0.0
        %3321 = vmatpush1.msra.mxu0 %v3089
        %3322 = vmatprep.subr.mxu0 0.0
        %3323 = vmatpush1.msra.mxu0 %v3090
        %3324 = vmatprep.subr.mxu0 0.0
        %3325 = vmatpush1.msra.mxu0 %v3091
        %3326 = vmatprep.subr.mxu0 0.0
        %3327 = vmatpush1.msra.mxu0 %v3092
        %3328 = vmatprep.subr.mxu0 0.0
        %3329 = vmatpush1.msra.mxu0 %v3093
        %3330 = vmatprep.subr.mxu0 0.0
        %3331 = vmatpush1.msra.mxu0 %v3094
        %3332 = vmatprep.subr.mxu0 0.0
        %3333 = vmatpush1.msra.mxu0 %v3095
        %3334 = vmatprep.subr.mxu0 0.0
        %3335 = vmatpush1.msra.mxu0 %v3096
        %3336 = vmatprep.subr.mxu0 0.0
        %3337 = vmatpush1.msra.mxu0 %v3097
        %3338 = vmatprep.subr.mxu0 0.0
        %3339 = vmatpush1.msra.mxu0 %v3098
        %3340 = vmatprep.subr.mxu0 0.0
        %3341 = vmatpush1.msra.mxu0 %v3099
        %3342 = vmatprep.subr.mxu0 0.0
        %3343 = vmatpush1.msra.mxu0 %v3100
        %3344 = vmatprep.subr.mxu0 0.0
        %3345 = vmatpush1.msra.mxu0 0.0
        %3346 = vmatprep.subr.mxu0 0.0
        %3347 = vmatpush1.msra.mxu0 0.0
        %3348 = vmatprep.subr.mxu0 0.0
        %3349 = vmatpush1.msra.mxu0 0.0
        %3350 = vmatprep.subr.mxu0 0.0
        %3351 = vmatpush1.msra.mxu0 0.0
        %3352 = vmatprep.subr.mxu0 0.0
        %3353 = vmatpush1.msra.mxu0 0.0
        %3354 = vmatprep.subr.mxu0 0.0
        %3355 = vmatpush1.msra.mxu0 0.0
        %3356 = vmatprep.subr.mxu0 0.0
        %3357 = vmatpush1.msra.mxu0 0.0
        %3358 = vmatprep.subr.mxu0 0.0
        %3359 = vmatpush1.msra.mxu0 0.0
        %3360 = vmatprep.subr.mxu0 0.0
        %3361 = vmatpush1.msra.mxu0 0.0
        %3362 = vmatprep.subr.mxu0 0.0
        %3363 = vmatpush1.msra.mxu0 0.0
        %3364 = vmatprep.subr.mxu0 0.0
        %3365 = vmatpush1.msra.mxu0 0.0
        %3366 = vmatprep.subr.mxu0 0.0
        %3367 = vmatpush1.msra.mxu0 0.0
        %3368 = vmatprep.subr.mxu0 0.0
        %3369 = vmatpush1.msra.mxu0 0.0
        %3370 = vmatprep.subr.mxu0 0.0
        %3371 = vmatpush1.msra.mxu0 0.0
        %3372 = vmatprep.subr.mxu0 0.0
        %3373 = vmatpush1.msra.mxu0 0.0
        %3374 = vmatprep.subr.mxu0 0.0
        %3375 = vmatpush1.msra.mxu0 0.0
        %3376 = vmatprep.mubr.f32.mxu0 0.0
        %3377 = vmatmul.mubr.f32.gmra.mrb[0].mxu0 %v3311
        %v3378 = vpop.f32.mrb[0].mxu0
        %v3379 = vadd.f32 0.0, %v3378
        %v3380 = vpop.f32.mrb[0].mxu0
        %3381 = vdwg.mxu0
        %v3382 = vmul.f32 %v3379, 0.06666667
        %v3383 = vrsqrt.pop %v3382
        %v3384 = vmul.f32 %v3382, %v3383
        %vm3385 = vcmp.eq.f32.partialorder %v3382, inf
        %v3386 = vsel %vm3385, %v3382, %v3384
        %vm3387 = vcmp.eq.f32.partialorder %v3382, 0.0
        %v3388 = vand.u32 %v3382, 2147483648
        %v3389 = vsel %vm3387, %v3388, %v3386
        %v3391 = vrot.slane %v1031, 7
        %v3394 = vrot.slane %v2054, 6
        %v3397 = vrot.slane %v2214, 5
        %v3400 = vrot.slane %v3228, 4
        %v3403 = vrot.slane %v3389, 3
        %v3405 = vsel %vm269, %v868, %v3391
        %vm3406 = vcmask 1041408
        %v3407 = vsel %vm3406, %v3405, %v3394
        %v3408 = vsel %vm2688, %v3407, %v3397
        %v3409 = vsel %vm3150, %v3408, %v3400
        %vm3410 = vcmask 1044480
        %v3411 = vsel %vm3410, %v3409, %v3403
        %3412 = vst [vmem:[%s215] sm:$0x3f] %v3411
        %p3413 = scmp.lt.s32.totalorder %s18, 1
        %s3414 = scalar_select %p3413, %s18, 1
        %s3415 = smul.addr %s3414, 8
        %s3416 = scalar_lea.vmem %s3, %s3415
        // Predicated region
        $region45: #{tpu_custom_call.1} parent=31 // pred_check
          %p3417 = pneg %p104
        $region46: #{tpu_custom_call.1} parent=31 // pred_check_branch
          %3419 = sbr.rel (%p3417) target = $region48
        $region47: #{tpu_custom_call.1} parent=31 // pred_region
          _
        $region48: #{tpu_custom_call.1} parent=31 // pred_fallthru
          _
      $region32: #{tpu_custom_call.1} parent=5 // pred_fallthru
        _
      %p3420 = scmp.le.s32.totalorder 2, %s13
      // Predicated region
      $region49: #{tpu_custom_call.1} parent=5 // pred_check
        %p3421 = pneg %p3420
      $region50: #{tpu_custom_call.1} parent=5 // pred_check_branch
        %3423 = sbr.rel (%p3421) target = $region52
      $region51: #{tpu_custom_call.1} parent=5 // pred_region
        %s3424 = ssub.s32 %s13, 2
        // Predicated region
        $region53: #{tpu_custom_call.1} parent=51 // pred_check
          %p3425 = pneg %p110
        $region54: #{tpu_custom_call.1} parent=51 // pred_check_branch
          %3427 = sbr.rel (%p3425) target = $region56
        $region55: #{tpu_custom_call.1} parent=51 // pred_region
          %p3428 = scmp.lt.s32.totalorder %s19, 1
          %s3429 = scalar_select %p3428, %s19, 1
          %s3430 = smul.addr %s3429, 8
          %s3431 = scalar_lea.vmem %s3, %s3430
        $region56: #{tpu_custom_call.1} parent=51 // pred_fallthru
          _
      $region52: #{tpu_custom_call.1} parent=5 // pred_fallthru
        _
    $region6: #{tpu_custom_call.1} parent=1 // loop_footer
      %s17 = sadd.s32 1, %s13
    $region7: #{tpu_custom_call.1} parent=1 // loop_footer_branch
      %12 = sbr.rel target = $region3
    $region8: #{tpu_custom_call.1} parent=1 // loop_exit
      _
    %3432 = vsyncpa [#allocation3], 1
    %s3433 = scalar_lea.sflag [#allocation3], 1
    %3434 = vsyncpa %s3433, 1
    %3435 = vsyncpa [#allocation5], 1

</llo_original>
